<compile_context>
chip_gen: v6e
topology: v6e:2x2x1
jax: 0.10.0
libtpu: 0.0.40
codegen_flags: <defaults>
</compile_context>

<pallas_src>
import functools

import jax
import jax.numpy as jnp
from jax import lax
from jax.experimental import pallas as pl
from jax.experimental.pallas import tpu as pltpu


_DEFAULT_TILE = 512                      # safe on v5e; can be bumped to 1024 on v6e/v7x
_VMEM_LIMIT = 48 * 1024 * 1024           # > v5e 16 MiB scoped default, < v7x 64 MiB phys
_Z_RESIDENT_BYTES = 4 * 1024 * 1024      # keep Z fully VMEM-resident below this size


def _round_up(x, m):
    return ((x + m - 1) // m) * m


def _choose_tile(n, requested=_DEFAULT_TILE):
    """Lane/sublane aligned tile, capped so the row grid has >=2 tiles when possible."""
    return min(requested, max(128, _round_up(max(n // 2, 1), 128)))


# ---------------------------------------------------------------------------
# One-time graph preprocessing (hoisted out of the per-call forward).
# ---------------------------------------------------------------------------
def prepare_graph(adj, *, tile=None):
    """Call once per graph, OUTSIDE the per-step jit (the graph is static in the
    graphwar setting).  Fuses the degree reduction with the dtype conversion,
    quantizes the adjacency to 1 byte/element, and zero-pads N up to a tile
    multiple so the Pallas grids never fall back to one giant block."""
    n = adj.shape[0]
    t = tile if tile is not None else _choose_tile(n)
    n_pad = _round_up(n, t)

    deg = jnp.sum(adj.astype(jnp.float32), axis=-1, keepdims=True) + 1.0  # + self loop
    dinv = lax.rsqrt(deg)

    # int8 is exact for unweighted 0/1 graphs; weighted graphs fall back to bf16.
    # TODO(synk): keep an f32 adjacency path for weighted graphs needing full precision.
    is_binary = bool(jnp.all((adj == 0.0) | (adj == 1.0)))
    adj_q = adj.astype(jnp.int8 if is_binary else jnp.bfloat16)

    pad = n_pad - n
    if pad:
        adj_q = jnp.pad(adj_q, ((0, pad), (0, pad)))                  # zero rows/cols
        dinv = jnp.pad(dinv, ((0, pad), (0, 0)), constant_values=1.0)  # harmless
    return adj_q, dinv, t


# ---------------------------------------------------------------------------
# Kernel 1: feature transform      Z = dinv * sum_p (H_p @ W_p)
#   (row-tiled only; keeps the tiny K<=48 matmuls off the adjacency MXU stream)
# ---------------------------------------------------------------------------
def make_transform_kernel(num_pairs):
    def kernel(*refs):
        dinv_ref = refs[0]
        z_ref = refs[1 + 2 * num_pairs]
        acc = jnp.dot(refs[1][...].astype(jnp.float32),
                      refs[2][...].astype(jnp.float32),
                      preferred_element_type=jnp.float32)
        for p in range(1, num_pairs):
            acc += jnp.dot(refs[1 + 2 * p][...].astype(jnp.float32),
                           refs[2 + 2 * p][...].astype(jnp.float32),
                           preferred_element_type=jnp.float32)
        z_ref[...] = (dinv_ref[...] * acc).astype(z_ref.dtype)
    return kernel


# ---------------------------------------------------------------------------
# Kernel 2: propagation            out = act( dinv * (A @ Z + Z) + b )
#   grid = (rows, contraction); A streamed int8/bf16 and fed to the MXU as bf16
#   (never upcast to f32), accumulated f32 in scratch.
# ---------------------------------------------------------------------------
def propagate_kernel(z_ref, adj_ref, z_self_ref, dinv_ref, bias_ref, out_ref,
                     acc_ref, *, apply_relu, z_resident, tk):
    k = pl.program_id(1)

    @pl.when(k == 0)
    def _():
        acc_ref[...] = z_self_ref[...].astype(jnp.float32)        # self-loop term

    if z_resident:
        start = pl.multiple_of(k * tk, tk)
        z_k = z_ref[pl.ds(start, tk), :]                          # resident full Z
    else:
        z_k = z_ref[...]                                          # streamed tile
    acc_ref[...] += jnp.dot(adj_ref[...].astype(jnp.bfloat16), z_k,
                            preferred_element_type=jnp.float32)

    @pl.when(k == pl.num_programs(1) - 1)
    def _():
        r = dinv_ref[...] * acc_ref[...] + bias_ref[...]
        if apply_relu:
            r = jnp.maximum(r, 0.0)
        out_ref[...] = r.astype(out_ref.dtype)


# ---------------------------------------------------------------------------
# Host-side orchestration (per-call forward; adjacency already prepared)
# ---------------------------------------------------------------------------
def jknet_forward(adj_q, dinv, x, params, *, tile):
    (w1, b1, w2, b2, w3, b3, wm, bm) = params
    n_pad = adj_q.shape[0]
    n = x.shape[0]
    hid = w1.shape[1]
    out_ch = wm.shape[1]
    tm = tk = tile
    assert n_pad % tile == 0
    grid = (n_pad // tm, n_pad // tk)

    x_p = jnp.pad(x, ((0, n_pad - n), (0, 0))) if n_pad != n else x

    sem2 = pltpu.CompilerParams(dimension_semantics=("parallel", "arbitrary"),
                                vmem_limit_bytes=_VMEM_LIMIT)
    sem1 = pltpu.CompilerParams(dimension_semantics=("parallel",),
                                vmem_limit_bytes=_VMEM_LIMIT)

    def transform(pairs, c_out):
        in_specs = [pl.BlockSpec((tm, 1), lambda i: (i, 0))]
        args = [dinv]
        for h, w in pairs:
            c_in = h.shape[1]
            in_specs.append(pl.BlockSpec((tm, c_in), lambda i: (i, 0)))
            in_specs.append(pl.BlockSpec((c_in, c_out), lambda i: (0, 0)))
            args += [h, w]
        return pl.pallas_call(
            make_transform_kernel(len(pairs)),
            out_shape=jax.ShapeDtypeStruct((n_pad, c_out), jnp.bfloat16),
            grid=(n_pad // tm,),
            in_specs=in_specs,
            out_specs=pl.BlockSpec((tm, c_out), lambda i: (i, 0)),
            compiler_params=sem1,
        )(*args)

    def propagate(z, bias, *, apply_relu, out_dtype):
        c = z.shape[1]
        z_resident = n_pad * c * z.dtype.itemsize <= _Z_RESIDENT_BYTES
        if z_resident:
            z_spec = pl.BlockSpec((n_pad, c), lambda i, k: (0, 0))   # fetched once
        else:
            z_spec = pl.BlockSpec((tk, c), lambda i, k: (k, 0))      # streamed
        cost = pl.CostEstimate(
            flops=2 * n_pad * n_pad * c,
            transcendentals=0,
            bytes_accessed=n_pad * n_pad * adj_q.dtype.itemsize
            + (1 if z_resident else grid[0]) * n_pad * c * z.dtype.itemsize
            + n_pad * c * (jnp.dtype(out_dtype).itemsize + z.dtype.itemsize),
        )
        kern = functools.partial(propagate_kernel, apply_relu=apply_relu,
                                 z_resident=z_resident, tk=tk)
        return pl.pallas_call(
            kern,
            out_shape=jax.ShapeDtypeStruct((n_pad, c), out_dtype),
            grid=grid,
            in_specs=[
                z_spec,                                            # Z (contraction view)
                pl.BlockSpec((tm, tk), lambda i, k: (i, k)),       # A tile (int8/bf16)
                pl.BlockSpec((tm, c), lambda i, k: (i, 0)),        # Z (self-loop rows)
                pl.BlockSpec((tm, 1), lambda i, k: (i, 0)),        # dinv rows
                pl.BlockSpec((1, c), lambda i, k: (0, 0)),         # bias
            ],
            out_specs=pl.BlockSpec((tm, c), lambda i, k: (i, 0)),
            scratch_shapes=[pltpu.VMEM((tm, c), jnp.float32)],
            compiler_params=sem2,
            cost_estimate=cost,
        )(z, adj_q, z, dinv, bias)

    # --- three GCN layers (eval-mode dropout = identity, bn=False) -----------
    h = x_p
    hs = []
    for w, b in ((w1, b1), (w2, b2), (w3, b3)):
        z = transform([(h, w)], c_out=hid)                        # dinv * (h @ W), bf16
        h = propagate(z, b, apply_relu=True, out_dtype=jnp.bfloat16)
        hs.append(h)

    # --- JK 'cat' + head, reassociated:  A_norm @ (h1@Wm1 + h2@Wm2 + h3@Wm3) + bm
    out_p = _round_up(out_ch, 128)                                # lane-dense output
    wm_p = jnp.zeros((3 * hid, out_p), jnp.float32).at[:, :out_ch].set(wm)
    bm_p = jnp.zeros((1, out_p), jnp.float32).at[:, :out_ch].set(bm)
    wm_parts = [wm_p[l * hid:(l + 1) * hid] for l in range(3)]

    zm = transform(list(zip(hs, wm_parts)), c_out=out_p)          # bf16 (n_pad, out_p)
    out_padded = propagate(zm, bm_p, apply_relu=False, out_dtype=jnp.float32)
    return out_padded[:n, :out_ch]
    # TODO(synk): JK modes 'lstm'/'max', BatchNorm (bn=True) and train-mode dropout
    # are not implemented (module defaults used: mode='cat', bn=False, eval mode).


def jknet_reference(adj, x, params):
    """Plain-JAX f32 reference mirroring the PyTorch forward (eval mode)."""
    (w1, b1, w2, b2, w3, b3, wm, bm) = params
    n = adj.shape[0]
    hi = lax.Precision.HIGHEST
    a_hat = adj + jnp.eye(n, dtype=adj.dtype)
    dinv = 1.0 / jnp.sqrt(jnp.sum(a_hat, axis=-1, keepdims=True))
    a_norm = dinv * a_hat * dinv.T
    h = x
    xs = []
    for w, b in ((w1, b1), (w2, b2), (w3, b3)):
        h = jnp.maximum(
            jnp.dot(a_norm, jnp.dot(h, w, precision=hi), precision=hi) + b, 0.0)
        xs.append(h)
    h_cat = jnp.concatenate(xs, axis=-1)
    return jnp.dot(jnp.dot(a_norm, h_cat, precision=hi), wm, precision=hi) + bm


if __name__ == "__main__":
    # Small shapes consistent with the module: N nodes, hids=[16]*3.
    N = 256
    in_channels = 32
    hid = 16
    num_layers = 3
    out_channels = 8

    key = jax.random.PRNGKey(0)
    keys = jax.random.split(key, 12)

    # Node features.
    x = jax.random.normal(keys[0], (N, in_channels), dtype=jnp.float32)

    # Deterministic symmetric binary adjacency (no self loops; gcn_norm adds them).
    a_rand = jax.random.uniform(keys[1], (N, N))
    adj = (a_rand + a_rand.T > 1.0).astype(jnp.float32)
    adj = adj * (1.0 - jnp.eye(N, dtype=jnp.float32))

    # Parameter init (GCNConv weights [in, out]; Linear weight stored pre-transposed).
    def glorot(k, fan_in, fan_out):
        scale = jnp.sqrt(2.0 / (fan_in + fan_out))
        return scale * jax.random.normal(k, (fan_in, fan_out), dtype=jnp.float32)

    w1 = glorot(keys[2], in_channels, hid)
    b1 = 0.01 * jax.random.normal(keys[3], (1, hid), dtype=jnp.float32)
    w2 = glorot(keys[4], hid, hid)
    b2 = 0.01 * jax.random.normal(keys[5], (1, hid), dtype=jnp.float32)
    w3 = glorot(keys[6], hid, hid)
    b3 = 0.01 * jax.random.normal(keys[7], (1, hid), dtype=jnp.float32)
    wm = glorot(keys[8], hid * num_layers, out_channels)      # = Linear.weight.T
    bm = 0.01 * jax.random.normal(keys[9], (1, out_channels), dtype=jnp.float32)
    params = (w1, b1, w2, b2, w3, b3, wm, bm)

    # One-time graph preprocessing (quantize + degree + pad) hoisted out of the jit.
    adj_q, dinv, tile = prepare_graph(adj, tile=128)   # tile 128 at N=256 -> (2,2) grid
    fwd = jax.jit(functools.partial(jknet_forward, tile=tile))
    out = jax.block_until_ready(fwd(adj_q, dinv, x, params))

    ref = jknet_reference(adj, x, params)
    assert out.shape == (N, out_channels)
    err = float(jnp.max(jnp.abs(out - ref)))
    # bf16 intermediates (Z/h and MXU inputs) with f32 accumulation: expected
    # relative error ~ a few * 2^-9, so 1e-2 leaves ample margin.
    assert jnp.allclose(out, ref, atol=1e-2, rtol=1e-2), (
        f"mismatch vs reference, max abs err={err}")

    # Non-divisible N exercises the zero-padding path (no full-matrix fallback).
    N2 = 200
    x2 = jax.random.normal(keys[10], (N2, in_channels), dtype=jnp.float32)
    a2 = jax.random.uniform(keys[11], (N2, N2))
    adj2 = (a2 + a2.T > 1.0).astype(jnp.float32)
    adj2 = adj2 * (1.0 - jnp.eye(N2, dtype=jnp.float32))
    adj2_q, dinv2, tile2 = prepare_graph(adj2)         # default tile choice, pads to 256
    out2 = jax.block_until_ready(
        jax.jit(functools.partial(jknet_forward, tile=tile2))(adj2_q, dinv2, x2, params))
    ref2 = jknet_reference(adj2, x2, params)
    err2 = float(jnp.max(jnp.abs(out2 - ref2)))
    assert out2.shape == (N2, out_channels)
    assert jnp.allclose(out2, ref2, atol=1e-2, rtol=1e-2), (
        f"padded-N mismatch vs reference, max abs err={err2}")

    print("KERNEL_OK")
</pallas_src>

<mosaic_0001>
module attributes {stable_mosaic.version = 11 : i64} {
  func.func @kernel(%arg0: i32, %arg1: memref<128x1xf32, #tpu.memory_space<vmem>>, %arg2: memref<128x32xf32, #tpu.memory_space<vmem>>, %arg3: memref<32x16xf32, #tpu.memory_space<vmem>>, %arg4: memref<128x16xbf16, #tpu.memory_space<vmem>>) attributes {dimension_semantics = [#tpu.dimension_semantics<parallel>], iteration_bounds = array<i64: 2>, scalar_prefetch = 0 : i64, scratch_operands = 0 : i64, tpu.core_type = #tpu.core_type<tc>, window_params = [{transform_indices = @transform_0, window_bounds = array<i64: 128, 1>}, {transform_indices = @transform_1, window_bounds = array<i64: 128, 32>}, {pipeline_mode = #tpu.pipeline_mode<synchronous>, transform_indices = @transform_2, window_bounds = array<i64: 32, 16>}, {transform_indices = @transform_3, window_bounds = array<i64: 128, 16>}]} {
    %c0 = arith.constant 0 : index
    %c0_0 = arith.constant 0 : index
    %0 = vector.load %arg2[%c0, %c0_0] : memref<128x32xf32, #tpu.memory_space<vmem>>, vector<128x32xf32>
    %c0_1 = arith.constant 0 : index
    %c0_2 = arith.constant 0 : index
    %1 = vector.load %arg3[%c0_1, %c0_2] : memref<32x16xf32, #tpu.memory_space<vmem>>, vector<32x16xf32>
    %cst = arith.constant dense<0.000000e+00> : vector<128x16xf32>
    %2 = tpu.matmul %0, %1, %cst {dimension_numbers = #tpu.dot_dimension_numbers<[1], [0], [0], [1], [0, 0, 1, 1], [], []>} : vector<128x32xf32>, vector<32x16xf32>, vector<128x16xf32> -> vector<128x16xf32>
    %c0_3 = arith.constant 0 : index
    %c0_4 = arith.constant 0 : index
    %3 = vector.load %arg1[%c0_3, %c0_4] : memref<128x1xf32, #tpu.memory_space<vmem>>, vector<128x1xf32>
    %4 = vector.broadcast %3 : vector<128x1xf32> to vector<128x16xf32>
    %5 = arith.mulf %4, %2 : vector<128x16xf32>
    %6 = arith.truncf %5 : vector<128x16xf32> to vector<128x16xbf16>
    %c0_5 = arith.constant 0 : index
    %c0_6 = arith.constant 0 : index
    %7 = vector.load %arg4[%c0_5, %c0_6] : memref<128x16xbf16, #tpu.memory_space<vmem>>, vector<128x16xbf16>
    tpu.vector_store %arg4[%c0_5, %c0_6], %6 {strides = array<i32>} : memref<128x16xbf16, #tpu.memory_space<vmem>>, vector<128x16xbf16>,
    return
  }
  func.func @transform_0(%arg0: i32) -> (i32, i32) {
    %c0_i32 = arith.constant 0 : i32
    %c0_i32_0 = arith.constant 0 : i32
    return %arg0, %c0_i32 : i32, i32
  }
  func.func @transform_1(%arg0: i32) -> (i32, i32) {
    %c0_i32 = arith.constant 0 : i32
    %c0_i32_0 = arith.constant 0 : i32
    return %arg0, %c0_i32 : i32, i32
  }
  func.func @transform_2(%arg0: i32) -> (i32, i32) {
    %c0_i32 = arith.constant 0 : i32
    %c0_i32_0 = arith.constant 0 : i32
    %c0_i32_1 = arith.constant 0 : i32
    return %c0_i32, %c0_i32_0 : i32, i32
  }
  func.func @transform_3(%arg0: i32) -> (i32, i32) {
    %c0_i32 = arith.constant 0 : i32
    %c0_i32_0 = arith.constant 0 : i32
    return %arg0, %c0_i32 : i32, i32
  }
}

module attributes {stable_mosaic.version = 11 : i64} {
  func.func @propagate_kernel(%arg0: i32, %arg1: i32, %arg2: memref<256x16xbf16, #tpu.memory_space<vmem>>, %arg3: memref<128x128xi8, #tpu.memory_space<vmem>>, %arg4: memref<128x16xbf16, #tpu.memory_space<vmem>>, %arg5: memref<128x1xf32, #tpu.memory_space<vmem>>, %arg6: memref<1x16xf32, #tpu.memory_space<vmem>>, %arg7: memref<128x16xbf16, #tpu.memory_space<vmem>>, %arg8: memref<128x16xf32, #tpu.memory_space<vmem>>) attributes {dimension_semantics = [#tpu.dimension_semantics<parallel>, #tpu.dimension_semantics<arbitrary>], iteration_bounds = array<i64: 2, 2>, scalar_prefetch = 0 : i64, scratch_operands = 1 : i64, tpu.core_type = #tpu.core_type<tc>, window_params = [{pipeline_mode = #tpu.pipeline_mode<synchronous>, transform_indices = @transform_0, window_bounds = array<i64: 256, 16>}, {transform_indices = @transform_1, window_bounds = array<i64: 128, 128>}, {transform_indices = @transform_2, window_bounds = array<i64: 128, 16>}, {transform_indices = @transform_3, window_bounds = array<i64: 128, 1>}, {pipeline_mode = #tpu.pipeline_mode<synchronous>, transform_indices = @transform_4, window_bounds = array<i64: 1, 16>}, {transform_indices = @transform_5, window_bounds = array<i64: 128, 16>}]} {
    %c0_i32 = arith.constant 0 : i32
    %0 = arith.cmpi eq, %arg1, %c0_i32 : i32
    %1 = arith.extui %0 : i1 to i32
    %c0_i32_0 = arith.constant 0 : i32
    %2 = arith.cmpi ne, %1, %c0_i32_0 : i32
    scf.if %2 {
      %c0_8 = arith.constant 0 : index
      %c0_9 = arith.constant 0 : index
      %16 = vector.load %arg4[%c0_8, %c0_9] : memref<128x16xbf16, #tpu.memory_space<vmem>>, vector<128x16xbf16>
      %17 = arith.extf %16 : vector<128x16xbf16> to vector<128x16xf32>
      %c0_10 = arith.constant 0 : index
      %c0_11 = arith.constant 0 : index
      %18 = vector.load %arg8[%c0_10, %c0_11] : memref<128x16xf32, #tpu.memory_space<vmem>>, vector<128x16xf32>
      tpu.vector_store %arg8[%c0_10, %c0_11], %17 {strides = array<i32>} : memref<128x16xf32, #tpu.memory_space<vmem>>, vector<128x16xf32>,
    } else {
    }
    %c128_i32 = arith.constant 128 : i32
    %3 = arith.muli %arg1, %c128_i32 : i32
    %4 = tpu.assume_multiple %3, 128 : i32
    %5 = arith.index_cast %4 : i32 to index
    %c0 = arith.constant 0 : index
    %6 = vector.load %arg2[%5, %c0] : memref<256x16xbf16, #tpu.memory_space<vmem>>, vector<128x16xbf16>
    %c0_1 = arith.constant 0 : index
    %c0_2 = arith.constant 0 : index
    %7 = vector.load %arg8[%c0_1, %c0_2] : memref<128x16xf32, #tpu.memory_space<vmem>>, vector<128x16xf32>
    %c0_3 = arith.constant 0 : index
    %c0_4 = arith.constant 0 : index
    %8 = vector.load %arg3[%c0_3, %c0_4] : memref<128x128xi8, #tpu.memory_space<vmem>>, vector<128x128xi8>
    %9 = arith.sitofp %8 : vector<128x128xi8> to vector<128x128xbf16>
    %cst = arith.constant dense<0.000000e+00> : vector<128x16xf32>
    %10 = tpu.matmul %9, %6, %cst {dimension_numbers = #tpu.dot_dimension_numbers<[1], [0], [0], [1], [0, 0, 1, 1], [], []>} : vector<128x128xbf16>, vector<128x16xbf16>, vector<128x16xf32> -> vector<128x16xf32>
    %11 = arith.addf %7, %10 : vector<128x16xf32>
    %c0_5 = arith.constant 0 : index
    %c0_6 = arith.constant 0 : index
    %12 = vector.load %arg8[%c0_5, %c0_6] : memref<128x16xf32, #tpu.memory_space<vmem>>, vector<128x16xf32>
    tpu.vector_store %arg8[%c0_5, %c0_6], %11 {strides = array<i32>} : memref<128x16xf32, #tpu.memory_space<vmem>>, vector<128x16xf32>,
    %c1_i32 = arith.constant 1 : i32
    %13 = arith.cmpi eq, %arg1, %c1_i32 : i32
    %14 = arith.extui %13 : i1 to i32
    %c0_i32_7 = arith.constant 0 : i32
    %15 = arith.cmpi ne, %14, %c0_i32_7 : i32
    scf.if %15 {
      %c0_8 = arith.constant 0 : index
      %c0_9 = arith.constant 0 : index
      %16 = vector.load %arg5[%c0_8, %c0_9] : memref<128x1xf32, #tpu.memory_space<vmem>>, vector<128x1xf32>
      %c0_10 = arith.constant 0 : index
      %c0_11 = arith.constant 0 : index
      %17 = vector.load %arg8[%c0_10, %c0_11] : memref<128x16xf32, #tpu.memory_space<vmem>>, vector<128x16xf32>
      %18 = vector.broadcast %16 : vector<128x1xf32> to vector<128x16xf32>
      %19 = arith.mulf %18, %17 : vector<128x16xf32>
      %c0_12 = arith.constant 0 : index
      %c0_13 = arith.constant 0 : index
      %20 = vector.load %arg6[%c0_12, %c0_13] : memref<1x16xf32, #tpu.memory_space<vmem>>, vector<1x16xf32>
      %21 = vector.broadcast %20 : vector<1x16xf32> to vector<128x16xf32>
      %22 = arith.addf %19, %21 : vector<128x16xf32>
      %cst_14 = arith.constant 0.000000e+00 : f32
      %23 = vector.broadcast %cst_14 : f32 to vector<128x16xf32>
      %24 = arith.maximumf %22, %23 : vector<128x16xf32>
      %25 = arith.truncf %24 : vector<128x16xf32> to vector<128x16xbf16>
      %c0_15 = arith.constant 0 : index
      %c0_16 = arith.constant 0 : index
      %26 = vector.load %arg7[%c0_15, %c0_16] : memref<128x16xbf16, #tpu.memory_space<vmem>>, vector<128x16xbf16>
      tpu.vector_store %arg7[%c0_15, %c0_16], %25 {strides = array<i32>} : memref<128x16xbf16, #tpu.memory_space<vmem>>, vector<128x16xbf16>,
    } else {
    }
    return
  }
  func.func @transform_0(%arg0: i32, %arg1: i32) -> (i32, i32) {
    %c0_i32 = arith.constant 0 : i32
    %c0_i32_0 = arith.constant 0 : i32
    %c0_i32_1 = arith.constant 0 : i32
    return %c0_i32, %c0_i32_0 : i32, i32
  }
  func.func @transform_1(%arg0: i32, %arg1: i32) -> (i32, i32) {
    %c0_i32 = arith.constant 0 : i32
    return %arg0, %arg1 : i32, i32
  }
  func.func @transform_2(%arg0: i32, %arg1: i32) -> (i32, i32) {
    %c0_i32 = arith.constant 0 : i32
    %c0_i32_0 = arith.constant 0 : i32
    return %arg0, %c0_i32 : i32, i32
  }
  func.func @transform_3(%arg0: i32, %arg1: i32) -> (i32, i32) {
    %c0_i32 = arith.constant 0 : i32
    %c0_i32_0 = arith.constant 0 : i32
    return %arg0, %c0_i32 : i32, i32
  }
  func.func @transform_4(%arg0: i32, %arg1: i32) -> (i32, i32) {
    %c0_i32 = arith.constant 0 : i32
    %c0_i32_0 = arith.constant 0 : i32
    %c0_i32_1 = arith.constant 0 : i32
    return %c0_i32, %c0_i32_0 : i32, i32
  }
  func.func @transform_5(%arg0: i32, %arg1: i32) -> (i32, i32) {
    %c0_i32 = arith.constant 0 : i32
    %c0_i32_0 = arith.constant 0 : i32
    return %arg0, %c0_i32 : i32, i32
  }
}

module attributes {stable_mosaic.version = 11 : i64} {
  func.func @kernel(%arg0: i32, %arg1: memref<128x1xf32, #tpu.memory_space<vmem>>, %arg2: memref<128x16xbf16, #tpu.memory_space<vmem>>, %arg3: memref<16x16xf32, #tpu.memory_space<vmem>>, %arg4: memref<128x16xbf16, #tpu.memory_space<vmem>>) attributes {dimension_semantics = [#tpu.dimension_semantics<parallel>], iteration_bounds = array<i64: 2>, scalar_prefetch = 0 : i64, scratch_operands = 0 : i64, tpu.core_type = #tpu.core_type<tc>, window_params = [{transform_indices = @transform_0, window_bounds = array<i64: 128, 1>}, {transform_indices = @transform_1, window_bounds = array<i64: 128, 16>}, {pipeline_mode = #tpu.pipeline_mode<synchronous>, transform_indices = @transform_2, window_bounds = array<i64: 16, 16>}, {transform_indices = @transform_3, window_bounds = array<i64: 128, 16>}]} {
    %c0 = arith.constant 0 : index
    %c0_0 = arith.constant 0 : index
    %0 = vector.load %arg2[%c0, %c0_0] : memref<128x16xbf16, #tpu.memory_space<vmem>>, vector<128x16xbf16>
    %1 = arith.extf %0 : vector<128x16xbf16> to vector<128x16xf32>
    %c0_1 = arith.constant 0 : index
    %c0_2 = arith.constant 0 : index
    %2 = vector.load %arg3[%c0_1, %c0_2] : memref<16x16xf32, #tpu.memory_space<vmem>>, vector<16x16xf32>
    %cst = arith.constant dense<0.000000e+00> : vector<128x16xf32>
    %3 = tpu.matmul %1, %2, %cst {dimension_numbers = #tpu.dot_dimension_numbers<[1], [0], [0], [1], [0, 0, 1, 1], [], []>} : vector<128x16xf32>, vector<16x16xf32>, vector<128x16xf32> -> vector<128x16xf32>
    %c0_3 = arith.constant 0 : index
    %c0_4 = arith.constant 0 : index
    %4 = vector.load %arg1[%c0_3, %c0_4] : memref<128x1xf32, #tpu.memory_space<vmem>>, vector<128x1xf32>
    %5 = vector.broadcast %4 : vector<128x1xf32> to vector<128x16xf32>
    %6 = arith.mulf %5, %3 : vector<128x16xf32>
    %7 = arith.truncf %6 : vector<128x16xf32> to vector<128x16xbf16>
    %c0_5 = arith.constant 0 : index
    %c0_6 = arith.constant 0 : index
    %8 = vector.load %arg4[%c0_5, %c0_6] : memref<128x16xbf16, #tpu.memory_space<vmem>>, vector<128x16xbf16>
    tpu.vector_store %arg4[%c0_5, %c0_6], %7 {strides = array<i32>} : memref<128x16xbf16, #tpu.memory_space<vmem>>, vector<128x16xbf16>,
    return
  }
  func.func @transform_0(%arg0: i32) -> (i32, i32) {
    %c0_i32 = arith.constant 0 : i32
    %c0_i32_0 = arith.constant 0 : i32
    return %arg0, %c0_i32 : i32, i32
  }
  func.func @transform_1(%arg0: i32) -> (i32, i32) {
    %c0_i32 = arith.constant 0 : i32
    %c0_i32_0 = arith.constant 0 : i32
    return %arg0, %c0_i32 : i32, i32
  }
  func.func @transform_2(%arg0: i32) -> (i32, i32) {
    %c0_i32 = arith.constant 0 : i32
    %c0_i32_0 = arith.constant 0 : i32
    %c0_i32_1 = arith.constant 0 : i32
    return %c0_i32, %c0_i32_0 : i32, i32
  }
  func.func @transform_3(%arg0: i32) -> (i32, i32) {
    %c0_i32 = arith.constant 0 : i32
    %c0_i32_0 = arith.constant 0 : i32
    return %arg0, %c0_i32 : i32, i32
  }
}

module attributes {stable_mosaic.version = 11 : i64} {
  func.func @kernel(%arg0: i32, %arg1: memref<128x1xf32, #tpu.memory_space<vmem>>, %arg2: memref<128x16xbf16, #tpu.memory_space<vmem>>, %arg3: memref<16x128xf32, #tpu.memory_space<vmem>>, %arg4: memref<128x16xbf16, #tpu.memory_space<vmem>>, %arg5: memref<16x128xf32, #tpu.memory_space<vmem>>, %arg6: memref<128x16xbf16, #tpu.memory_space<vmem>>, %arg7: memref<16x128xf32, #tpu.memory_space<vmem>>, %arg8: memref<128x128xbf16, #tpu.memory_space<vmem>>) attributes {dimension_semantics = [#tpu.dimension_semantics<parallel>], iteration_bounds = array<i64: 2>, scalar_prefetch = 0 : i64, scratch_operands = 0 : i64, tpu.core_type = #tpu.core_type<tc>, window_params = [{transform_indices = @transform_0, window_bounds = array<i64: 128, 1>}, {transform_indices = @transform_1, window_bounds = array<i64: 128, 16>}, {pipeline_mode = #tpu.pipeline_mode<synchronous>, transform_indices = @transform_2, window_bounds = array<i64: 16, 128>}, {transform_indices = @transform_3, window_bounds = array<i64: 128, 16>}, {pipeline_mode = #tpu.pipeline_mode<synchronous>, transform_indices = @transform_4, window_bounds = array<i64: 16, 128>}, {transform_indices = @transform_5, window_bounds = array<i64: 128, 16>}, {pipeline_mode = #tpu.pipeline_mode<synchronous>, transform_indices = @transform_6, window_bounds = array<i64: 16, 128>}, {transform_indices = @transform_7, window_bounds = array<i64: 128, 128>}]} {
    %c0 = arith.constant 0 : index
    %c0_0 = arith.constant 0 : index
    %0 = vector.load %arg2[%c0, %c0_0] : memref<128x16xbf16, #tpu.memory_space<vmem>>, vector<128x16xbf16>
    %1 = arith.extf %0 : vector<128x16xbf16> to vector<128x16xf32>
    %c0_1 = arith.constant 0 : index
    %c0_2 = arith.constant 0 : index
    %2 = vector.load %arg3[%c0_1, %c0_2] : memref<16x128xf32, #tpu.memory_space<vmem>>, vector<16x128xf32>
    %cst = arith.constant dense<0.000000e+00> : vector<128x128xf32>
    %3 = tpu.matmul %1, %2, %cst {dimension_numbers = #tpu.dot_dimension_numbers<[1], [0], [0], [1], [0, 0, 1, 1], [], []>} : vector<128x16xf32>, vector<16x128xf32>, vector<128x128xf32> -> vector<128x128xf32>
    %c0_3 = arith.constant 0 : index
    %c0_4 = arith.constant 0 : index
    %4 = vector.load %arg4[%c0_3, %c0_4] : memref<128x16xbf16, #tpu.memory_space<vmem>>, vector<128x16xbf16>
    %5 = arith.extf %4 : vector<128x16xbf16> to vector<128x16xf32>
    %c0_5 = arith.constant 0 : index
    %c0_6 = arith.constant 0 : index
    %6 = vector.load %arg5[%c0_5, %c0_6] : memref<16x128xf32, #tpu.memory_space<vmem>>, vector<16x128xf32>
    %cst_7 = arith.constant dense<0.000000e+00> : vector<128x128xf32>
    %7 = tpu.matmul %5, %6, %cst_7 {dimension_numbers = #tpu.dot_dimension_numbers<[1], [0], [0], [1], [0, 0, 1, 1], [], []>} : vector<128x16xf32>, vector<16x128xf32>, vector<128x128xf32> -> vector<128x128xf32>
    %8 = arith.addf %3, %7 : vector<128x128xf32>
    %c0_8 = arith.constant 0 : index
    %c0_9 = arith.constant 0 : index
    %9 = vector.load %arg6[%c0_8, %c0_9] : memref<128x16xbf16, #tpu.memory_space<vmem>>, vector<128x16xbf16>
    %10 = arith.extf %9 : vector<128x16xbf16> to vector<128x16xf32>
    %c0_10 = arith.constant 0 : index
    %c0_11 = arith.constant 0 : index
    %11 = vector.load %arg7[%c0_10, %c0_11] : memref<16x128xf32, #tpu.memory_space<vmem>>, vector<16x128xf32>
    %cst_12 = arith.constant dense<0.000000e+00> : vector<128x128xf32>
    %12 = tpu.matmul %10, %11, %cst_12 {dimension_numbers = #tpu.dot_dimension_numbers<[1], [0], [0], [1], [0, 0, 1, 1], [], []>} : vector<128x16xf32>, vector<16x128xf32>, vector<128x128xf32> -> vector<128x128xf32>
    %13 = arith.addf %8, %12 : vector<128x128xf32>
    %c0_13 = arith.constant 0 : index
    %c0_14 = arith.constant 0 : index
    %14 = vector.load %arg1[%c0_13, %c0_14] : memref<128x1xf32, #tpu.memory_space<vmem>>, vector<128x1xf32>
    %15 = vector.broadcast %14 : vector<128x1xf32> to vector<128x128xf32>
    %16 = arith.mulf %15, %13 : vector<128x128xf32>
    %17 = arith.truncf %16 : vector<128x128xf32> to vector<128x128xbf16>
    %c0_15 = arith.constant 0 : index
    %c0_16 = arith.constant 0 : index
    %18 = vector.load %arg8[%c0_15, %c0_16] : memref<128x128xbf16, #tpu.memory_space<vmem>>, vector<128x128xbf16>
    tpu.vector_store %arg8[%c0_15, %c0_16], %17 {strides = array<i32>} : memref<128x128xbf16, #tpu.memory_space<vmem>>, vector<128x128xbf16>,
    return
  }
  func.func @transform_0(%arg0: i32) -> (i32, i32) {
    %c0_i32 = arith.constant 0 : i32
    %c0_i32_0 = arith.constant 0 : i32
    return %arg0, %c0_i32 : i32, i32
  }
  func.func @transform_1(%arg0: i32) -> (i32, i32) {
    %c0_i32 = arith.constant 0 : i32
    %c0_i32_0 = arith.constant 0 : i32
    return %arg0, %c0_i32 : i32, i32
  }
  func.func @transform_2(%arg0: i32) -> (i32, i32) {
    %c0_i32 = arith.constant 0 : i32
    %c0_i32_0 = arith.constant 0 : i32
    %c0_i32_1 = arith.constant 0 : i32
    return %c0_i32, %c0_i32_0 : i32, i32
  }
  func.func @transform_3(%arg0: i32) -> (i32, i32) {
    %c0_i32 = arith.constant 0 : i32
    %c0_i32_0 = arith.constant 0 : i32
    return %arg0, %c0_i32 : i32, i32
  }
  func.func @transform_4(%arg0: i32) -> (i32, i32) {
    %c0_i32 = arith.constant 0 : i32
    %c0_i32_0 = arith.constant 0 : i32
    %c0_i32_1 = arith.constant 0 : i32
    return %c0_i32, %c0_i32_0 : i32, i32
  }
  func.func @transform_5(%arg0: i32) -> (i32, i32) {
    %c0_i32 = arith.constant 0 : i32
    %c0_i32_0 = arith.constant 0 : i32
    return %arg0, %c0_i32 : i32, i32
  }
  func.func @transform_6(%arg0: i32) -> (i32, i32) {
    %c0_i32 = arith.constant 0 : i32
    %c0_i32_0 = arith.constant 0 : i32
    %c0_i32_1 = arith.constant 0 : i32
    return %c0_i32, %c0_i32_0 : i32, i32
  }
  func.func @transform_7(%arg0: i32) -> (i32, i32) {
    %c0_i32 = arith.constant 0 : i32
    %c0_i32_0 = arith.constant 0 : i32
    return %arg0, %c0_i32 : i32, i32
  }
}

module attributes {stable_mosaic.version = 11 : i64} {
  func.func @propagate_kernel(%arg0: i32, %arg1: i32, %arg2: memref<256x128xbf16, #tpu.memory_space<vmem>>, %arg3: memref<128x128xi8, #tpu.memory_space<vmem>>, %arg4: memref<128x128xbf16, #tpu.memory_space<vmem>>, %arg5: memref<128x1xf32, #tpu.memory_space<vmem>>, %arg6: memref<1x128xf32, #tpu.memory_space<vmem>>, %arg7: memref<128x128xf32, #tpu.memory_space<vmem>>, %arg8: memref<128x128xf32, #tpu.memory_space<vmem>>) attributes {dimension_semantics = [#tpu.dimension_semantics<parallel>, #tpu.dimension_semantics<arbitrary>], iteration_bounds = array<i64: 2, 2>, scalar_prefetch = 0 : i64, scratch_operands = 1 : i64, tpu.core_type = #tpu.core_type<tc>, window_params = [{pipeline_mode = #tpu.pipeline_mode<synchronous>, transform_indices = @transform_0, window_bounds = array<i64: 256, 128>}, {transform_indices = @transform_1, window_bounds = array<i64: 128, 128>}, {transform_indices = @transform_2, window_bounds = array<i64: 128, 128>}, {transform_indices = @transform_3, window_bounds = array<i64: 128, 1>}, {pipeline_mode = #tpu.pipeline_mode<synchronous>, transform_indices = @transform_4, window_bounds = array<i64: 1, 128>}, {transform_indices = @transform_5, window_bounds = array<i64: 128, 128>}]} {
    %c0_i32 = arith.constant 0 : i32
    %0 = arith.cmpi eq, %arg1, %c0_i32 : i32
    %1 = arith.extui %0 : i1 to i32
    %c0_i32_0 = arith.constant 0 : i32
    %2 = arith.cmpi ne, %1, %c0_i32_0 : i32
    scf.if %2 {
      %c0_8 = arith.constant 0 : index
      %c0_9 = arith.constant 0 : index
      %16 = vector.load %arg4[%c0_8, %c0_9] : memref<128x128xbf16, #tpu.memory_space<vmem>>, vector<128x128xbf16>
      %17 = arith.extf %16 : vector<128x128xbf16> to vector<128x128xf32>
      %c0_10 = arith.constant 0 : index
      %c0_11 = arith.constant 0 : index
      %18 = vector.load %arg8[%c0_10, %c0_11] : memref<128x128xf32, #tpu.memory_space<vmem>>, vector<128x128xf32>
      tpu.vector_store %arg8[%c0_10, %c0_11], %17 {strides = array<i32>} : memref<128x128xf32, #tpu.memory_space<vmem>>, vector<128x128xf32>,
    } else {
    }
    %c128_i32 = arith.constant 128 : i32
    %3 = arith.muli %arg1, %c128_i32 : i32
    %4 = tpu.assume_multiple %3, 128 : i32
    %5 = arith.index_cast %4 : i32 to index
    %c0 = arith.constant 0 : index
    %6 = vector.load %arg2[%5, %c0] : memref<256x128xbf16, #tpu.memory_space<vmem>>, vector<128x128xbf16>
    %c0_1 = arith.constant 0 : index
    %c0_2 = arith.constant 0 : index
    %7 = vector.load %arg8[%c0_1, %c0_2] : memref<128x128xf32, #tpu.memory_space<vmem>>, vector<128x128xf32>
    %c0_3 = arith.constant 0 : index
    %c0_4 = arith.constant 0 : index
    %8 = vector.load %arg3[%c0_3, %c0_4] : memref<128x128xi8, #tpu.memory_space<vmem>>, vector<128x128xi8>
    %9 = arith.sitofp %8 : vector<128x128xi8> to vector<128x128xbf16>
    %cst = arith.constant dense<0.000000e+00> : vector<128x128xf32>
    %10 = tpu.matmul %9, %6, %cst {dimension_numbers = #tpu.dot_dimension_numbers<[1], [0], [0], [1], [0, 0, 1, 1], [], []>} : vector<128x128xbf16>, vector<128x128xbf16>, vector<128x128xf32> -> vector<128x128xf32>
    %11 = arith.addf %7, %10 : vector<128x128xf32>
    %c0_5 = arith.constant 0 : index
    %c0_6 = arith.constant 0 : index
    %12 = vector.load %arg8[%c0_5, %c0_6] : memref<128x128xf32, #tpu.memory_space<vmem>>, vector<128x128xf32>
    tpu.vector_store %arg8[%c0_5, %c0_6], %11 {strides = array<i32>} : memref<128x128xf32, #tpu.memory_space<vmem>>, vector<128x128xf32>,
    %c1_i32 = arith.constant 1 : i32
    %13 = arith.cmpi eq, %arg1, %c1_i32 : i32
    %14 = arith.extui %13 : i1 to i32
    %c0_i32_7 = arith.constant 0 : i32
    %15 = arith.cmpi ne, %14, %c0_i32_7 : i32
    scf.if %15 {
      %c0_8 = arith.constant 0 : index
      %c0_9 = arith.constant 0 : index
      %16 = vector.load %arg5[%c0_8, %c0_9] : memref<128x1xf32, #tpu.memory_space<vmem>>, vector<128x1xf32>
      %c0_10 = arith.constant 0 : index
      %c0_11 = arith.constant 0 : index
      %17 = vector.load %arg8[%c0_10, %c0_11] : memref<128x128xf32, #tpu.memory_space<vmem>>, vector<128x128xf32>
      %18 = vector.broadcast %16 : vector<128x1xf32> to vector<128x128xf32>
      %19 = arith.mulf %18, %17 : vector<128x128xf32>
      %c0_12 = arith.constant 0 : index
      %c0_13 = arith.constant 0 : index
      %20 = vector.load %arg6[%c0_12, %c0_13] : memref<1x128xf32, #tpu.memory_space<vmem>>, vector<1x128xf32>
      %21 = vector.broadcast %20 : vector<1x128xf32> to vector<128x128xf32>
      %22 = arith.addf %19, %21 : vector<128x128xf32>
      %c0_14 = arith.constant 0 : index
      %c0_15 = arith.constant 0 : index
      %23 = vector.load %arg7[%c0_14, %c0_15] : memref<128x128xf32, #tpu.memory_space<vmem>>, vector<128x128xf32>
      tpu.vector_store %arg7[%c0_14, %c0_15], %22 {strides = array<i32>} : memref<128x128xf32, #tpu.memory_space<vmem>>, vector<128x128xf32>,
    } else {
    }
    return
  }
  func.func @transform_0(%arg0: i32, %arg1: i32) -> (i32, i32) {
    %c0_i32 = arith.constant 0 : i32
    %c0_i32_0 = arith.constant 0 : i32
    %c0_i32_1 = arith.constant 0 : i32
    return %c0_i32, %c0_i32_0 : i32, i32
  }
  func.func @transform_1(%arg0: i32, %arg1: i32) -> (i32, i32) {
    %c0_i32 = arith.constant 0 : i32
    return %arg0, %arg1 : i32, i32
  }
  func.func @transform_2(%arg0: i32, %arg1: i32) -> (i32, i32) {
    %c0_i32 = arith.constant 0 : i32
    %c0_i32_0 = arith.constant 0 : i32
    return %arg0, %c0_i32 : i32, i32
  }
  func.func @transform_3(%arg0: i32, %arg1: i32) -> (i32, i32) {
    %c0_i32 = arith.constant 0 : i32
    %c0_i32_0 = arith.constant 0 : i32
    return %arg0, %c0_i32 : i32, i32
  }
  func.func @transform_4(%arg0: i32, %arg1: i32) -> (i32, i32) {
    %c0_i32 = arith.constant 0 : i32
    %c0_i32_0 = arith.constant 0 : i32
    %c0_i32_1 = arith.constant 0 : i32
    return %c0_i32, %c0_i32_0 : i32, i32
  }
  func.func @transform_5(%arg0: i32, %arg1: i32) -> (i32, i32) {
    %c0_i32 = arith.constant 0 : i32
    %c0_i32_0 = arith.constant 0 : i32
    return %arg0, %c0_i32 : i32, i32
  }
}

</mosaic_0001>

<llo_original>
// kernel: jknet_forward.10
$region0: #{jknet_forward.10}
  #allocation0 [shape = 'u32[]', space=smem, size = 0x4, offset = 0x4, fixed_abs, tag = 'smem constant byte address 0x4 - core index']
  #allocation1 [shape = 'u32[144,128]{1,0:T(1,128)}', space=vmem, size = 0x12000, scoped, tag = 'internal scratch']
  %s0 = inlined_call_operand.vmem [shape: f32[256,1], index: 0, kind: input, shape index: {}]
  %s1 = inlined_call_operand.vmem [shape: bf16[256,16], index: 1, kind: input, shape index: {}]
  %s2 = inlined_call_operand.vmem [shape: f32[16,16], index: 2, kind: input, shape index: {}]
  %s3 = inlined_call_operand.vmem [shape: bf16[256,16], index: 3, kind: output, shape index: {}]
  %s4 = sld [smem:[#allocation0]]
  $region45: #{jknet_forward.10} parent=0
    _
  %s6 = ssub.s32 1, %s4
  %s7 = scalar_select 0, %s6, %s4
  loop: start=0, step=1, limit=4
  $region2: #{jknet_forward.10} parent=0 // loop_pre_header
    _
  $region3: #{jknet_forward.10} parent=0 // loop_header
    %s9 = sphi 0, %s13
    %p10 = scmp.ge.s32.totalorder %s9, 4
    %s19 = sphi 0, %s21
    %s22 = sphi 0, %s19
    %s23 = sphi 0, %s22
    %s39 = sphi 0, %s23
    %s45 = sphi 0, %s47
    %s48 = sphi 0, %s45
    %s49 = sphi 0, %s48
    %s65 = sphi 0, %s49
    %s69 = sphi 0, %s69
    %s71 = sphi 0, %s69
    %s72 = sphi 0, %s71
    %s86 = sphi 0, %s72
    %s92 = sphi 0, %s94
    %s95 = sphi 0, %s92
    %s96 = sphi 0, %s95
    %s112 = sphi 0, %s96
  $region4: #{jknet_forward.10} parent=0 // loop_header_branch
    %12 = sbr.rel (%p10) target = $region8
  $region5: #{jknet_forward.10} parent=0 // loop_body
    %s14 = ssub.s32 %s9, 1
    %s15 = ssub.s32 %s9, 2
    %s16 = sadd.s32 %s9, 1
    %s17 = ssub.s32 %s9, %s16
    %p18 = scmp.eq.s32.totalorder %s17, 0
    %s20 = sadd.s32 %s19, 1
    %s21 = scalar_select %p18, %s19, %s20
    %p24 = pneg %p18
    %p25 = scmp.eq.s32.totalorder %s9, 1
    %p26 = por %p24, %p25
    %p27 = scmp.ne.s32.totalorder %s19, %s22
    %p28 = scmp.eq.s32.totalorder %s9, 0
    %p29 = por %p27, %p28
    %p30 = scmp.ne.s32.totalorder %s19, %s22
    %p31 = scmp.eq.s32.totalorder %s14, 1
    %p32 = por %p30, %p31
    %p33 = scmp.ne.s32.totalorder %s22, %s23
    %p34 = scmp.eq.s32.totalorder %s14, 0
    %p35 = por %p33, %p34
    %p36 = scmp.ne.s32.totalorder %s22, %s23
    %p37 = scmp.eq.s32.totalorder %s15, 1
    %p38 = por %p36, %p37
    %p40 = scmp.ne.s32.totalorder %s23, %s39
    %p41 = scmp.eq.s32.totalorder %s15, 0
    %p42 = por %p40, %p41
    %s43 = ssub.s32 %s9, %s16
    %p44 = scmp.eq.s32.totalorder %s43, 0
    %s46 = sadd.s32 %s45, 1
    %s47 = scalar_select %p44, %s45, %s46
    %p50 = pneg %p44
    %p51 = scmp.eq.s32.totalorder %s9, 1
    %p52 = por %p50, %p51
    %p53 = scmp.ne.s32.totalorder %s45, %s48
    %p54 = scmp.eq.s32.totalorder %s9, 0
    %p55 = por %p53, %p54
    %p56 = scmp.ne.s32.totalorder %s45, %s48
    %p57 = scmp.eq.s32.totalorder %s14, 1
    %p58 = por %p56, %p57
    %p59 = scmp.ne.s32.totalorder %s48, %s49
    %p60 = scmp.eq.s32.totalorder %s14, 0
    %p61 = por %p59, %p60
    %p62 = scmp.ne.s32.totalorder %s48, %s49
    %p63 = scmp.eq.s32.totalorder %s15, 1
    %p64 = por %p62, %p63
    %p66 = scmp.ne.s32.totalorder %s49, %s65
    %p67 = scmp.eq.s32.totalorder %s15, 0
    %p68 = por %p66, %p67
    %s70 = sadd.s32 %s69, 1
    %p73 = scmp.eq.s32.totalorder %s9, 1
    %p74 = scmp.ne.s32.totalorder %s69, %s71
    %p75 = scmp.eq.s32.totalorder %s9, 0
    %p76 = por %p74, %p75
    %p77 = scmp.ne.s32.totalorder %s69, %s71
    %p78 = scmp.eq.s32.totalorder %s14, 1
    %p79 = por %p77, %p78
    %p80 = scmp.ne.s32.totalorder %s71, %s72
    %p81 = scmp.eq.s32.totalorder %s14, 0
    %p82 = por %p80, %p81
    %p83 = scmp.ne.s32.totalorder %s71, %s72
    %p84 = scmp.eq.s32.totalorder %s15, 1
    %p85 = por %p83, %p84
    %p87 = scmp.ne.s32.totalorder %s72, %s86
    %p88 = scmp.eq.s32.totalorder %s15, 0
    %p89 = por %p87, %p88
    %s90 = ssub.s32 %s9, %s16
    %p91 = scmp.eq.s32.totalorder %s90, 0
    %s93 = sadd.s32 %s92, 1
    %s94 = scalar_select %p91, %s92, %s93
    %p97 = pneg %p91
    %p98 = scmp.eq.s32.totalorder %s9, 1
    %p99 = por %p97, %p98
    %p100 = scmp.ne.s32.totalorder %s92, %s95
    %p101 = scmp.eq.s32.totalorder %s9, 0
    %p102 = por %p100, %p101
    %p103 = scmp.ne.s32.totalorder %s92, %s95
    %p104 = scmp.eq.s32.totalorder %s14, 1
    %p105 = por %p103, %p104
    %p106 = scmp.ne.s32.totalorder %s95, %s96
    %p107 = scmp.eq.s32.totalorder %s14, 0
    %p108 = por %p106, %p107
    %p109 = scmp.ne.s32.totalorder %s95, %s96
    %p110 = scmp.eq.s32.totalorder %s15, 1
    %p111 = por %p109, %p110
    %p113 = scmp.ne.s32.totalorder %s96, %s112
    %p114 = scmp.eq.s32.totalorder %s15, 0
    %p115 = por %p113, %p114
    %p116 = scmp.le.s32.totalorder 1, %s9
    %p117 = scmp.lt.s32.totalorder %s9, 3
    %p118 = pnand %p116, %p117
    %p119 = pneg %p118
    // Predicated region
    $region9: #{jknet_forward.10} parent=5 // pred_check
      _
    $region10: #{jknet_forward.10} parent=5 // pred_check_branch
      %121 = sbr.rel (%p118) target = $region12
    $region11: #{jknet_forward.10} parent=5 // pred_region
      %s122 = ssub.s32 %s9, 1
      // Predicated region
      $region13: #{jknet_forward.10} parent=11 // pred_check
        %p123 = pneg %p82
      $region14: #{jknet_forward.10} parent=11 // pred_check_branch
        %125 = sbr.rel (%p123) target = $region16
      $region15: #{jknet_forward.10} parent=11 // pred_region
        _
      $region16: #{jknet_forward.10} parent=11 // pred_fallthru
        _
    $region12: #{jknet_forward.10} parent=5 // pred_fallthru
      _
    %p126 = scmp.lt.s32.totalorder %s9, 2
    // Predicated region
    $region17: #{jknet_forward.10} parent=5 // pred_check
      %p127 = pneg %p126
    $region18: #{jknet_forward.10} parent=5 // pred_check_branch
      %129 = sbr.rel (%p127) target = $region20
    $region19: #{jknet_forward.10} parent=5 // pred_region
      // Predicated region
      $region21: #{jknet_forward.10} parent=19 // pred_check
        %p130 = pneg %p29
      $region22: #{jknet_forward.10} parent=19 // pred_check_branch
        %132 = sbr.rel (%p130) target = $region24
      $region23: #{jknet_forward.10} parent=19 // pred_region
        %s133 = smul.u32 16, %s9
        %p134 = scmp.lt.s32.totalorder %s133, 31
        %s135 = scalar_select %p134, %s133, 31
        %s136 = smul.addr %s135, 8
        %s137 = scalar_lea.vmem %s0, %s136
        %s138 = smul.u32 16, %s9
      $region24: #{jknet_forward.10} parent=19 // pred_fallthru
        _
      // Predicated region
      $region25: #{jknet_forward.10} parent=19 // pred_check
        %p139 = pneg %p55
      $region26: #{jknet_forward.10} parent=19 // pred_check_branch
        %141 = sbr.rel (%p139) target = $region28
      $region27: #{jknet_forward.10} parent=19 // pred_region
        %s142 = smul.u32 16, %s9
        %p143 = scmp.lt.s32.totalorder %s142, 31
        %s144 = scalar_select %p143, %s142, 31
        %s145 = smul.addr %s144, 4
        %s146 = scalar_lea.vmem %s1, %s145
        %s147 = smul.u32 16, %s9
      $region28: #{jknet_forward.10} parent=19 // pred_fallthru
        _
    $region20: #{jknet_forward.10} parent=5 // pred_fallthru
      _
    %p148 = scmp.le.s32.totalorder 1, %s9
    %p149 = scmp.lt.s32.totalorder %s9, 3
    %p150 = pnand %p148, %p149
    %p151 = pneg %p150
    // Predicated region
    $region29: #{jknet_forward.10} parent=5 // pred_check
      _
    $region30: #{jknet_forward.10} parent=5 // pred_check_branch
      %153 = sbr.rel (%p150) target = $region32
    $region31: #{jknet_forward.10} parent=5 // pred_region
      %s154 = ssub.s32 %s9, 1
      %s155 = smul.u32 16, %s14
      %p156 = scmp.lt.s32.totalorder %s155, 31
      %s157 = scalar_select %p156, %s155, 31
      %s158 = smul.addr %s157, 8
      %s159 = scalar_lea.vmem %s0, %s158
      %p160 = pneg %p35
      %p161 = pneg %p32
      %s162 = smul.u32 16, %s14
      %p163 = scmp.lt.s32.totalorder %s162, 31
      %s164 = scalar_select %p163, %s162, 31
      %s165 = smul.addr %s164, 4
      %s166 = scalar_lea.vmem %s1, %s165
      %p167 = pneg %p61
      %p168 = pneg %p58
      %p169 = pneg %p82
      %p170 = pneg %p79
      %p171 = pneg %p108
      %p172 = pneg %p105
      %s173 = smul.u32 16, %s14
      %p174 = scmp.lt.s32.totalorder %s173, 31
      %s175 = scalar_select %p174, %s173, 31
      %s176 = smul.addr %s175, 4
      %s177 = scalar_lea.vmem %s3, %s176
      %s178 = smul.u32 16, %s14
      %p179 = scmp.lt.s32.totalorder %s178, 31
      %s180 = scalar_select %p179, %s178, 31
      %s181 = smul.addr %s180, 8
      %s182 = scalar_lea.vmem %s0, %s181
      %s183 = smul.u32 16, %s14
      %s184 = smul.u32 16, %s14
      %p185 = scmp.lt.s32.totalorder %s184, 31
      %s186 = scalar_select %p185, %s184, 31
      %s187 = smul.addr %s186, 4
      %s188 = scalar_lea.vmem %s1, %s187
      %s189 = smul.u32 16, %s14
      %s190 = smul.u32 16, %s14
      %p191 = scmp.lt.s32.totalorder %s190, 31
      %s192 = scalar_select %p191, %s190, 31
      %s193 = smul.addr %s192, 4
      %s194 = scalar_lea.vmem %s3, %s193
      %s195 = smul.u32 16, %s14
      %v196 = vld [vmem:[%s188] sm:$0xf]
      %v197 = vld [vmem:[%s188 + $0x4] sm:$0xf]
      %v198 = vld [vmem:[%s188 + $0x8] sm:$0xf]
      %v199 = vld [vmem:[%s188 + $0xc] sm:$0xf]
      %v200 = vld [vmem:[%s188 + $0x10] sm:$0xf]
      %v201 = vld [vmem:[%s188 + $0x14] sm:$0xf]
      %v202 = vld [vmem:[%s188 + $0x18] sm:$0xf]
      %v203 = vld [vmem:[%s188 + $0x1c] sm:$0xf]
      %v204 = vld [vmem:[%s188 + $0x20] sm:$0xf]
      %v205 = vld [vmem:[%s188 + $0x24] sm:$0xf]
      %v206 = vld [vmem:[%s188 + $0x28] sm:$0xf]
      %v207 = vld [vmem:[%s188 + $0x2c] sm:$0xf]
      %v208 = vld [vmem:[%s188 + $0x30] sm:$0xf]
      %v209 = vld [vmem:[%s188 + $0x34] sm:$0xf]
      %v210 = vld [vmem:[%s188 + $0x38] sm:$0xf]
      %v211 = vld [vmem:[%s188 + $0x3c] sm:$0xf]
      %v212 = vunpack.c.l.bf16 %v196
      %v213 = vunpack.c.l.bf16 %v197
      %v214 = vunpack.c.l.bf16 %v198
      %v215 = vunpack.c.l.bf16 %v199
      %v216 = vunpack.c.l.bf16 %v200
      %v217 = vunpack.c.l.bf16 %v201
      %v218 = vunpack.c.l.bf16 %v202
      %v219 = vunpack.c.l.bf16 %v203
      %v220 = vunpack.c.l.bf16 %v204
      %v221 = vunpack.c.l.bf16 %v205
      %v222 = vunpack.c.l.bf16 %v206
      %v223 = vunpack.c.l.bf16 %v207
      %v224 = vunpack.c.l.bf16 %v208
      %v225 = vunpack.c.l.bf16 %v209
      %v226 = vunpack.c.l.bf16 %v210
      %v227 = vunpack.c.l.bf16 %v211
      %v228 = vld [vmem:[%s2] sm:$0xff]
      %v229 = vld [vmem:[%s2 + $0x8] sm:$0xff]
      %vm230 = vcmask 130048
      %v232 = vsel %vm230, %v212, 0
      %v235 = vsel %vm230, %v213, 0
      %v238 = vsel %vm230, %v214, 0
      %v241 = vsel %vm230, %v215, 0
      %v244 = vsel %vm230, %v216, 0
      %v247 = vsel %vm230, %v217, 0
      %v250 = vsel %vm230, %v218, 0
      %v253 = vsel %vm230, %v219, 0
      %v256 = vsel %vm230, %v220, 0
      %v259 = vsel %vm230, %v221, 0
      %v262 = vsel %vm230, %v222, 0
      %v265 = vsel %vm230, %v223, 0
      %v268 = vsel %vm230, %v224, 0
      %v271 = vsel %vm230, %v225, 0
      %v274 = vsel %vm230, %v226, 0
      %v277 = vsel %vm230, %v227, 0
      %279 = vmatprep.subr.mxu0 0.0
      %280 = vmatpush1.msra.mxu0 0.0
      %281 = vmatprep.subr.mxu0 0.0
      %282 = vmatpush1.msra.mxu0 0.0
      %283 = vmatprep.subr.mxu0 0.0
      %284 = vmatpush1.msra.mxu0 0.0
      %285 = vmatprep.subr.mxu0 0.0
      %286 = vmatpush1.msra.mxu0 0.0
      %287 = vmatprep.subr.mxu0 0.0
      %288 = vmatpush1.msra.mxu0 0.0
      %289 = vmatprep.subr.mxu0 0.0
      %290 = vmatpush1.msra.mxu0 0.0
      %291 = vmatprep.subr.mxu0 0.0
      %292 = vmatpush1.msra.mxu0 0.0
      %293 = vmatprep.subr.mxu0 0.0
      %294 = vmatpush1.msra.mxu0 0.0
      %295 = vmatprep.subr.mxu0 0.0
      %296 = vmatpush1.msra.mxu0 0.0
      %297 = vmatprep.subr.mxu0 0.0
      %298 = vmatpush1.msra.mxu0 0.0
      %299 = vmatprep.subr.mxu0 0.0
      %300 = vmatpush1.msra.mxu0 0.0
      %301 = vmatprep.subr.mxu0 0.0
      %302 = vmatpush1.msra.mxu0 0.0
      %303 = vmatprep.subr.mxu0 0.0
      %304 = vmatpush1.msra.mxu0 0.0
      %305 = vmatprep.subr.mxu0 0.0
      %306 = vmatpush1.msra.mxu0 0.0
      %307 = vmatprep.subr.mxu0 0.0
      %308 = vmatpush1.msra.mxu0 %v229
      %309 = vmatprep.subr.mxu0 0.0
      %310 = vmatpush1.msra.mxu0 %v228
      %311 = vmatprep.subr.mxu0 0.0
      %312 = vmatpush2.msra.mxu0 0.0
      %313 = vmatprep.subr.mxu0 0.0
      %314 = vmatpush2.msra.mxu0 0.0
      %315 = vmatprep.subr.mxu0 0.0
      %316 = vmatpush2.msra.mxu0 0.0
      %317 = vmatprep.subr.mxu0 0.0
      %318 = vmatpush2.msra.mxu0 0.0
      %319 = vmatprep.subr.mxu0 0.0
      %320 = vmatpush2.msra.mxu0 0.0
      %321 = vmatprep.subr.mxu0 0.0
      %322 = vmatpush2.msra.mxu0 0.0
      %323 = vmatprep.subr.mxu0 0.0
      %324 = vmatpush2.msra.mxu0 0.0
      %325 = vmatprep.subr.mxu0 0.0
      %326 = vmatpush2.msra.mxu0 0.0
      %327 = vmatprep.subr.mxu0 0.0
      %328 = vmatpush2.msra.mxu0 0.0
      %329 = vmatprep.subr.mxu0 0.0
      %330 = vmatpush2.msra.mxu0 0.0
      %331 = vmatprep.subr.mxu0 0.0
      %332 = vmatpush2.msra.mxu0 0.0
      %333 = vmatprep.subr.mxu0 0.0
      %334 = vmatpush2.msra.mxu0 0.0
      %335 = vmatprep.subr.mxu0 0.0
      %336 = vmatpush2.msra.mxu0 0.0
      %337 = vmatprep.subr.mxu0 0.0
      %338 = vmatpush2.msra.mxu0 0.0
      %339 = vmatprep.subr.mxu0 0.0
      %340 = vmatpush2.msra.mxu0 0.0
      %341 = vmatprep.subr.mxu0 0.0
      %342 = vmatpush2.msra.mxu0 0.0
      %343 = vmatprep.mubr.f32.mxu0 0.0
      %344 = vmatmul.mubr.f32.gmra.mxu0 %v232
      %v345 = vpop.f32.mrf.mxu0
      %v346 = vadd.f32 0.0, %v345
      %v347 = vpop.f32.mrf.mxu0
      %348 = vmatprep.mubr.f32.mxu0 0.0
      %349 = vmatmul.mubr.f32.gmra.mxu0 %v235
      %v350 = vpop.f32.mrf.mxu0
      %v351 = vadd.f32 0.0, %v350
      %v352 = vpop.f32.mrf.mxu0
      %353 = vmatprep.mubr.f32.mxu0 0.0
      %354 = vmatmul.mubr.f32.gmra.mxu0 %v238
      %v355 = vpop.f32.mrf.mxu0
      %v356 = vadd.f32 0.0, %v355
      %v357 = vpop.f32.mrf.mxu0
      %358 = vmatprep.mubr.f32.mxu0 0.0
      %359 = vmatmul.mubr.f32.gmra.mxu0 %v241
      %v360 = vpop.f32.mrf.mxu0
      %v361 = vadd.f32 0.0, %v360
      %v362 = vpop.f32.mrf.mxu0
      %363 = vmatprep.mubr.f32.mxu0 0.0
      %364 = vmatmul.mubr.f32.gmra.mxu0 %v244
      %v365 = vpop.f32.mrf.mxu0
      %v366 = vadd.f32 0.0, %v365
      %v367 = vpop.f32.mrf.mxu0
      %368 = vmatprep.mubr.f32.mxu0 0.0
      %369 = vmatmul.mubr.f32.gmra.mxu0 %v247
      %v370 = vpop.f32.mrf.mxu0
      %v371 = vadd.f32 0.0, %v370
      %v372 = vpop.f32.mrf.mxu0
      %373 = vmatprep.mubr.f32.mxu0 0.0
      %374 = vmatmul.mubr.f32.gmra.mxu0 %v250
      %v375 = vpop.f32.mrf.mxu0
      %v376 = vadd.f32 0.0, %v375
      %v377 = vpop.f32.mrf.mxu0
      %378 = vmatprep.mubr.f32.mxu0 0.0
      %379 = vmatmul.mubr.f32.gmra.mxu0 %v253
      %v380 = vpop.f32.mrf.mxu0
      %v381 = vadd.f32 0.0, %v380
      %v382 = vpop.f32.mrf.mxu0
      %383 = vmatprep.mubr.f32.mxu0 0.0
      %384 = vmatmul.mubr.f32.gmra.mxu0 %v256
      %v385 = vpop.f32.mrf.mxu0
      %v386 = vadd.f32 0.0, %v385
      %v387 = vpop.f32.mrf.mxu0
      %388 = vmatprep.mubr.f32.mxu0 0.0
      %389 = vmatmul.mubr.f32.gmra.mxu0 %v259
      %v390 = vpop.f32.mrf.mxu0
      %v391 = vadd.f32 0.0, %v390
      %v392 = vpop.f32.mrf.mxu0
      %393 = vmatprep.mubr.f32.mxu0 0.0
      %394 = vmatmul.mubr.f32.gmra.mxu0 %v262
      %v395 = vpop.f32.mrf.mxu0
      %v396 = vadd.f32 0.0, %v395
      %v397 = vpop.f32.mrf.mxu0
      %398 = vmatprep.mubr.f32.mxu0 0.0
      %399 = vmatmul.mubr.f32.gmra.mxu0 %v265
      %v400 = vpop.f32.mrf.mxu0
      %v401 = vadd.f32 0.0, %v400
      %v402 = vpop.f32.mrf.mxu0
      %403 = vmatprep.mubr.f32.mxu0 0.0
      %404 = vmatmul.mubr.f32.gmra.mxu0 %v268
      %v405 = vpop.f32.mrf.mxu0
      %v406 = vadd.f32 0.0, %v405
      %v407 = vpop.f32.mrf.mxu0
      %408 = vmatprep.mubr.f32.mxu0 0.0
      %409 = vmatmul.mubr.f32.gmra.mxu0 %v271
      %v410 = vpop.f32.mrf.mxu0
      %v411 = vadd.f32 0.0, %v410
      %v412 = vpop.f32.mrf.mxu0
      %413 = vmatprep.mubr.f32.mxu0 0.0
      %414 = vmatmul.mubr.f32.gmra.mxu0 %v274
      %v415 = vpop.f32.mrf.mxu0
      %v416 = vadd.f32 0.0, %v415
      %v417 = vpop.f32.mrf.mxu0
      %418 = vmatprep.mubr.f32.mxu0 0.0
      %419 = vmatmul.mubr.f32.gmra.mxu0 %v277
      %v420 = vpop.f32.mrf.mxu0
      %v421 = vadd.f32 0.0, %v420
      %v422 = vpop.f32.mrf.mxu0
      %423 = vdwg.mxu0
      %v424 = vld [vmem:[%s182] sm:$0xff]
      %v425 = vld [vmem:[%s182 + $0x8] sm:$0xff]
      %v426 = vld [vmem:[%s182 + $0x10] sm:$0xff]
      %v427 = vld [vmem:[%s182 + $0x18] sm:$0xff]
      %v428 = vld [vmem:[%s182 + $0x20] sm:$0xff]
      %v429 = vld [vmem:[%s182 + $0x28] sm:$0xff]
      %v430 = vld [vmem:[%s182 + $0x30] sm:$0xff]
      %v431 = vld [vmem:[%s182 + $0x38] sm:$0xff]
      %v432 = vld [vmem:[%s182 + $0x40] sm:$0xff]
      %v433 = vld [vmem:[%s182 + $0x48] sm:$0xff]
      %v434 = vld [vmem:[%s182 + $0x50] sm:$0xff]
      %v435 = vld [vmem:[%s182 + $0x58] sm:$0xff]
      %v436 = vld [vmem:[%s182 + $0x60] sm:$0xff]
      %v437 = vld [vmem:[%s182 + $0x68] sm:$0xff]
      %v438 = vld [vmem:[%s182 + $0x70] sm:$0xff]
      %v439 = vld [vmem:[%s182 + $0x78] sm:$0xff]
      %441 = vset.pattern.permute.xlu0 0
      %442 = vperm.xlu0 %441, %v424
      %v443 = vpop.permute.xlu0 %442
      %446 = vset.pattern.permute.xlu0 0
      %447 = vperm.xlu0 %446, %v425
      %v448 = vpop.permute.xlu0 %447
      %451 = vset.pattern.permute.xlu0 0
      %452 = vperm.xlu0 %451, %v426
      %v453 = vpop.permute.xlu0 %452
      %456 = vset.pattern.permute.xlu0 0
      %457 = vperm.xlu0 %456, %v427
      %v458 = vpop.permute.xlu0 %457
      %461 = vset.pattern.permute.xlu0 0
      %462 = vperm.xlu0 %461, %v428
      %v463 = vpop.permute.xlu0 %462
      %466 = vset.pattern.permute.xlu0 0
      %467 = vperm.xlu0 %466, %v429
      %v468 = vpop.permute.xlu0 %467
      %471 = vset.pattern.permute.xlu0 0
      %472 = vperm.xlu0 %471, %v430
      %v473 = vpop.permute.xlu0 %472
      %476 = vset.pattern.permute.xlu0 0
      %477 = vperm.xlu0 %476, %v431
      %v478 = vpop.permute.xlu0 %477
      %481 = vset.pattern.permute.xlu0 0
      %482 = vperm.xlu0 %481, %v432
      %v483 = vpop.permute.xlu0 %482
      %486 = vset.pattern.permute.xlu0 0
      %487 = vperm.xlu0 %486, %v433
      %v488 = vpop.permute.xlu0 %487
      %491 = vset.pattern.permute.xlu0 0
      %492 = vperm.xlu0 %491, %v434
      %v493 = vpop.permute.xlu0 %492
      %496 = vset.pattern.permute.xlu0 0
      %497 = vperm.xlu0 %496, %v435
      %v498 = vpop.permute.xlu0 %497
      %501 = vset.pattern.permute.xlu0 0
      %502 = vperm.xlu0 %501, %v436
      %v503 = vpop.permute.xlu0 %502
      %506 = vset.pattern.permute.xlu0 0
      %507 = vperm.xlu0 %506, %v437
      %v508 = vpop.permute.xlu0 %507
      %511 = vset.pattern.permute.xlu0 0
      %512 = vperm.xlu0 %511, %v438
      %v513 = vpop.permute.xlu0 %512
      %516 = vset.pattern.permute.xlu0 0
      %517 = vperm.xlu0 %516, %v439
      %v518 = vpop.permute.xlu0 %517
      %v520 = vmul.f32 %v443, %v346
      %v521 = vmul.f32 %v448, %v351
      %v522 = vmul.f32 %v453, %v356
      %v523 = vmul.f32 %v458, %v361
      %v524 = vmul.f32 %v463, %v366
      %v525 = vmul.f32 %v468, %v371
      %v526 = vmul.f32 %v473, %v376
      %v527 = vmul.f32 %v478, %v381
      %v528 = vmul.f32 %v483, %v386
      %v529 = vmul.f32 %v488, %v391
      %v530 = vmul.f32 %v493, %v396
      %v531 = vmul.f32 %v498, %v401
      %v532 = vmul.f32 %v503, %v406
      %v533 = vmul.f32 %v508, %v411
      %v534 = vmul.f32 %v513, %v416
      %v535 = vmul.f32 %v518, %v421
      %v536 = vpack.c.bf16 %v521, %v520
      %v537 = vpack.c.bf16 %v523, %v522
      %v538 = vpack.c.bf16 %v525, %v524
      %v539 = vpack.c.bf16 %v527, %v526
      %v540 = vpack.c.bf16 %v529, %v528
      %v541 = vpack.c.bf16 %v531, %v530
      %v542 = vpack.c.bf16 %v533, %v532
      %v543 = vpack.c.bf16 %v535, %v534
      %v552 = vunpack.c.l.b16 %v536
      %v553 = vunpack.c.h.b16 %v536
      %v554 = vunpack.c.l.b16 %v537
      %v555 = vunpack.c.h.b16 %v537
      %v556 = vunpack.c.l.b16 %v538
      %v557 = vunpack.c.h.b16 %v538
      %v558 = vunpack.c.l.b16 %v539
      %v559 = vunpack.c.h.b16 %v539
      %v560 = vunpack.c.l.b16 %v540
      %v561 = vunpack.c.h.b16 %v540
      %v562 = vunpack.c.l.b16 %v541
      %v563 = vunpack.c.h.b16 %v541
      %v564 = vunpack.c.l.b16 %v542
      %v565 = vunpack.c.h.b16 %v542
      %v566 = vunpack.c.l.b16 %v543
      %v567 = vunpack.c.h.b16 %v543
      %v568 = vpack.c.b16 %v552, %v552
      %v569 = vpack.c.b16 %v553, %v553
      %v570 = vpack.c.b16 %v554, %v554
      %v571 = vpack.c.b16 %v555, %v555
      %v572 = vpack.c.b16 %v556, %v556
      %v573 = vpack.c.b16 %v557, %v557
      %v574 = vpack.c.b16 %v558, %v558
      %v575 = vpack.c.b16 %v559, %v559
      %v576 = vpack.c.b16 %v560, %v560
      %v577 = vpack.c.b16 %v561, %v561
      %v578 = vpack.c.b16 %v562, %v562
      %v579 = vpack.c.b16 %v563, %v563
      %v580 = vpack.c.b16 %v564, %v564
      %v581 = vpack.c.b16 %v565, %v565
      %v582 = vpack.c.b16 %v566, %v566
      %v583 = vpack.c.b16 %v567, %v567
      %vm600 = vcmask 125952
      %601 = vst.msk [vmem:[%s194] sm:$0xf] %vm600, %v568
      %602 = vst.msk [vmem:[%s194 + $0x4] sm:$0xf] %vm600, %v569
      %603 = vst.msk [vmem:[%s194 + $0x8] sm:$0xf] %vm600, %v570
      %604 = vst.msk [vmem:[%s194 + $0xc] sm:$0xf] %vm600, %v571
      %605 = vst.msk [vmem:[%s194 + $0x10] sm:$0xf] %vm600, %v572
      %606 = vst.msk [vmem:[%s194 + $0x14] sm:$0xf] %vm600, %v573
      %607 = vst.msk [vmem:[%s194 + $0x18] sm:$0xf] %vm600, %v574
      %608 = vst.msk [vmem:[%s194 + $0x1c] sm:$0xf] %vm600, %v575
      %609 = vst.msk [vmem:[%s194 + $0x20] sm:$0xf] %vm600, %v576
      %610 = vst.msk [vmem:[%s194 + $0x24] sm:$0xf] %vm600, %v577
      %611 = vst.msk [vmem:[%s194 + $0x28] sm:$0xf] %vm600, %v578
      %612 = vst.msk [vmem:[%s194 + $0x2c] sm:$0xf] %vm600, %v579
      %613 = vst.msk [vmem:[%s194 + $0x30] sm:$0xf] %vm600, %v580
      %614 = vst.msk [vmem:[%s194 + $0x34] sm:$0xf] %vm600, %v581
      %615 = vst.msk [vmem:[%s194 + $0x38] sm:$0xf] %vm600, %v582
      %616 = vst.msk [vmem:[%s194 + $0x3c] sm:$0xf] %vm600, %v583
      %s617 = smul.u32 16, %s14
      %p618 = scmp.lt.s32.totalorder %s617, 31
      %s619 = scalar_select %p618, %s617, 31
      %s620 = smul.addr %s619, 4
      %s621 = scalar_lea.vmem %s3, %s620
      // Predicated region
      $region33: #{jknet_forward.10} parent=31 // pred_check
        %p622 = pneg %p105
      $region34: #{jknet_forward.10} parent=31 // pred_check_branch
        %624 = sbr.rel (%p622) target = $region36
      $region35: #{jknet_forward.10} parent=31 // pred_region
        %s625 = smul.u32 16, %s14
      $region36: #{jknet_forward.10} parent=31 // pred_fallthru
        _
    $region32: #{jknet_forward.10} parent=5 // pred_fallthru
      _
    %p626 = scmp.le.s32.totalorder 2, %s9
    // Predicated region
    $region37: #{jknet_forward.10} parent=5 // pred_check
      %p627 = pneg %p626
    $region38: #{jknet_forward.10} parent=5 // pred_check_branch
      %629 = sbr.rel (%p627) target = $region40
    $region39: #{jknet_forward.10} parent=5 // pred_region
      %s630 = ssub.s32 %s9, 2
      // Predicated region
      $region41: #{jknet_forward.10} parent=39 // pred_check
        %p631 = pneg %p111
      $region42: #{jknet_forward.10} parent=39 // pred_check_branch
        %633 = sbr.rel (%p631) target = $region44
      $region43: #{jknet_forward.10} parent=39 // pred_region
        %s634 = smul.u32 16, %s15
        %p635 = scmp.lt.s32.totalorder %s634, 31
        %s636 = scalar_select %p635, %s634, 31
        %s637 = smul.addr %s636, 4
        %s638 = scalar_lea.vmem %s3, %s637
      $region44: #{jknet_forward.10} parent=39 // pred_fallthru
        _
    $region40: #{jknet_forward.10} parent=5 // pred_fallthru
      _
  $region6: #{jknet_forward.10} parent=0 // loop_footer
    %s13 = sadd.s32 1, %s9
  $region7: #{jknet_forward.10} parent=0 // loop_footer_branch
    %8 = sbr.rel target = $region3
  $region8: #{jknet_forward.10} parent=0 // loop_exit
    _

// kernel: jknet_forward.8
$region0: #{jknet_forward.8}
  #allocation0 [shape = 'u32[]', space=smem, size = 0x4, offset = 0x4, fixed_abs, tag = 'smem constant byte address 0x4 - core index']
  #allocation1 [shape = 'u32[144,128]{1,0:T(1,128)}', space=vmem, size = 0x12000, scoped, tag = 'internal scratch']
  %s0 = inlined_call_operand.vmem [shape: f32[256,1], index: 0, kind: input, shape index: {}]
  %s1 = inlined_call_operand.vmem [shape: f32[256,32], index: 1, kind: input, shape index: {}]
  %s2 = inlined_call_operand.vmem [shape: f32[32,16], index: 2, kind: input, shape index: {}]
  %s3 = inlined_call_operand.vmem [shape: bf16[256,16], index: 3, kind: output, shape index: {}]
  %s4 = sld [smem:[#allocation0]]
  $region45: #{jknet_forward.8} parent=0
    _
  %s6 = ssub.s32 1, %s4
  %s7 = scalar_select 0, %s6, %s4
  loop: start=0, step=1, limit=4
  $region2: #{jknet_forward.8} parent=0 // loop_pre_header
    _
  $region3: #{jknet_forward.8} parent=0 // loop_header
    %s9 = sphi 0, %s13
    %p10 = scmp.ge.s32.totalorder %s9, 4
    %s19 = sphi 0, %s21
    %s22 = sphi 0, %s19
    %s23 = sphi 0, %s22
    %s39 = sphi 0, %s23
    %s45 = sphi 0, %s47
    %s48 = sphi 0, %s45
    %s49 = sphi 0, %s48
    %s65 = sphi 0, %s49
    %s69 = sphi 0, %s69
    %s71 = sphi 0, %s69
    %s72 = sphi 0, %s71
    %s86 = sphi 0, %s72
    %s92 = sphi 0, %s94
    %s95 = sphi 0, %s92
    %s96 = sphi 0, %s95
    %s112 = sphi 0, %s96
  $region4: #{jknet_forward.8} parent=0 // loop_header_branch
    %12 = sbr.rel (%p10) target = $region8
  $region5: #{jknet_forward.8} parent=0 // loop_body
    %s14 = ssub.s32 %s9, 1
    %s15 = ssub.s32 %s9, 2
    %s16 = sadd.s32 %s9, 1
    %s17 = ssub.s32 %s9, %s16
    %p18 = scmp.eq.s32.totalorder %s17, 0
    %s20 = sadd.s32 %s19, 1
    %s21 = scalar_select %p18, %s19, %s20
    %p24 = pneg %p18
    %p25 = scmp.eq.s32.totalorder %s9, 1
    %p26 = por %p24, %p25
    %p27 = scmp.ne.s32.totalorder %s19, %s22
    %p28 = scmp.eq.s32.totalorder %s9, 0
    %p29 = por %p27, %p28
    %p30 = scmp.ne.s32.totalorder %s19, %s22
    %p31 = scmp.eq.s32.totalorder %s14, 1
    %p32 = por %p30, %p31
    %p33 = scmp.ne.s32.totalorder %s22, %s23
    %p34 = scmp.eq.s32.totalorder %s14, 0
    %p35 = por %p33, %p34
    %p36 = scmp.ne.s32.totalorder %s22, %s23
    %p37 = scmp.eq.s32.totalorder %s15, 1
    %p38 = por %p36, %p37
    %p40 = scmp.ne.s32.totalorder %s23, %s39
    %p41 = scmp.eq.s32.totalorder %s15, 0
    %p42 = por %p40, %p41
    %s43 = ssub.s32 %s9, %s16
    %p44 = scmp.eq.s32.totalorder %s43, 0
    %s46 = sadd.s32 %s45, 1
    %s47 = scalar_select %p44, %s45, %s46
    %p50 = pneg %p44
    %p51 = scmp.eq.s32.totalorder %s9, 1
    %p52 = por %p50, %p51
    %p53 = scmp.ne.s32.totalorder %s45, %s48
    %p54 = scmp.eq.s32.totalorder %s9, 0
    %p55 = por %p53, %p54
    %p56 = scmp.ne.s32.totalorder %s45, %s48
    %p57 = scmp.eq.s32.totalorder %s14, 1
    %p58 = por %p56, %p57
    %p59 = scmp.ne.s32.totalorder %s48, %s49
    %p60 = scmp.eq.s32.totalorder %s14, 0
    %p61 = por %p59, %p60
    %p62 = scmp.ne.s32.totalorder %s48, %s49
    %p63 = scmp.eq.s32.totalorder %s15, 1
    %p64 = por %p62, %p63
    %p66 = scmp.ne.s32.totalorder %s49, %s65
    %p67 = scmp.eq.s32.totalorder %s15, 0
    %p68 = por %p66, %p67
    %s70 = sadd.s32 %s69, 1
    %p73 = scmp.eq.s32.totalorder %s9, 1
    %p74 = scmp.ne.s32.totalorder %s69, %s71
    %p75 = scmp.eq.s32.totalorder %s9, 0
    %p76 = por %p74, %p75
    %p77 = scmp.ne.s32.totalorder %s69, %s71
    %p78 = scmp.eq.s32.totalorder %s14, 1
    %p79 = por %p77, %p78
    %p80 = scmp.ne.s32.totalorder %s71, %s72
    %p81 = scmp.eq.s32.totalorder %s14, 0
    %p82 = por %p80, %p81
    %p83 = scmp.ne.s32.totalorder %s71, %s72
    %p84 = scmp.eq.s32.totalorder %s15, 1
    %p85 = por %p83, %p84
    %p87 = scmp.ne.s32.totalorder %s72, %s86
    %p88 = scmp.eq.s32.totalorder %s15, 0
    %p89 = por %p87, %p88
    %s90 = ssub.s32 %s9, %s16
    %p91 = scmp.eq.s32.totalorder %s90, 0
    %s93 = sadd.s32 %s92, 1
    %s94 = scalar_select %p91, %s92, %s93
    %p97 = pneg %p91
    %p98 = scmp.eq.s32.totalorder %s9, 1
    %p99 = por %p97, %p98
    %p100 = scmp.ne.s32.totalorder %s92, %s95
    %p101 = scmp.eq.s32.totalorder %s9, 0
    %p102 = por %p100, %p101
    %p103 = scmp.ne.s32.totalorder %s92, %s95
    %p104 = scmp.eq.s32.totalorder %s14, 1
    %p105 = por %p103, %p104
    %p106 = scmp.ne.s32.totalorder %s95, %s96
    %p107 = scmp.eq.s32.totalorder %s14, 0
    %p108 = por %p106, %p107
    %p109 = scmp.ne.s32.totalorder %s95, %s96
    %p110 = scmp.eq.s32.totalorder %s15, 1
    %p111 = por %p109, %p110
    %p113 = scmp.ne.s32.totalorder %s96, %s112
    %p114 = scmp.eq.s32.totalorder %s15, 0
    %p115 = por %p113, %p114
    %p116 = scmp.le.s32.totalorder 1, %s9
    %p117 = scmp.lt.s32.totalorder %s9, 3
    %p118 = pnand %p116, %p117
    %p119 = pneg %p118
    // Predicated region
    $region9: #{jknet_forward.8} parent=5 // pred_check
      _
    $region10: #{jknet_forward.8} parent=5 // pred_check_branch
      %121 = sbr.rel (%p118) target = $region12
    $region11: #{jknet_forward.8} parent=5 // pred_region
      %s122 = ssub.s32 %s9, 1
      // Predicated region
      $region13: #{jknet_forward.8} parent=11 // pred_check
        %p123 = pneg %p82
      $region14: #{jknet_forward.8} parent=11 // pred_check_branch
        %125 = sbr.rel (%p123) target = $region16
      $region15: #{jknet_forward.8} parent=11 // pred_region
        _
      $region16: #{jknet_forward.8} parent=11 // pred_fallthru
        _
    $region12: #{jknet_forward.8} parent=5 // pred_fallthru
      _
    %p126 = scmp.lt.s32.totalorder %s9, 2
    // Predicated region
    $region17: #{jknet_forward.8} parent=5 // pred_check
      %p127 = pneg %p126
    $region18: #{jknet_forward.8} parent=5 // pred_check_branch
      %129 = sbr.rel (%p127) target = $region20
    $region19: #{jknet_forward.8} parent=5 // pred_region
      // Predicated region
      $region21: #{jknet_forward.8} parent=19 // pred_check
        %p130 = pneg %p29
      $region22: #{jknet_forward.8} parent=19 // pred_check_branch
        %132 = sbr.rel (%p130) target = $region24
      $region23: #{jknet_forward.8} parent=19 // pred_region
        %s133 = smul.u32 16, %s9
        %p134 = scmp.lt.s32.totalorder %s133, 31
        %s135 = scalar_select %p134, %s133, 31
        %s136 = smul.addr %s135, 8
        %s137 = scalar_lea.vmem %s0, %s136
        %s138 = smul.u32 16, %s9
      $region24: #{jknet_forward.8} parent=19 // pred_fallthru
        _
      // Predicated region
      $region25: #{jknet_forward.8} parent=19 // pred_check
        %p139 = pneg %p55
      $region26: #{jknet_forward.8} parent=19 // pred_check_branch
        %141 = sbr.rel (%p139) target = $region28
      $region27: #{jknet_forward.8} parent=19 // pred_region
        %s142 = smul.u32 16, %s9
        %p143 = scmp.lt.s32.totalorder %s142, 31
        %s144 = scalar_select %p143, %s142, 31
        %s145 = smul.addr %s144, 8
        %s146 = scalar_lea.vmem %s1, %s145
        %s147 = smul.u32 16, %s9
      $region28: #{jknet_forward.8} parent=19 // pred_fallthru
        _
    $region20: #{jknet_forward.8} parent=5 // pred_fallthru
      _
    %p148 = scmp.le.s32.totalorder 1, %s9
    %p149 = scmp.lt.s32.totalorder %s9, 3
    %p150 = pnand %p148, %p149
    %p151 = pneg %p150
    // Predicated region
    $region29: #{jknet_forward.8} parent=5 // pred_check
      _
    $region30: #{jknet_forward.8} parent=5 // pred_check_branch
      %153 = sbr.rel (%p150) target = $region32
    $region31: #{jknet_forward.8} parent=5 // pred_region
      %s154 = ssub.s32 %s9, 1
      %s155 = smul.u32 16, %s14
      %p156 = scmp.lt.s32.totalorder %s155, 31
      %s157 = scalar_select %p156, %s155, 31
      %s158 = smul.addr %s157, 8
      %s159 = scalar_lea.vmem %s0, %s158
      %p160 = pneg %p35
      %p161 = pneg %p32
      %s162 = smul.u32 16, %s14
      %p163 = scmp.lt.s32.totalorder %s162, 31
      %s164 = scalar_select %p163, %s162, 31
      %s165 = smul.addr %s164, 8
      %s166 = scalar_lea.vmem %s1, %s165
      %p167 = pneg %p61
      %p168 = pneg %p58
      %p169 = pneg %p82
      %p170 = pneg %p79
      %p171 = pneg %p108
      %p172 = pneg %p105
      %s173 = smul.u32 16, %s14
      %p174 = scmp.lt.s32.totalorder %s173, 31
      %s175 = scalar_select %p174, %s173, 31
      %s176 = smul.addr %s175, 4
      %s177 = scalar_lea.vmem %s3, %s176
      %s178 = smul.u32 16, %s14
      %p179 = scmp.lt.s32.totalorder %s178, 31
      %s180 = scalar_select %p179, %s178, 31
      %s181 = smul.addr %s180, 8
      %s182 = scalar_lea.vmem %s0, %s181
      %s183 = smul.u32 16, %s14
      %s184 = smul.u32 16, %s14
      %p185 = scmp.lt.s32.totalorder %s184, 31
      %s186 = scalar_select %p185, %s184, 31
      %s187 = smul.addr %s186, 8
      %s188 = scalar_lea.vmem %s1, %s187
      %s189 = smul.u32 16, %s14
      %s190 = smul.u32 16, %s14
      %p191 = scmp.lt.s32.totalorder %s190, 31
      %s192 = scalar_select %p191, %s190, 31
      %s193 = smul.addr %s192, 4
      %s194 = scalar_lea.vmem %s3, %s193
      %s195 = smul.u32 16, %s14
      %v196 = vld [vmem:[%s188] sm:$0xff]
      %v197 = vld [vmem:[%s188 + $0x8] sm:$0xff]
      %v198 = vld [vmem:[%s188 + $0x10] sm:$0xff]
      %v199 = vld [vmem:[%s188 + $0x18] sm:$0xff]
      %v200 = vld [vmem:[%s188 + $0x20] sm:$0xff]
      %v201 = vld [vmem:[%s188 + $0x28] sm:$0xff]
      %v202 = vld [vmem:[%s188 + $0x30] sm:$0xff]
      %v203 = vld [vmem:[%s188 + $0x38] sm:$0xff]
      %v204 = vld [vmem:[%s188 + $0x40] sm:$0xff]
      %v205 = vld [vmem:[%s188 + $0x48] sm:$0xff]
      %v206 = vld [vmem:[%s188 + $0x50] sm:$0xff]
      %v207 = vld [vmem:[%s188 + $0x58] sm:$0xff]
      %v208 = vld [vmem:[%s188 + $0x60] sm:$0xff]
      %v209 = vld [vmem:[%s188 + $0x68] sm:$0xff]
      %v210 = vld [vmem:[%s188 + $0x70] sm:$0xff]
      %v211 = vld [vmem:[%s188 + $0x78] sm:$0xff]
      %v212 = vld [vmem:[%s2] sm:$0xff]
      %v213 = vld [vmem:[%s2 + $0x8] sm:$0xff]
      %v214 = vld [vmem:[%s2 + $0x10] sm:$0xff]
      %v215 = vld [vmem:[%s2 + $0x18] sm:$0xff]
      %vm216 = vcmask 261120
      %v218 = vsel %vm216, %v196, 0
      %v221 = vsel %vm216, %v197, 0
      %v224 = vsel %vm216, %v198, 0
      %v227 = vsel %vm216, %v199, 0
      %v230 = vsel %vm216, %v200, 0
      %v233 = vsel %vm216, %v201, 0
      %v236 = vsel %vm216, %v202, 0
      %v239 = vsel %vm216, %v203, 0
      %v242 = vsel %vm216, %v204, 0
      %v245 = vsel %vm216, %v205, 0
      %v248 = vsel %vm216, %v206, 0
      %v251 = vsel %vm216, %v207, 0
      %v254 = vsel %vm216, %v208, 0
      %v257 = vsel %vm216, %v209, 0
      %v260 = vsel %vm216, %v210, 0
      %v263 = vsel %vm216, %v211, 0
      %265 = vmatprep.subr.mxu0 0.0
      %266 = vmatpush1.msra.mxu0 0.0
      %267 = vmatprep.subr.mxu0 0.0
      %268 = vmatpush1.msra.mxu0 0.0
      %269 = vmatprep.subr.mxu0 0.0
      %270 = vmatpush1.msra.mxu0 0.0
      %271 = vmatprep.subr.mxu0 0.0
      %272 = vmatpush1.msra.mxu0 0.0
      %273 = vmatprep.subr.mxu0 0.0
      %274 = vmatpush1.msra.mxu0 0.0
      %275 = vmatprep.subr.mxu0 0.0
      %276 = vmatpush1.msra.mxu0 0.0
      %277 = vmatprep.subr.mxu0 0.0
      %278 = vmatpush1.msra.mxu0 0.0
      %279 = vmatprep.subr.mxu0 0.0
      %280 = vmatpush1.msra.mxu0 0.0
      %281 = vmatprep.subr.mxu0 0.0
      %282 = vmatpush1.msra.mxu0 0.0
      %283 = vmatprep.subr.mxu0 0.0
      %284 = vmatpush1.msra.mxu0 0.0
      %285 = vmatprep.subr.mxu0 0.0
      %286 = vmatpush1.msra.mxu0 0.0
      %287 = vmatprep.subr.mxu0 0.0
      %288 = vmatpush1.msra.mxu0 0.0
      %289 = vmatprep.subr.mxu0 0.0
      %290 = vmatpush1.msra.mxu0 %v215
      %291 = vmatprep.subr.mxu0 0.0
      %292 = vmatpush1.msra.mxu0 %v214
      %293 = vmatprep.subr.mxu0 0.0
      %294 = vmatpush1.msra.mxu0 %v213
      %295 = vmatprep.subr.mxu0 0.0
      %296 = vmatpush1.msra.mxu0 %v212
      %297 = vmatprep.subr.mxu0 0.0
      %298 = vmatpush2.msra.mxu0 0.0
      %299 = vmatprep.subr.mxu0 0.0
      %300 = vmatpush2.msra.mxu0 0.0
      %301 = vmatprep.subr.mxu0 0.0
      %302 = vmatpush2.msra.mxu0 0.0
      %303 = vmatprep.subr.mxu0 0.0
      %304 = vmatpush2.msra.mxu0 0.0
      %305 = vmatprep.subr.mxu0 0.0
      %306 = vmatpush2.msra.mxu0 0.0
      %307 = vmatprep.subr.mxu0 0.0
      %308 = vmatpush2.msra.mxu0 0.0
      %309 = vmatprep.subr.mxu0 0.0
      %310 = vmatpush2.msra.mxu0 0.0
      %311 = vmatprep.subr.mxu0 0.0
      %312 = vmatpush2.msra.mxu0 0.0
      %313 = vmatprep.subr.mxu0 0.0
      %314 = vmatpush2.msra.mxu0 0.0
      %315 = vmatprep.subr.mxu0 0.0
      %316 = vmatpush2.msra.mxu0 0.0
      %317 = vmatprep.subr.mxu0 0.0
      %318 = vmatpush2.msra.mxu0 0.0
      %319 = vmatprep.subr.mxu0 0.0
      %320 = vmatpush2.msra.mxu0 0.0
      %321 = vmatprep.subr.mxu0 0.0
      %322 = vmatpush2.msra.mxu0 0.0
      %323 = vmatprep.subr.mxu0 0.0
      %324 = vmatpush2.msra.mxu0 0.0
      %325 = vmatprep.subr.mxu0 0.0
      %326 = vmatpush2.msra.mxu0 0.0
      %327 = vmatprep.subr.mxu0 0.0
      %328 = vmatpush2.msra.mxu0 0.0
      %329 = vmatprep.mubr.f32.mxu0 0.0
      %330 = vmatmul.mubr.f32.gmra.mxu0 %v218
      %v331 = vpop.f32.mrf.mxu0
      %v332 = vadd.f32 0.0, %v331
      %v333 = vpop.f32.mrf.mxu0
      %334 = vmatprep.mubr.f32.mxu0 0.0
      %335 = vmatmul.mubr.f32.gmra.mxu0 %v221
      %v336 = vpop.f32.mrf.mxu0
      %v337 = vadd.f32 0.0, %v336
      %v338 = vpop.f32.mrf.mxu0
      %339 = vmatprep.mubr.f32.mxu0 0.0
      %340 = vmatmul.mubr.f32.gmra.mxu0 %v224
      %v341 = vpop.f32.mrf.mxu0
      %v342 = vadd.f32 0.0, %v341
      %v343 = vpop.f32.mrf.mxu0
      %344 = vmatprep.mubr.f32.mxu0 0.0
      %345 = vmatmul.mubr.f32.gmra.mxu0 %v227
      %v346 = vpop.f32.mrf.mxu0
      %v347 = vadd.f32 0.0, %v346
      %v348 = vpop.f32.mrf.mxu0
      %349 = vmatprep.mubr.f32.mxu0 0.0
      %350 = vmatmul.mubr.f32.gmra.mxu0 %v230
      %v351 = vpop.f32.mrf.mxu0
      %v352 = vadd.f32 0.0, %v351
      %v353 = vpop.f32.mrf.mxu0
      %354 = vmatprep.mubr.f32.mxu0 0.0
      %355 = vmatmul.mubr.f32.gmra.mxu0 %v233
      %v356 = vpop.f32.mrf.mxu0
      %v357 = vadd.f32 0.0, %v356
      %v358 = vpop.f32.mrf.mxu0
      %359 = vmatprep.mubr.f32.mxu0 0.0
      %360 = vmatmul.mubr.f32.gmra.mxu0 %v236
      %v361 = vpop.f32.mrf.mxu0
      %v362 = vadd.f32 0.0, %v361
      %v363 = vpop.f32.mrf.mxu0
      %364 = vmatprep.mubr.f32.mxu0 0.0
      %365 = vmatmul.mubr.f32.gmra.mxu0 %v239
      %v366 = vpop.f32.mrf.mxu0
      %v367 = vadd.f32 0.0, %v366
      %v368 = vpop.f32.mrf.mxu0
      %369 = vmatprep.mubr.f32.mxu0 0.0
      %370 = vmatmul.mubr.f32.gmra.mxu0 %v242
      %v371 = vpop.f32.mrf.mxu0
      %v372 = vadd.f32 0.0, %v371
      %v373 = vpop.f32.mrf.mxu0
      %374 = vmatprep.mubr.f32.mxu0 0.0
      %375 = vmatmul.mubr.f32.gmra.mxu0 %v245
      %v376 = vpop.f32.mrf.mxu0
      %v377 = vadd.f32 0.0, %v376
      %v378 = vpop.f32.mrf.mxu0
      %379 = vmatprep.mubr.f32.mxu0 0.0
      %380 = vmatmul.mubr.f32.gmra.mxu0 %v248
      %v381 = vpop.f32.mrf.mxu0
      %v382 = vadd.f32 0.0, %v381
      %v383 = vpop.f32.mrf.mxu0
      %384 = vmatprep.mubr.f32.mxu0 0.0
      %385 = vmatmul.mubr.f32.gmra.mxu0 %v251
      %v386 = vpop.f32.mrf.mxu0
      %v387 = vadd.f32 0.0, %v386
      %v388 = vpop.f32.mrf.mxu0
      %389 = vmatprep.mubr.f32.mxu0 0.0
      %390 = vmatmul.mubr.f32.gmra.mxu0 %v254
      %v391 = vpop.f32.mrf.mxu0
      %v392 = vadd.f32 0.0, %v391
      %v393 = vpop.f32.mrf.mxu0
      %394 = vmatprep.mubr.f32.mxu0 0.0
      %395 = vmatmul.mubr.f32.gmra.mxu0 %v257
      %v396 = vpop.f32.mrf.mxu0
      %v397 = vadd.f32 0.0, %v396
      %v398 = vpop.f32.mrf.mxu0
      %399 = vmatprep.mubr.f32.mxu0 0.0
      %400 = vmatmul.mubr.f32.gmra.mxu0 %v260
      %v401 = vpop.f32.mrf.mxu0
      %v402 = vadd.f32 0.0, %v401
      %v403 = vpop.f32.mrf.mxu0
      %404 = vmatprep.mubr.f32.mxu0 0.0
      %405 = vmatmul.mubr.f32.gmra.mxu0 %v263
      %v406 = vpop.f32.mrf.mxu0
      %v407 = vadd.f32 0.0, %v406
      %v408 = vpop.f32.mrf.mxu0
      %409 = vdwg.mxu0
      %v410 = vld [vmem:[%s182] sm:$0xff]
      %v411 = vld [vmem:[%s182 + $0x8] sm:$0xff]
      %v412 = vld [vmem:[%s182 + $0x10] sm:$0xff]
      %v413 = vld [vmem:[%s182 + $0x18] sm:$0xff]
      %v414 = vld [vmem:[%s182 + $0x20] sm:$0xff]
      %v415 = vld [vmem:[%s182 + $0x28] sm:$0xff]
      %v416 = vld [vmem:[%s182 + $0x30] sm:$0xff]
      %v417 = vld [vmem:[%s182 + $0x38] sm:$0xff]
      %v418 = vld [vmem:[%s182 + $0x40] sm:$0xff]
      %v419 = vld [vmem:[%s182 + $0x48] sm:$0xff]
      %v420 = vld [vmem:[%s182 + $0x50] sm:$0xff]
      %v421 = vld [vmem:[%s182 + $0x58] sm:$0xff]
      %v422 = vld [vmem:[%s182 + $0x60] sm:$0xff]
      %v423 = vld [vmem:[%s182 + $0x68] sm:$0xff]
      %v424 = vld [vmem:[%s182 + $0x70] sm:$0xff]
      %v425 = vld [vmem:[%s182 + $0x78] sm:$0xff]
      %427 = vset.pattern.permute.xlu0 0
      %428 = vperm.xlu0 %427, %v410
      %v429 = vpop.permute.xlu0 %428
      %432 = vset.pattern.permute.xlu0 0
      %433 = vperm.xlu0 %432, %v411
      %v434 = vpop.permute.xlu0 %433
      %437 = vset.pattern.permute.xlu0 0
      %438 = vperm.xlu0 %437, %v412
      %v439 = vpop.permute.xlu0 %438
      %442 = vset.pattern.permute.xlu0 0
      %443 = vperm.xlu0 %442, %v413
      %v444 = vpop.permute.xlu0 %443
      %447 = vset.pattern.permute.xlu0 0
      %448 = vperm.xlu0 %447, %v414
      %v449 = vpop.permute.xlu0 %448
      %452 = vset.pattern.permute.xlu0 0
      %453 = vperm.xlu0 %452, %v415
      %v454 = vpop.permute.xlu0 %453
      %457 = vset.pattern.permute.xlu0 0
      %458 = vperm.xlu0 %457, %v416
      %v459 = vpop.permute.xlu0 %458
      %462 = vset.pattern.permute.xlu0 0
      %463 = vperm.xlu0 %462, %v417
      %v464 = vpop.permute.xlu0 %463
      %467 = vset.pattern.permute.xlu0 0
      %468 = vperm.xlu0 %467, %v418
      %v469 = vpop.permute.xlu0 %468
      %472 = vset.pattern.permute.xlu0 0
      %473 = vperm.xlu0 %472, %v419
      %v474 = vpop.permute.xlu0 %473
      %477 = vset.pattern.permute.xlu0 0
      %478 = vperm.xlu0 %477, %v420
      %v479 = vpop.permute.xlu0 %478
      %482 = vset.pattern.permute.xlu0 0
      %483 = vperm.xlu0 %482, %v421
      %v484 = vpop.permute.xlu0 %483
      %487 = vset.pattern.permute.xlu0 0
      %488 = vperm.xlu0 %487, %v422
      %v489 = vpop.permute.xlu0 %488
      %492 = vset.pattern.permute.xlu0 0
      %493 = vperm.xlu0 %492, %v423
      %v494 = vpop.permute.xlu0 %493
      %497 = vset.pattern.permute.xlu0 0
      %498 = vperm.xlu0 %497, %v424
      %v499 = vpop.permute.xlu0 %498
      %502 = vset.pattern.permute.xlu0 0
      %503 = vperm.xlu0 %502, %v425
      %v504 = vpop.permute.xlu0 %503
      %v506 = vmul.f32 %v429, %v332
      %v507 = vmul.f32 %v434, %v337
      %v508 = vmul.f32 %v439, %v342
      %v509 = vmul.f32 %v444, %v347
      %v510 = vmul.f32 %v449, %v352
      %v511 = vmul.f32 %v454, %v357
      %v512 = vmul.f32 %v459, %v362
      %v513 = vmul.f32 %v464, %v367
      %v514 = vmul.f32 %v469, %v372
      %v515 = vmul.f32 %v474, %v377
      %v516 = vmul.f32 %v479, %v382
      %v517 = vmul.f32 %v484, %v387
      %v518 = vmul.f32 %v489, %v392
      %v519 = vmul.f32 %v494, %v397
      %v520 = vmul.f32 %v499, %v402
      %v521 = vmul.f32 %v504, %v407
      %v522 = vpack.c.bf16 %v507, %v506
      %v523 = vpack.c.bf16 %v509, %v508
      %v524 = vpack.c.bf16 %v511, %v510
      %v525 = vpack.c.bf16 %v513, %v512
      %v526 = vpack.c.bf16 %v515, %v514
      %v527 = vpack.c.bf16 %v517, %v516
      %v528 = vpack.c.bf16 %v519, %v518
      %v529 = vpack.c.bf16 %v521, %v520
      %v538 = vunpack.c.l.b16 %v522
      %v539 = vunpack.c.h.b16 %v522
      %v540 = vunpack.c.l.b16 %v523
      %v541 = vunpack.c.h.b16 %v523
      %v542 = vunpack.c.l.b16 %v524
      %v543 = vunpack.c.h.b16 %v524
      %v544 = vunpack.c.l.b16 %v525
      %v545 = vunpack.c.h.b16 %v525
      %v546 = vunpack.c.l.b16 %v526
      %v547 = vunpack.c.h.b16 %v526
      %v548 = vunpack.c.l.b16 %v527
      %v549 = vunpack.c.h.b16 %v527
      %v550 = vunpack.c.l.b16 %v528
      %v551 = vunpack.c.h.b16 %v528
      %v552 = vunpack.c.l.b16 %v529
      %v553 = vunpack.c.h.b16 %v529
      %v554 = vpack.c.b16 %v538, %v538
      %v555 = vpack.c.b16 %v539, %v539
      %v556 = vpack.c.b16 %v540, %v540
      %v557 = vpack.c.b16 %v541, %v541
      %v558 = vpack.c.b16 %v542, %v542
      %v559 = vpack.c.b16 %v543, %v543
      %v560 = vpack.c.b16 %v544, %v544
      %v561 = vpack.c.b16 %v545, %v545
      %v562 = vpack.c.b16 %v546, %v546
      %v563 = vpack.c.b16 %v547, %v547
      %v564 = vpack.c.b16 %v548, %v548
      %v565 = vpack.c.b16 %v549, %v549
      %v566 = vpack.c.b16 %v550, %v550
      %v567 = vpack.c.b16 %v551, %v551
      %v568 = vpack.c.b16 %v552, %v552
      %v569 = vpack.c.b16 %v553, %v553
      %vm586 = vcmask 125952
      %587 = vst.msk [vmem:[%s194] sm:$0xf] %vm586, %v554
      %588 = vst.msk [vmem:[%s194 + $0x4] sm:$0xf] %vm586, %v555
      %589 = vst.msk [vmem:[%s194 + $0x8] sm:$0xf] %vm586, %v556
      %590 = vst.msk [vmem:[%s194 + $0xc] sm:$0xf] %vm586, %v557
      %591 = vst.msk [vmem:[%s194 + $0x10] sm:$0xf] %vm586, %v558
      %592 = vst.msk [vmem:[%s194 + $0x14] sm:$0xf] %vm586, %v559
      %593 = vst.msk [vmem:[%s194 + $0x18] sm:$0xf] %vm586, %v560
      %594 = vst.msk [vmem:[%s194 + $0x1c] sm:$0xf] %vm586, %v561
      %595 = vst.msk [vmem:[%s194 + $0x20] sm:$0xf] %vm586, %v562
      %596 = vst.msk [vmem:[%s194 + $0x24] sm:$0xf] %vm586, %v563
      %597 = vst.msk [vmem:[%s194 + $0x28] sm:$0xf] %vm586, %v564
      %598 = vst.msk [vmem:[%s194 + $0x2c] sm:$0xf] %vm586, %v565
      %599 = vst.msk [vmem:[%s194 + $0x30] sm:$0xf] %vm586, %v566
      %600 = vst.msk [vmem:[%s194 + $0x34] sm:$0xf] %vm586, %v567
      %601 = vst.msk [vmem:[%s194 + $0x38] sm:$0xf] %vm586, %v568
      %602 = vst.msk [vmem:[%s194 + $0x3c] sm:$0xf] %vm586, %v569
      %s603 = smul.u32 16, %s14
      %p604 = scmp.lt.s32.totalorder %s603, 31
      %s605 = scalar_select %p604, %s603, 31
      %s606 = smul.addr %s605, 4
      %s607 = scalar_lea.vmem %s3, %s606
      // Predicated region
      $region33: #{jknet_forward.8} parent=31 // pred_check
        %p608 = pneg %p105
      $region34: #{jknet_forward.8} parent=31 // pred_check_branch
        %610 = sbr.rel (%p608) target = $region36
      $region35: #{jknet_forward.8} parent=31 // pred_region
        %s611 = smul.u32 16, %s14
      $region36: #{jknet_forward.8} parent=31 // pred_fallthru
        _
    $region32: #{jknet_forward.8} parent=5 // pred_fallthru
      _
    %p612 = scmp.le.s32.totalorder 2, %s9
    // Predicated region
    $region37: #{jknet_forward.8} parent=5 // pred_check
      %p613 = pneg %p612
    $region38: #{jknet_forward.8} parent=5 // pred_check_branch
      %615 = sbr.rel (%p613) target = $region40
    $region39: #{jknet_forward.8} parent=5 // pred_region
      %s616 = ssub.s32 %s9, 2
      // Predicated region
      $region41: #{jknet_forward.8} parent=39 // pred_check
        %p617 = pneg %p111
      $region42: #{jknet_forward.8} parent=39 // pred_check_branch
        %619 = sbr.rel (%p617) target = $region44
      $region43: #{jknet_forward.8} parent=39 // pred_region
        %s620 = smul.u32 16, %s15
        %p621 = scmp.lt.s32.totalorder %s620, 31
        %s622 = scalar_select %p621, %s620, 31
        %s623 = smul.addr %s622, 4
        %s624 = scalar_lea.vmem %s3, %s623
      $region44: #{jknet_forward.8} parent=39 // pred_fallthru
        _
    $region40: #{jknet_forward.8} parent=5 // pred_fallthru
      _
  $region6: #{jknet_forward.8} parent=0 // loop_footer
    %s13 = sadd.s32 1, %s9
  $region7: #{jknet_forward.8} parent=0 // loop_footer_branch
    %8 = sbr.rel target = $region3
  $region8: #{jknet_forward.8} parent=0 // loop_exit
    _

// kernel: jknet_forward.14
$region0: #{jknet_forward.14}
  #allocation0 [shape = 'u32[]', space=smem, size = 0x4, offset = 0x4, fixed_abs, tag = 'smem constant byte address 0x4 - core index']
  #allocation1 [shape = 'u32[144,128]{1,0:T(1,128)}', space=vmem, size = 0x12000, scoped, tag = 'internal scratch']
  %s0 = inlined_call_operand.vmem [shape: f32[256,1], index: 0, kind: input, shape index: {}]
  %s1 = inlined_call_operand.vmem [shape: bf16[256,16], index: 1, kind: input, shape index: {}]
  %s2 = inlined_call_operand.vmem [shape: f32[16,128], index: 2, kind: input, shape index: {}]
  %s3 = inlined_call_operand.vmem [shape: bf16[256,16], index: 3, kind: input, shape index: {}]
  %s4 = inlined_call_operand.vmem [shape: f32[16,128], index: 4, kind: input, shape index: {}]
  %s5 = inlined_call_operand.vmem [shape: bf16[256,16], index: 5, kind: input, shape index: {}]
  %s6 = inlined_call_operand.vmem [shape: f32[16,128], index: 6, kind: input, shape index: {}]
  %s7 = inlined_call_operand.vmem [shape: bf16[256,128], index: 7, kind: output, shape index: {}]
  %s8 = sld [smem:[#allocation0]]
  $region61: #{jknet_forward.14} parent=0
    _
  %s10 = ssub.s32 1, %s8
  %s11 = scalar_select 0, %s10, %s8
  loop: start=0, step=1, limit=4
  $region2: #{jknet_forward.14} parent=0 // loop_pre_header
    _
  $region3: #{jknet_forward.14} parent=0 // loop_header
    %s13 = sphi 0, %s17
    %p14 = scmp.ge.s32.totalorder %s13, 4
    %s23 = sphi 0, %s25
    %s26 = sphi 0, %s23
    %s27 = sphi 0, %s26
    %s43 = sphi 0, %s27
    %s49 = sphi 0, %s51
    %s52 = sphi 0, %s49
    %s53 = sphi 0, %s52
    %s69 = sphi 0, %s53
    %s73 = sphi 0, %s73
    %s75 = sphi 0, %s73
    %s76 = sphi 0, %s75
    %s90 = sphi 0, %s76
    %s96 = sphi 0, %s98
    %s99 = sphi 0, %s96
    %s100 = sphi 0, %s99
    %s116 = sphi 0, %s100
    %s120 = sphi 0, %s120
    %s122 = sphi 0, %s120
    %s123 = sphi 0, %s122
    %s137 = sphi 0, %s123
    %s143 = sphi 0, %s145
    %s146 = sphi 0, %s143
    %s147 = sphi 0, %s146
    %s163 = sphi 0, %s147
    %s167 = sphi 0, %s167
    %s169 = sphi 0, %s167
    %s170 = sphi 0, %s169
    %s184 = sphi 0, %s170
    %s190 = sphi 0, %s192
    %s193 = sphi 0, %s190
    %s194 = sphi 0, %s193
    %s210 = sphi 0, %s194
  $region4: #{jknet_forward.14} parent=0 // loop_header_branch
    %16 = sbr.rel (%p14) target = $region8
  $region5: #{jknet_forward.14} parent=0 // loop_body
    %s18 = ssub.s32 %s13, 1
    %s19 = ssub.s32 %s13, 2
    %s20 = sadd.s32 %s13, 1
    %s21 = ssub.s32 %s13, %s20
    %p22 = scmp.eq.s32.totalorder %s21, 0
    %s24 = sadd.s32 %s23, 1
    %s25 = scalar_select %p22, %s23, %s24
    %p28 = pneg %p22
    %p29 = scmp.eq.s32.totalorder %s13, 1
    %p30 = por %p28, %p29
    %p31 = scmp.ne.s32.totalorder %s23, %s26
    %p32 = scmp.eq.s32.totalorder %s13, 0
    %p33 = por %p31, %p32
    %p34 = scmp.ne.s32.totalorder %s23, %s26
    %p35 = scmp.eq.s32.totalorder %s18, 1
    %p36 = por %p34, %p35
    %p37 = scmp.ne.s32.totalorder %s26, %s27
    %p38 = scmp.eq.s32.totalorder %s18, 0
    %p39 = por %p37, %p38
    %p40 = scmp.ne.s32.totalorder %s26, %s27
    %p41 = scmp.eq.s32.totalorder %s19, 1
    %p42 = por %p40, %p41
    %p44 = scmp.ne.s32.totalorder %s27, %s43
    %p45 = scmp.eq.s32.totalorder %s19, 0
    %p46 = por %p44, %p45
    %s47 = ssub.s32 %s13, %s20
    %p48 = scmp.eq.s32.totalorder %s47, 0
    %s50 = sadd.s32 %s49, 1
    %s51 = scalar_select %p48, %s49, %s50
    %p54 = pneg %p48
    %p55 = scmp.eq.s32.totalorder %s13, 1
    %p56 = por %p54, %p55
    %p57 = scmp.ne.s32.totalorder %s49, %s52
    %p58 = scmp.eq.s32.totalorder %s13, 0
    %p59 = por %p57, %p58
    %p60 = scmp.ne.s32.totalorder %s49, %s52
    %p61 = scmp.eq.s32.totalorder %s18, 1
    %p62 = por %p60, %p61
    %p63 = scmp.ne.s32.totalorder %s52, %s53
    %p64 = scmp.eq.s32.totalorder %s18, 0
    %p65 = por %p63, %p64
    %p66 = scmp.ne.s32.totalorder %s52, %s53
    %p67 = scmp.eq.s32.totalorder %s19, 1
    %p68 = por %p66, %p67
    %p70 = scmp.ne.s32.totalorder %s53, %s69
    %p71 = scmp.eq.s32.totalorder %s19, 0
    %p72 = por %p70, %p71
    %s74 = sadd.s32 %s73, 1
    %p77 = scmp.eq.s32.totalorder %s13, 1
    %p78 = scmp.ne.s32.totalorder %s73, %s75
    %p79 = scmp.eq.s32.totalorder %s13, 0
    %p80 = por %p78, %p79
    %p81 = scmp.ne.s32.totalorder %s73, %s75
    %p82 = scmp.eq.s32.totalorder %s18, 1
    %p83 = por %p81, %p82
    %p84 = scmp.ne.s32.totalorder %s75, %s76
    %p85 = scmp.eq.s32.totalorder %s18, 0
    %p86 = por %p84, %p85
    %p87 = scmp.ne.s32.totalorder %s75, %s76
    %p88 = scmp.eq.s32.totalorder %s19, 1
    %p89 = por %p87, %p88
    %p91 = scmp.ne.s32.totalorder %s76, %s90
    %p92 = scmp.eq.s32.totalorder %s19, 0
    %p93 = por %p91, %p92
    %s94 = ssub.s32 %s13, %s20
    %p95 = scmp.eq.s32.totalorder %s94, 0
    %s97 = sadd.s32 %s96, 1
    %s98 = scalar_select %p95, %s96, %s97
    %p101 = pneg %p95
    %p102 = scmp.eq.s32.totalorder %s13, 1
    %p103 = por %p101, %p102
    %p104 = scmp.ne.s32.totalorder %s96, %s99
    %p105 = scmp.eq.s32.totalorder %s13, 0
    %p106 = por %p104, %p105
    %p107 = scmp.ne.s32.totalorder %s96, %s99
    %p108 = scmp.eq.s32.totalorder %s18, 1
    %p109 = por %p107, %p108
    %p110 = scmp.ne.s32.totalorder %s99, %s100
    %p111 = scmp.eq.s32.totalorder %s18, 0
    %p112 = por %p110, %p111
    %p113 = scmp.ne.s32.totalorder %s99, %s100
    %p114 = scmp.eq.s32.totalorder %s19, 1
    %p115 = por %p113, %p114
    %p117 = scmp.ne.s32.totalorder %s100, %s116
    %p118 = scmp.eq.s32.totalorder %s19, 0
    %p119 = por %p117, %p118
    %s121 = sadd.s32 %s120, 1
    %p124 = scmp.eq.s32.totalorder %s13, 1
    %p125 = scmp.ne.s32.totalorder %s120, %s122
    %p126 = scmp.eq.s32.totalorder %s13, 0
    %p127 = por %p125, %p126
    %p128 = scmp.ne.s32.totalorder %s120, %s122
    %p129 = scmp.eq.s32.totalorder %s18, 1
    %p130 = por %p128, %p129
    %p131 = scmp.ne.s32.totalorder %s122, %s123
    %p132 = scmp.eq.s32.totalorder %s18, 0
    %p133 = por %p131, %p132
    %p134 = scmp.ne.s32.totalorder %s122, %s123
    %p135 = scmp.eq.s32.totalorder %s19, 1
    %p136 = por %p134, %p135
    %p138 = scmp.ne.s32.totalorder %s123, %s137
    %p139 = scmp.eq.s32.totalorder %s19, 0
    %p140 = por %p138, %p139
    %s141 = ssub.s32 %s13, %s20
    %p142 = scmp.eq.s32.totalorder %s141, 0
    %s144 = sadd.s32 %s143, 1
    %s145 = scalar_select %p142, %s143, %s144
    %p148 = pneg %p142
    %p149 = scmp.eq.s32.totalorder %s13, 1
    %p150 = por %p148, %p149
    %p151 = scmp.ne.s32.totalorder %s143, %s146
    %p152 = scmp.eq.s32.totalorder %s13, 0
    %p153 = por %p151, %p152
    %p154 = scmp.ne.s32.totalorder %s143, %s146
    %p155 = scmp.eq.s32.totalorder %s18, 1
    %p156 = por %p154, %p155
    %p157 = scmp.ne.s32.totalorder %s146, %s147
    %p158 = scmp.eq.s32.totalorder %s18, 0
    %p159 = por %p157, %p158
    %p160 = scmp.ne.s32.totalorder %s146, %s147
    %p161 = scmp.eq.s32.totalorder %s19, 1
    %p162 = por %p160, %p161
    %p164 = scmp.ne.s32.totalorder %s147, %s163
    %p165 = scmp.eq.s32.totalorder %s19, 0
    %p166 = por %p164, %p165
    %s168 = sadd.s32 %s167, 1
    %p171 = scmp.eq.s32.totalorder %s13, 1
    %p172 = scmp.ne.s32.totalorder %s167, %s169
    %p173 = scmp.eq.s32.totalorder %s13, 0
    %p174 = por %p172, %p173
    %p175 = scmp.ne.s32.totalorder %s167, %s169
    %p176 = scmp.eq.s32.totalorder %s18, 1
    %p177 = por %p175, %p176
    %p178 = scmp.ne.s32.totalorder %s169, %s170
    %p179 = scmp.eq.s32.totalorder %s18, 0
    %p180 = por %p178, %p179
    %p181 = scmp.ne.s32.totalorder %s169, %s170
    %p182 = scmp.eq.s32.totalorder %s19, 1
    %p183 = por %p181, %p182
    %p185 = scmp.ne.s32.totalorder %s170, %s184
    %p186 = scmp.eq.s32.totalorder %s19, 0
    %p187 = por %p185, %p186
    %s188 = ssub.s32 %s13, %s20
    %p189 = scmp.eq.s32.totalorder %s188, 0
    %s191 = sadd.s32 %s190, 1
    %s192 = scalar_select %p189, %s190, %s191
    %p195 = pneg %p189
    %p196 = scmp.eq.s32.totalorder %s13, 1
    %p197 = por %p195, %p196
    %p198 = scmp.ne.s32.totalorder %s190, %s193
    %p199 = scmp.eq.s32.totalorder %s13, 0
    %p200 = por %p198, %p199
    %p201 = scmp.ne.s32.totalorder %s190, %s193
    %p202 = scmp.eq.s32.totalorder %s18, 1
    %p203 = por %p201, %p202
    %p204 = scmp.ne.s32.totalorder %s193, %s194
    %p205 = scmp.eq.s32.totalorder %s18, 0
    %p206 = por %p204, %p205
    %p207 = scmp.ne.s32.totalorder %s193, %s194
    %p208 = scmp.eq.s32.totalorder %s19, 1
    %p209 = por %p207, %p208
    %p211 = scmp.ne.s32.totalorder %s194, %s210
    %p212 = scmp.eq.s32.totalorder %s19, 0
    %p213 = por %p211, %p212
    %p214 = scmp.le.s32.totalorder 1, %s13
    %p215 = scmp.lt.s32.totalorder %s13, 3
    %p216 = pnand %p214, %p215
    %p217 = pneg %p216
    // Predicated region
    $region9: #{jknet_forward.14} parent=5 // pred_check
      _
    $region10: #{jknet_forward.14} parent=5 // pred_check_branch
      %219 = sbr.rel (%p216) target = $region12
    $region11: #{jknet_forward.14} parent=5 // pred_region
      %s220 = ssub.s32 %s13, 1
      // Predicated region
      $region13: #{jknet_forward.14} parent=11 // pred_check
        %p221 = pneg %p86
      $region14: #{jknet_forward.14} parent=11 // pred_check_branch
        %223 = sbr.rel (%p221) target = $region16
      $region15: #{jknet_forward.14} parent=11 // pred_region
        _
      $region16: #{jknet_forward.14} parent=11 // pred_fallthru
        _
      // Predicated region
      $region17: #{jknet_forward.14} parent=11 // pred_check
        %p224 = pneg %p133
      $region18: #{jknet_forward.14} parent=11 // pred_check_branch
        %226 = sbr.rel (%p224) target = $region20
      $region19: #{jknet_forward.14} parent=11 // pred_region
        _
      $region20: #{jknet_forward.14} parent=11 // pred_fallthru
        _
      // Predicated region
      $region21: #{jknet_forward.14} parent=11 // pred_check
        %p227 = pneg %p180
      $region22: #{jknet_forward.14} parent=11 // pred_check_branch
        %229 = sbr.rel (%p227) target = $region24
      $region23: #{jknet_forward.14} parent=11 // pred_region
        _
      $region24: #{jknet_forward.14} parent=11 // pred_fallthru
        _
    $region12: #{jknet_forward.14} parent=5 // pred_fallthru
      _
    %p230 = scmp.lt.s32.totalorder %s13, 2
    // Predicated region
    $region25: #{jknet_forward.14} parent=5 // pred_check
      %p231 = pneg %p230
    $region26: #{jknet_forward.14} parent=5 // pred_check_branch
      %233 = sbr.rel (%p231) target = $region28
    $region27: #{jknet_forward.14} parent=5 // pred_region
      // Predicated region
      $region29: #{jknet_forward.14} parent=27 // pred_check
        %p234 = pneg %p33
      $region30: #{jknet_forward.14} parent=27 // pred_check_branch
        %236 = sbr.rel (%p234) target = $region32
      $region31: #{jknet_forward.14} parent=27 // pred_region
        %s237 = smul.u32 16, %s13
        %p238 = scmp.lt.s32.totalorder %s237, 31
        %s239 = scalar_select %p238, %s237, 31
        %s240 = smul.addr %s239, 8
        %s241 = scalar_lea.vmem %s0, %s240
        %s242 = smul.u32 16, %s13
      $region32: #{jknet_forward.14} parent=27 // pred_fallthru
        _
      // Predicated region
      $region33: #{jknet_forward.14} parent=27 // pred_check
        %p243 = pneg %p59
      $region34: #{jknet_forward.14} parent=27 // pred_check_branch
        %245 = sbr.rel (%p243) target = $region36
      $region35: #{jknet_forward.14} parent=27 // pred_region
        %s246 = smul.u32 16, %s13
        %p247 = scmp.lt.s32.totalorder %s246, 31
        %s248 = scalar_select %p247, %s246, 31
        %s249 = smul.addr %s248, 4
        %s250 = scalar_lea.vmem %s1, %s249
        %s251 = smul.u32 16, %s13
      $region36: #{jknet_forward.14} parent=27 // pred_fallthru
        _
      // Predicated region
      $region37: #{jknet_forward.14} parent=27 // pred_check
        %p252 = pneg %p106
      $region38: #{jknet_forward.14} parent=27 // pred_check_branch
        %254 = sbr.rel (%p252) target = $region40
      $region39: #{jknet_forward.14} parent=27 // pred_region
        %s255 = smul.u32 16, %s13
        %p256 = scmp.lt.s32.totalorder %s255, 31
        %s257 = scalar_select %p256, %s255, 31
        %s258 = smul.addr %s257, 4
        %s259 = scalar_lea.vmem %s3, %s258
        %s260 = smul.u32 16, %s13
      $region40: #{jknet_forward.14} parent=27 // pred_fallthru
        _
      // Predicated region
      $region41: #{jknet_forward.14} parent=27 // pred_check
        %p261 = pneg %p153
      $region42: #{jknet_forward.14} parent=27 // pred_check_branch
        %263 = sbr.rel (%p261) target = $region44
      $region43: #{jknet_forward.14} parent=27 // pred_region
        %s264 = smul.u32 16, %s13
        %p265 = scmp.lt.s32.totalorder %s264, 31
        %s266 = scalar_select %p265, %s264, 31
        %s267 = smul.addr %s266, 4
        %s268 = scalar_lea.vmem %s5, %s267
        %s269 = smul.u32 16, %s13
      $region44: #{jknet_forward.14} parent=27 // pred_fallthru
        _
    $region28: #{jknet_forward.14} parent=5 // pred_fallthru
      _
    %p270 = scmp.le.s32.totalorder 1, %s13
    %p271 = scmp.lt.s32.totalorder %s13, 3
    %p272 = pnand %p270, %p271
    %p273 = pneg %p272
    // Predicated region
    $region45: #{jknet_forward.14} parent=5 // pred_check
      _
    $region46: #{jknet_forward.14} parent=5 // pred_check_branch
      %275 = sbr.rel (%p272) target = $region48
    $region47: #{jknet_forward.14} parent=5 // pred_region
      %s276 = ssub.s32 %s13, 1
      %s277 = smul.u32 16, %s18
      %p278 = scmp.lt.s32.totalorder %s277, 31
      %s279 = scalar_select %p278, %s277, 31
      %s280 = smul.addr %s279, 8
      %s281 = scalar_lea.vmem %s0, %s280
      %p282 = pneg %p39
      %p283 = pneg %p36
      %s284 = smul.u32 16, %s18
      %p285 = scmp.lt.s32.totalorder %s284, 31
      %s286 = scalar_select %p285, %s284, 31
      %s287 = smul.addr %s286, 4
      %s288 = scalar_lea.vmem %s1, %s287
      %p289 = pneg %p65
      %p290 = pneg %p62
      %p291 = pneg %p86
      %p292 = pneg %p83
      %s293 = smul.u32 16, %s18
      %p294 = scmp.lt.s32.totalorder %s293, 31
      %s295 = scalar_select %p294, %s293, 31
      %s296 = smul.addr %s295, 4
      %s297 = scalar_lea.vmem %s3, %s296
      %p298 = pneg %p112
      %p299 = pneg %p109
      %p300 = pneg %p133
      %p301 = pneg %p130
      %s302 = smul.u32 16, %s18
      %p303 = scmp.lt.s32.totalorder %s302, 31
      %s304 = scalar_select %p303, %s302, 31
      %s305 = smul.addr %s304, 4
      %s306 = scalar_lea.vmem %s5, %s305
      %p307 = pneg %p159
      %p308 = pneg %p156
      %p309 = pneg %p180
      %p310 = pneg %p177
      %p311 = pneg %p206
      %p312 = pneg %p203
      %s313 = smul.u32 16, %s18
      %p314 = scmp.lt.s32.totalorder %s313, 31
      %s315 = scalar_select %p314, %s313, 31
      %s316 = smul.addr %s315, 4
      %s317 = scalar_lea.vmem %s7, %s316
      %s318 = smul.u32 16, %s18
      %p319 = scmp.lt.s32.totalorder %s318, 31
      %s320 = scalar_select %p319, %s318, 31
      %s321 = smul.addr %s320, 8
      %s322 = scalar_lea.vmem %s0, %s321
      %s323 = smul.u32 16, %s18
      %s324 = smul.u32 16, %s18
      %p325 = scmp.lt.s32.totalorder %s324, 31
      %s326 = scalar_select %p325, %s324, 31
      %s327 = smul.addr %s326, 4
      %s328 = scalar_lea.vmem %s1, %s327
      %s329 = smul.u32 16, %s18
      %s330 = smul.u32 16, %s18
      %p331 = scmp.lt.s32.totalorder %s330, 31
      %s332 = scalar_select %p331, %s330, 31
      %s333 = smul.addr %s332, 4
      %s334 = scalar_lea.vmem %s3, %s333
      %s335 = smul.u32 16, %s18
      %s336 = smul.u32 16, %s18
      %p337 = scmp.lt.s32.totalorder %s336, 31
      %s338 = scalar_select %p337, %s336, 31
      %s339 = smul.addr %s338, 4
      %s340 = scalar_lea.vmem %s5, %s339
      %s341 = smul.u32 16, %s18
      %s342 = smul.u32 16, %s18
      %p343 = scmp.lt.s32.totalorder %s342, 31
      %s344 = scalar_select %p343, %s342, 31
      %s345 = smul.addr %s344, 4
      %s346 = scalar_lea.vmem %s7, %s345
      %s347 = smul.u32 16, %s18
      %v348 = vld [vmem:[%s328] sm:$0xf]
      %v349 = vld [vmem:[%s328 + $0x4] sm:$0xf]
      %v350 = vld [vmem:[%s328 + $0x8] sm:$0xf]
      %v351 = vld [vmem:[%s328 + $0xc] sm:$0xf]
      %v352 = vld [vmem:[%s328 + $0x10] sm:$0xf]
      %v353 = vld [vmem:[%s328 + $0x14] sm:$0xf]
      %v354 = vld [vmem:[%s328 + $0x18] sm:$0xf]
      %v355 = vld [vmem:[%s328 + $0x1c] sm:$0xf]
      %v356 = vld [vmem:[%s328 + $0x20] sm:$0xf]
      %v357 = vld [vmem:[%s328 + $0x24] sm:$0xf]
      %v358 = vld [vmem:[%s328 + $0x28] sm:$0xf]
      %v359 = vld [vmem:[%s328 + $0x2c] sm:$0xf]
      %v360 = vld [vmem:[%s328 + $0x30] sm:$0xf]
      %v361 = vld [vmem:[%s328 + $0x34] sm:$0xf]
      %v362 = vld [vmem:[%s328 + $0x38] sm:$0xf]
      %v363 = vld [vmem:[%s328 + $0x3c] sm:$0xf]
      %v364 = vunpack.c.l.bf16 %v348
      %v365 = vunpack.c.l.bf16 %v349
      %v366 = vunpack.c.l.bf16 %v350
      %v367 = vunpack.c.l.bf16 %v351
      %v368 = vunpack.c.l.bf16 %v352
      %v369 = vunpack.c.l.bf16 %v353
      %v370 = vunpack.c.l.bf16 %v354
      %v371 = vunpack.c.l.bf16 %v355
      %v372 = vunpack.c.l.bf16 %v356
      %v373 = vunpack.c.l.bf16 %v357
      %v374 = vunpack.c.l.bf16 %v358
      %v375 = vunpack.c.l.bf16 %v359
      %v376 = vunpack.c.l.bf16 %v360
      %v377 = vunpack.c.l.bf16 %v361
      %v378 = vunpack.c.l.bf16 %v362
      %v379 = vunpack.c.l.bf16 %v363
      %v380 = vld [vmem:[%s2] sm:$0xff]
      %v381 = vld [vmem:[%s2 + $0x8] sm:$0xff]
      %v382 = vld [vmem:[%s334] sm:$0xf]
      %v383 = vld [vmem:[%s334 + $0x4] sm:$0xf]
      %v384 = vld [vmem:[%s334 + $0x8] sm:$0xf]
      %v385 = vld [vmem:[%s334 + $0xc] sm:$0xf]
      %v386 = vld [vmem:[%s334 + $0x10] sm:$0xf]
      %v387 = vld [vmem:[%s334 + $0x14] sm:$0xf]
      %v388 = vld [vmem:[%s334 + $0x18] sm:$0xf]
      %v389 = vld [vmem:[%s334 + $0x1c] sm:$0xf]
      %v390 = vld [vmem:[%s334 + $0x20] sm:$0xf]
      %v391 = vld [vmem:[%s334 + $0x24] sm:$0xf]
      %v392 = vld [vmem:[%s334 + $0x28] sm:$0xf]
      %v393 = vld [vmem:[%s334 + $0x2c] sm:$0xf]
      %v394 = vld [vmem:[%s334 + $0x30] sm:$0xf]
      %v395 = vld [vmem:[%s334 + $0x34] sm:$0xf]
      %v396 = vld [vmem:[%s334 + $0x38] sm:$0xf]
      %v397 = vld [vmem:[%s334 + $0x3c] sm:$0xf]
      %v398 = vunpack.c.l.bf16 %v382
      %v399 = vunpack.c.l.bf16 %v383
      %v400 = vunpack.c.l.bf16 %v384
      %v401 = vunpack.c.l.bf16 %v385
      %v402 = vunpack.c.l.bf16 %v386
      %v403 = vunpack.c.l.bf16 %v387
      %v404 = vunpack.c.l.bf16 %v388
      %v405 = vunpack.c.l.bf16 %v389
      %v406 = vunpack.c.l.bf16 %v390
      %v407 = vunpack.c.l.bf16 %v391
      %v408 = vunpack.c.l.bf16 %v392
      %v409 = vunpack.c.l.bf16 %v393
      %v410 = vunpack.c.l.bf16 %v394
      %v411 = vunpack.c.l.bf16 %v395
      %v412 = vunpack.c.l.bf16 %v396
      %v413 = vunpack.c.l.bf16 %v397
      %v414 = vld [vmem:[%s4] sm:$0xff]
      %v415 = vld [vmem:[%s4 + $0x8] sm:$0xff]
      %vm416 = vcmask 130048
      %v418 = vsel %vm416, %v398, 0
      %v421 = vsel %vm416, %v399, 0
      %v424 = vsel %vm416, %v400, 0
      %v427 = vsel %vm416, %v401, 0
      %v430 = vsel %vm416, %v402, 0
      %v433 = vsel %vm416, %v403, 0
      %v436 = vsel %vm416, %v404, 0
      %v439 = vsel %vm416, %v405, 0
      %v442 = vsel %vm416, %v406, 0
      %v445 = vsel %vm416, %v407, 0
      %v448 = vsel %vm416, %v408, 0
      %v451 = vsel %vm416, %v409, 0
      %v454 = vsel %vm416, %v410, 0
      %v457 = vsel %vm416, %v411, 0
      %v460 = vsel %vm416, %v412, 0
      %v463 = vsel %vm416, %v413, 0
      %465 = vmatprep.subr.mxu0 0.0
      %466 = vmatpush1.msra.mxu0 0.0
      %467 = vmatprep.subr.mxu0 0.0
      %468 = vmatpush1.msra.mxu0 0.0
      %469 = vmatprep.subr.mxu0 0.0
      %470 = vmatpush1.msra.mxu0 0.0
      %471 = vmatprep.subr.mxu0 0.0
      %472 = vmatpush1.msra.mxu0 0.0
      %473 = vmatprep.subr.mxu0 0.0
      %474 = vmatpush1.msra.mxu0 0.0
      %475 = vmatprep.subr.mxu0 0.0
      %476 = vmatpush1.msra.mxu0 0.0
      %477 = vmatprep.subr.mxu0 0.0
      %478 = vmatpush1.msra.mxu0 0.0
      %479 = vmatprep.subr.mxu0 0.0
      %480 = vmatpush1.msra.mxu0 0.0
      %481 = vmatprep.subr.mxu0 0.0
      %482 = vmatpush1.msra.mxu0 0.0
      %483 = vmatprep.subr.mxu0 0.0
      %484 = vmatpush1.msra.mxu0 0.0
      %485 = vmatprep.subr.mxu0 0.0
      %486 = vmatpush1.msra.mxu0 0.0
      %487 = vmatprep.subr.mxu0 0.0
      %488 = vmatpush1.msra.mxu0 0.0
      %489 = vmatprep.subr.mxu0 0.0
      %490 = vmatpush1.msra.mxu0 0.0
      %491 = vmatprep.subr.mxu0 0.0
      %492 = vmatpush1.msra.mxu0 0.0
      %493 = vmatprep.subr.mxu0 0.0
      %494 = vmatpush1.msra.mxu0 %v415
      %495 = vmatprep.subr.mxu0 0.0
      %496 = vmatpush1.msra.mxu0 %v414
      %497 = vmatprep.subr.mxu0 0.0
      %498 = vmatpush2.msra.mxu0 0.0
      %499 = vmatprep.subr.mxu0 0.0
      %500 = vmatpush2.msra.mxu0 0.0
      %501 = vmatprep.subr.mxu0 0.0
      %502 = vmatpush2.msra.mxu0 0.0
      %503 = vmatprep.subr.mxu0 0.0
      %504 = vmatpush2.msra.mxu0 0.0
      %505 = vmatprep.subr.mxu0 0.0
      %506 = vmatpush2.msra.mxu0 0.0
      %507 = vmatprep.subr.mxu0 0.0
      %508 = vmatpush2.msra.mxu0 0.0
      %509 = vmatprep.subr.mxu0 0.0
      %510 = vmatpush2.msra.mxu0 0.0
      %511 = vmatprep.subr.mxu0 0.0
      %512 = vmatpush2.msra.mxu0 0.0
      %513 = vmatprep.subr.mxu0 0.0
      %514 = vmatpush2.msra.mxu0 0.0
      %515 = vmatprep.subr.mxu0 0.0
      %516 = vmatpush2.msra.mxu0 0.0
      %517 = vmatprep.subr.mxu0 0.0
      %518 = vmatpush2.msra.mxu0 0.0
      %519 = vmatprep.subr.mxu0 0.0
      %520 = vmatpush2.msra.mxu0 0.0
      %521 = vmatprep.subr.mxu0 0.0
      %522 = vmatpush2.msra.mxu0 0.0
      %523 = vmatprep.subr.mxu0 0.0
      %524 = vmatpush2.msra.mxu0 0.0
      %525 = vmatprep.subr.mxu0 0.0
      %526 = vmatpush2.msra.mxu0 0.0
      %527 = vmatprep.subr.mxu0 0.0
      %528 = vmatpush2.msra.mxu0 0.0
      %529 = vmatprep.mubr.f32.mxu0 0.0
      %530 = vmatmul.mubr.f32.gmra.mxu0 %v418
      %v531 = vpop.f32.mrf.mxu0
      %v532 = vadd.f32 0.0, %v531
      %v533 = vpop.f32.mrf.mxu0
      %534 = vmatprep.mubr.f32.mxu0 0.0
      %535 = vmatmul.mubr.f32.gmra.mxu0 %v421
      %v536 = vpop.f32.mrf.mxu0
      %v537 = vadd.f32 0.0, %v536
      %v538 = vpop.f32.mrf.mxu0
      %539 = vmatprep.mubr.f32.mxu0 0.0
      %540 = vmatmul.mubr.f32.gmra.mxu0 %v424
      %v541 = vpop.f32.mrf.mxu0
      %v542 = vadd.f32 0.0, %v541
      %v543 = vpop.f32.mrf.mxu0
      %544 = vmatprep.mubr.f32.mxu0 0.0
      %545 = vmatmul.mubr.f32.gmra.mxu0 %v427
      %v546 = vpop.f32.mrf.mxu0
      %v547 = vadd.f32 0.0, %v546
      %v548 = vpop.f32.mrf.mxu0
      %549 = vmatprep.mubr.f32.mxu0 0.0
      %550 = vmatmul.mubr.f32.gmra.mxu0 %v430
      %v551 = vpop.f32.mrf.mxu0
      %v552 = vadd.f32 0.0, %v551
      %v553 = vpop.f32.mrf.mxu0
      %554 = vmatprep.mubr.f32.mxu0 0.0
      %555 = vmatmul.mubr.f32.gmra.mxu0 %v433
      %v556 = vpop.f32.mrf.mxu0
      %v557 = vadd.f32 0.0, %v556
      %v558 = vpop.f32.mrf.mxu0
      %559 = vmatprep.mubr.f32.mxu0 0.0
      %560 = vmatmul.mubr.f32.gmra.mxu0 %v436
      %v561 = vpop.f32.mrf.mxu0
      %v562 = vadd.f32 0.0, %v561
      %v563 = vpop.f32.mrf.mxu0
      %564 = vmatprep.mubr.f32.mxu0 0.0
      %565 = vmatmul.mubr.f32.gmra.mxu0 %v439
      %v566 = vpop.f32.mrf.mxu0
      %v567 = vadd.f32 0.0, %v566
      %v568 = vpop.f32.mrf.mxu0
      %569 = vmatprep.mubr.f32.mxu0 0.0
      %570 = vmatmul.mubr.f32.gmra.mxu0 %v442
      %v571 = vpop.f32.mrf.mxu0
      %v572 = vadd.f32 0.0, %v571
      %v573 = vpop.f32.mrf.mxu0
      %574 = vmatprep.mubr.f32.mxu0 0.0
      %575 = vmatmul.mubr.f32.gmra.mxu0 %v445
      %v576 = vpop.f32.mrf.mxu0
      %v577 = vadd.f32 0.0, %v576
      %v578 = vpop.f32.mrf.mxu0
      %579 = vmatprep.mubr.f32.mxu0 0.0
      %580 = vmatmul.mubr.f32.gmra.mxu0 %v448
      %v581 = vpop.f32.mrf.mxu0
      %v582 = vadd.f32 0.0, %v581
      %v583 = vpop.f32.mrf.mxu0
      %584 = vmatprep.mubr.f32.mxu0 0.0
      %585 = vmatmul.mubr.f32.gmra.mxu0 %v451
      %v586 = vpop.f32.mrf.mxu0
      %v587 = vadd.f32 0.0, %v586
      %v588 = vpop.f32.mrf.mxu0
      %589 = vmatprep.mubr.f32.mxu0 0.0
      %590 = vmatmul.mubr.f32.gmra.mxu0 %v454
      %v591 = vpop.f32.mrf.mxu0
      %v592 = vadd.f32 0.0, %v591
      %v593 = vpop.f32.mrf.mxu0
      %594 = vmatprep.mubr.f32.mxu0 0.0
      %595 = vmatmul.mubr.f32.gmra.mxu0 %v457
      %v596 = vpop.f32.mrf.mxu0
      %v597 = vadd.f32 0.0, %v596
      %v598 = vpop.f32.mrf.mxu0
      %599 = vmatprep.mubr.f32.mxu0 0.0
      %600 = vmatmul.mubr.f32.gmra.mxu0 %v460
      %v601 = vpop.f32.mrf.mxu0
      %v602 = vadd.f32 0.0, %v601
      %v603 = vpop.f32.mrf.mxu0
      %604 = vmatprep.mubr.f32.mxu0 0.0
      %605 = vmatmul.mubr.f32.gmra.mxu0 %v463
      %v606 = vpop.f32.mrf.mxu0
      %v607 = vadd.f32 0.0, %v606
      %v608 = vpop.f32.mrf.mxu0
      %609 = vdwg.mxu0
      %v611 = vsel %vm416, %v364, 0
      %v614 = vsel %vm416, %v365, 0
      %v617 = vsel %vm416, %v366, 0
      %v620 = vsel %vm416, %v367, 0
      %v623 = vsel %vm416, %v368, 0
      %v626 = vsel %vm416, %v369, 0
      %v629 = vsel %vm416, %v370, 0
      %v632 = vsel %vm416, %v371, 0
      %v635 = vsel %vm416, %v372, 0
      %v638 = vsel %vm416, %v373, 0
      %v641 = vsel %vm416, %v374, 0
      %v644 = vsel %vm416, %v375, 0
      %v647 = vsel %vm416, %v376, 0
      %v650 = vsel %vm416, %v377, 0
      %v653 = vsel %vm416, %v378, 0
      %v656 = vsel %vm416, %v379, 0
      %658 = vmatprep.subr.mxu0 0.0
      %659 = vmatpush1.msra.mxu0 0.0
      %660 = vmatprep.subr.mxu0 0.0
      %661 = vmatpush1.msra.mxu0 0.0
      %662 = vmatprep.subr.mxu0 0.0
      %663 = vmatpush1.msra.mxu0 0.0
      %664 = vmatprep.subr.mxu0 0.0
      %665 = vmatpush1.msra.mxu0 0.0
      %666 = vmatprep.subr.mxu0 0.0
      %667 = vmatpush1.msra.mxu0 0.0
      %668 = vmatprep.subr.mxu0 0.0
      %669 = vmatpush1.msra.mxu0 0.0
      %670 = vmatprep.subr.mxu0 0.0
      %671 = vmatpush1.msra.mxu0 0.0
      %672 = vmatprep.subr.mxu0 0.0
      %673 = vmatpush1.msra.mxu0 0.0
      %674 = vmatprep.subr.mxu0 0.0
      %675 = vmatpush1.msra.mxu0 0.0
      %676 = vmatprep.subr.mxu0 0.0
      %677 = vmatpush1.msra.mxu0 0.0
      %678 = vmatprep.subr.mxu0 0.0
      %679 = vmatpush1.msra.mxu0 0.0
      %680 = vmatprep.subr.mxu0 0.0
      %681 = vmatpush1.msra.mxu0 0.0
      %682 = vmatprep.subr.mxu0 0.0
      %683 = vmatpush1.msra.mxu0 0.0
      %684 = vmatprep.subr.mxu0 0.0
      %685 = vmatpush1.msra.mxu0 0.0
      %686 = vmatprep.subr.mxu0 0.0
      %687 = vmatpush1.msra.mxu0 %v381
      %688 = vmatprep.subr.mxu0 0.0
      %689 = vmatpush1.msra.mxu0 %v380
      %690 = vmatprep.subr.mxu0 0.0
      %691 = vmatpush2.msra.mxu0 0.0
      %692 = vmatprep.subr.mxu0 0.0
      %693 = vmatpush2.msra.mxu0 0.0
      %694 = vmatprep.subr.mxu0 0.0
      %695 = vmatpush2.msra.mxu0 0.0
      %696 = vmatprep.subr.mxu0 0.0
      %697 = vmatpush2.msra.mxu0 0.0
      %698 = vmatprep.subr.mxu0 0.0
      %699 = vmatpush2.msra.mxu0 0.0
      %700 = vmatprep.subr.mxu0 0.0
      %701 = vmatpush2.msra.mxu0 0.0
      %702 = vmatprep.subr.mxu0 0.0
      %703 = vmatpush2.msra.mxu0 0.0
      %704 = vmatprep.subr.mxu0 0.0
      %705 = vmatpush2.msra.mxu0 0.0
      %706 = vmatprep.subr.mxu0 0.0
      %707 = vmatpush2.msra.mxu0 0.0
      %708 = vmatprep.subr.mxu0 0.0
      %709 = vmatpush2.msra.mxu0 0.0
      %710 = vmatprep.subr.mxu0 0.0
      %711 = vmatpush2.msra.mxu0 0.0
      %712 = vmatprep.subr.mxu0 0.0
      %713 = vmatpush2.msra.mxu0 0.0
      %714 = vmatprep.subr.mxu0 0.0
      %715 = vmatpush2.msra.mxu0 0.0
      %716 = vmatprep.subr.mxu0 0.0
      %717 = vmatpush2.msra.mxu0 0.0
      %718 = vmatprep.subr.mxu0 0.0
      %719 = vmatpush2.msra.mxu0 0.0
      %720 = vmatprep.subr.mxu0 0.0
      %721 = vmatpush2.msra.mxu0 0.0
      %722 = vmatprep.mubr.f32.mxu0 0.0
      %723 = vmatmul.mubr.f32.gmra.mxu0 %v611
      %v724 = vpop.f32.mrf.mxu0
      %v725 = vadd.f32 %v532, %v724
      %v726 = vpop.f32.mrf.mxu0
      %727 = vmatprep.mubr.f32.mxu0 0.0
      %728 = vmatmul.mubr.f32.gmra.mxu0 %v614
      %v729 = vpop.f32.mrf.mxu0
      %v730 = vadd.f32 %v537, %v729
      %v731 = vpop.f32.mrf.mxu0
      %732 = vmatprep.mubr.f32.mxu0 0.0
      %733 = vmatmul.mubr.f32.gmra.mxu0 %v617
      %v734 = vpop.f32.mrf.mxu0
      %v735 = vadd.f32 %v542, %v734
      %v736 = vpop.f32.mrf.mxu0
      %737 = vmatprep.mubr.f32.mxu0 0.0
      %738 = vmatmul.mubr.f32.gmra.mxu0 %v620
      %v739 = vpop.f32.mrf.mxu0
      %v740 = vadd.f32 %v547, %v739
      %v741 = vpop.f32.mrf.mxu0
      %742 = vmatprep.mubr.f32.mxu0 0.0
      %743 = vmatmul.mubr.f32.gmra.mxu0 %v623
      %v744 = vpop.f32.mrf.mxu0
      %v745 = vadd.f32 %v552, %v744
      %v746 = vpop.f32.mrf.mxu0
      %747 = vmatprep.mubr.f32.mxu0 0.0
      %748 = vmatmul.mubr.f32.gmra.mxu0 %v626
      %v749 = vpop.f32.mrf.mxu0
      %v750 = vadd.f32 %v557, %v749
      %v751 = vpop.f32.mrf.mxu0
      %752 = vmatprep.mubr.f32.mxu0 0.0
      %753 = vmatmul.mubr.f32.gmra.mxu0 %v629
      %v754 = vpop.f32.mrf.mxu0
      %v755 = vadd.f32 %v562, %v754
      %v756 = vpop.f32.mrf.mxu0
      %757 = vmatprep.mubr.f32.mxu0 0.0
      %758 = vmatmul.mubr.f32.gmra.mxu0 %v632
      %v759 = vpop.f32.mrf.mxu0
      %v760 = vadd.f32 %v567, %v759
      %v761 = vpop.f32.mrf.mxu0
      %762 = vmatprep.mubr.f32.mxu0 0.0
      %763 = vmatmul.mubr.f32.gmra.mxu0 %v635
      %v764 = vpop.f32.mrf.mxu0
      %v765 = vadd.f32 %v572, %v764
      %v766 = vpop.f32.mrf.mxu0
      %767 = vmatprep.mubr.f32.mxu0 0.0
      %768 = vmatmul.mubr.f32.gmra.mxu0 %v638
      %v769 = vpop.f32.mrf.mxu0
      %v770 = vadd.f32 %v577, %v769
      %v771 = vpop.f32.mrf.mxu0
      %772 = vmatprep.mubr.f32.mxu0 0.0
      %773 = vmatmul.mubr.f32.gmra.mxu0 %v641
      %v774 = vpop.f32.mrf.mxu0
      %v775 = vadd.f32 %v582, %v774
      %v776 = vpop.f32.mrf.mxu0
      %777 = vmatprep.mubr.f32.mxu0 0.0
      %778 = vmatmul.mubr.f32.gmra.mxu0 %v644
      %v779 = vpop.f32.mrf.mxu0
      %v780 = vadd.f32 %v587, %v779
      %v781 = vpop.f32.mrf.mxu0
      %782 = vmatprep.mubr.f32.mxu0 0.0
      %783 = vmatmul.mubr.f32.gmra.mxu0 %v647
      %v784 = vpop.f32.mrf.mxu0
      %v785 = vadd.f32 %v592, %v784
      %v786 = vpop.f32.mrf.mxu0
      %787 = vmatprep.mubr.f32.mxu0 0.0
      %788 = vmatmul.mubr.f32.gmra.mxu0 %v650
      %v789 = vpop.f32.mrf.mxu0
      %v790 = vadd.f32 %v597, %v789
      %v791 = vpop.f32.mrf.mxu0
      %792 = vmatprep.mubr.f32.mxu0 0.0
      %793 = vmatmul.mubr.f32.gmra.mxu0 %v653
      %v794 = vpop.f32.mrf.mxu0
      %v795 = vadd.f32 %v602, %v794
      %v796 = vpop.f32.mrf.mxu0
      %797 = vmatprep.mubr.f32.mxu0 0.0
      %798 = vmatmul.mubr.f32.gmra.mxu0 %v656
      %v799 = vpop.f32.mrf.mxu0
      %v800 = vadd.f32 %v607, %v799
      %v801 = vpop.f32.mrf.mxu0
      %802 = vdwg.mxu0
      %v803 = vld [vmem:[%s340] sm:$0xf]
      %v804 = vld [vmem:[%s340 + $0x4] sm:$0xf]
      %v805 = vld [vmem:[%s340 + $0x8] sm:$0xf]
      %v806 = vld [vmem:[%s340 + $0xc] sm:$0xf]
      %v807 = vld [vmem:[%s340 + $0x10] sm:$0xf]
      %v808 = vld [vmem:[%s340 + $0x14] sm:$0xf]
      %v809 = vld [vmem:[%s340 + $0x18] sm:$0xf]
      %v810 = vld [vmem:[%s340 + $0x1c] sm:$0xf]
      %v811 = vld [vmem:[%s340 + $0x20] sm:$0xf]
      %v812 = vld [vmem:[%s340 + $0x24] sm:$0xf]
      %v813 = vld [vmem:[%s340 + $0x28] sm:$0xf]
      %v814 = vld [vmem:[%s340 + $0x2c] sm:$0xf]
      %v815 = vld [vmem:[%s340 + $0x30] sm:$0xf]
      %v816 = vld [vmem:[%s340 + $0x34] sm:$0xf]
      %v817 = vld [vmem:[%s340 + $0x38] sm:$0xf]
      %v818 = vld [vmem:[%s340 + $0x3c] sm:$0xf]
      %v819 = vunpack.c.l.bf16 %v803
      %v820 = vunpack.c.l.bf16 %v804
      %v821 = vunpack.c.l.bf16 %v805
      %v822 = vunpack.c.l.bf16 %v806
      %v823 = vunpack.c.l.bf16 %v807
      %v824 = vunpack.c.l.bf16 %v808
      %v825 = vunpack.c.l.bf16 %v809
      %v826 = vunpack.c.l.bf16 %v810
      %v827 = vunpack.c.l.bf16 %v811
      %v828 = vunpack.c.l.bf16 %v812
      %v829 = vunpack.c.l.bf16 %v813
      %v830 = vunpack.c.l.bf16 %v814
      %v831 = vunpack.c.l.bf16 %v815
      %v832 = vunpack.c.l.bf16 %v816
      %v833 = vunpack.c.l.bf16 %v817
      %v834 = vunpack.c.l.bf16 %v818
      %v835 = vld [vmem:[%s6] sm:$0xff]
      %v836 = vld [vmem:[%s6 + $0x8] sm:$0xff]
      %v838 = vsel %vm416, %v819, 0
      %v841 = vsel %vm416, %v820, 0
      %v844 = vsel %vm416, %v821, 0
      %v847 = vsel %vm416, %v822, 0
      %v850 = vsel %vm416, %v823, 0
      %v853 = vsel %vm416, %v824, 0
      %v856 = vsel %vm416, %v825, 0
      %v859 = vsel %vm416, %v826, 0
      %v862 = vsel %vm416, %v827, 0
      %v865 = vsel %vm416, %v828, 0
      %v868 = vsel %vm416, %v829, 0
      %v871 = vsel %vm416, %v830, 0
      %v874 = vsel %vm416, %v831, 0
      %v877 = vsel %vm416, %v832, 0
      %v880 = vsel %vm416, %v833, 0
      %v883 = vsel %vm416, %v834, 0
      %885 = vmatprep.subr.mxu0 0.0
      %886 = vmatpush1.msra.mxu0 0.0
      %887 = vmatprep.subr.mxu0 0.0
      %888 = vmatpush1.msra.mxu0 0.0
      %889 = vmatprep.subr.mxu0 0.0
      %890 = vmatpush1.msra.mxu0 0.0
      %891 = vmatprep.subr.mxu0 0.0
      %892 = vmatpush1.msra.mxu0 0.0
      %893 = vmatprep.subr.mxu0 0.0
      %894 = vmatpush1.msra.mxu0 0.0
      %895 = vmatprep.subr.mxu0 0.0
      %896 = vmatpush1.msra.mxu0 0.0
      %897 = vmatprep.subr.mxu0 0.0
      %898 = vmatpush1.msra.mxu0 0.0
      %899 = vmatprep.subr.mxu0 0.0
      %900 = vmatpush1.msra.mxu0 0.0
      %901 = vmatprep.subr.mxu0 0.0
      %902 = vmatpush1.msra.mxu0 0.0
      %903 = vmatprep.subr.mxu0 0.0
      %904 = vmatpush1.msra.mxu0 0.0
      %905 = vmatprep.subr.mxu0 0.0
      %906 = vmatpush1.msra.mxu0 0.0
      %907 = vmatprep.subr.mxu0 0.0
      %908 = vmatpush1.msra.mxu0 0.0
      %909 = vmatprep.subr.mxu0 0.0
      %910 = vmatpush1.msra.mxu0 0.0
      %911 = vmatprep.subr.mxu0 0.0
      %912 = vmatpush1.msra.mxu0 0.0
      %913 = vmatprep.subr.mxu0 0.0
      %914 = vmatpush1.msra.mxu0 %v836
      %915 = vmatprep.subr.mxu0 0.0
      %916 = vmatpush1.msra.mxu0 %v835
      %917 = vmatprep.subr.mxu0 0.0
      %918 = vmatpush2.msra.mxu0 0.0
      %919 = vmatprep.subr.mxu0 0.0
      %920 = vmatpush2.msra.mxu0 0.0
      %921 = vmatprep.subr.mxu0 0.0
      %922 = vmatpush2.msra.mxu0 0.0
      %923 = vmatprep.subr.mxu0 0.0
      %924 = vmatpush2.msra.mxu0 0.0
      %925 = vmatprep.subr.mxu0 0.0
      %926 = vmatpush2.msra.mxu0 0.0
      %927 = vmatprep.subr.mxu0 0.0
      %928 = vmatpush2.msra.mxu0 0.0
      %929 = vmatprep.subr.mxu0 0.0
      %930 = vmatpush2.msra.mxu0 0.0
      %931 = vmatprep.subr.mxu0 0.0
      %932 = vmatpush2.msra.mxu0 0.0
      %933 = vmatprep.subr.mxu0 0.0
      %934 = vmatpush2.msra.mxu0 0.0
      %935 = vmatprep.subr.mxu0 0.0
      %936 = vmatpush2.msra.mxu0 0.0
      %937 = vmatprep.subr.mxu0 0.0
      %938 = vmatpush2.msra.mxu0 0.0
      %939 = vmatprep.subr.mxu0 0.0
      %940 = vmatpush2.msra.mxu0 0.0
      %941 = vmatprep.subr.mxu0 0.0
      %942 = vmatpush2.msra.mxu0 0.0
      %943 = vmatprep.subr.mxu0 0.0
      %944 = vmatpush2.msra.mxu0 0.0
      %945 = vmatprep.subr.mxu0 0.0
      %946 = vmatpush2.msra.mxu0 0.0
      %947 = vmatprep.subr.mxu0 0.0
      %948 = vmatpush2.msra.mxu0 0.0
      %949 = vmatprep.mubr.f32.mxu0 0.0
      %950 = vmatmul.mubr.f32.gmra.mxu0 %v838
      %v951 = vpop.f32.mrf.mxu0
      %v952 = vadd.f32 0.0, %v951
      %v953 = vpop.f32.mrf.mxu0
      %954 = vmatprep.mubr.f32.mxu0 0.0
      %955 = vmatmul.mubr.f32.gmra.mxu0 %v841
      %v956 = vpop.f32.mrf.mxu0
      %v957 = vadd.f32 0.0, %v956
      %v958 = vpop.f32.mrf.mxu0
      %959 = vmatprep.mubr.f32.mxu0 0.0
      %960 = vmatmul.mubr.f32.gmra.mxu0 %v844
      %v961 = vpop.f32.mrf.mxu0
      %v962 = vadd.f32 0.0, %v961
      %v963 = vpop.f32.mrf.mxu0
      %964 = vmatprep.mubr.f32.mxu0 0.0
      %965 = vmatmul.mubr.f32.gmra.mxu0 %v847
      %v966 = vpop.f32.mrf.mxu0
      %v967 = vadd.f32 0.0, %v966
      %v968 = vpop.f32.mrf.mxu0
      %969 = vmatprep.mubr.f32.mxu0 0.0
      %970 = vmatmul.mubr.f32.gmra.mxu0 %v850
      %v971 = vpop.f32.mrf.mxu0
      %v972 = vadd.f32 0.0, %v971
      %v973 = vpop.f32.mrf.mxu0
      %974 = vmatprep.mubr.f32.mxu0 0.0
      %975 = vmatmul.mubr.f32.gmra.mxu0 %v853
      %v976 = vpop.f32.mrf.mxu0
      %v977 = vadd.f32 0.0, %v976
      %v978 = vpop.f32.mrf.mxu0
      %979 = vmatprep.mubr.f32.mxu0 0.0
      %980 = vmatmul.mubr.f32.gmra.mxu0 %v856
      %v981 = vpop.f32.mrf.mxu0
      %v982 = vadd.f32 0.0, %v981
      %v983 = vpop.f32.mrf.mxu0
      %984 = vmatprep.mubr.f32.mxu0 0.0
      %985 = vmatmul.mubr.f32.gmra.mxu0 %v859
      %v986 = vpop.f32.mrf.mxu0
      %v987 = vadd.f32 0.0, %v986
      %v988 = vpop.f32.mrf.mxu0
      %989 = vmatprep.mubr.f32.mxu0 0.0
      %990 = vmatmul.mubr.f32.gmra.mxu0 %v862
      %v991 = vpop.f32.mrf.mxu0
      %v992 = vadd.f32 0.0, %v991
      %v993 = vpop.f32.mrf.mxu0
      %994 = vmatprep.mubr.f32.mxu0 0.0
      %995 = vmatmul.mubr.f32.gmra.mxu0 %v865
      %v996 = vpop.f32.mrf.mxu0
      %v997 = vadd.f32 0.0, %v996
      %v998 = vpop.f32.mrf.mxu0
      %999 = vmatprep.mubr.f32.mxu0 0.0
      %1000 = vmatmul.mubr.f32.gmra.mxu0 %v868
      %v1001 = vpop.f32.mrf.mxu0
      %v1002 = vadd.f32 0.0, %v1001
      %v1003 = vpop.f32.mrf.mxu0
      %1004 = vmatprep.mubr.f32.mxu0 0.0
      %1005 = vmatmul.mubr.f32.gmra.mxu0 %v871
      %v1006 = vpop.f32.mrf.mxu0
      %v1007 = vadd.f32 0.0, %v1006
      %v1008 = vpop.f32.mrf.mxu0
      %1009 = vmatprep.mubr.f32.mxu0 0.0
      %1010 = vmatmul.mubr.f32.gmra.mxu0 %v874
      %v1011 = vpop.f32.mrf.mxu0
      %v1012 = vadd.f32 0.0, %v1011
      %v1013 = vpop.f32.mrf.mxu0
      %1014 = vmatprep.mubr.f32.mxu0 0.0
      %1015 = vmatmul.mubr.f32.gmra.mxu0 %v877
      %v1016 = vpop.f32.mrf.mxu0
      %v1017 = vadd.f32 0.0, %v1016
      %v1018 = vpop.f32.mrf.mxu0
      %1019 = vmatprep.mubr.f32.mxu0 0.0
      %1020 = vmatmul.mubr.f32.gmra.mxu0 %v880
      %v1021 = vpop.f32.mrf.mxu0
      %v1022 = vadd.f32 0.0, %v1021
      %v1023 = vpop.f32.mrf.mxu0
      %1024 = vmatprep.mubr.f32.mxu0 0.0
      %1025 = vmatmul.mubr.f32.gmra.mxu0 %v883
      %v1026 = vpop.f32.mrf.mxu0
      %v1027 = vadd.f32 0.0, %v1026
      %v1028 = vpop.f32.mrf.mxu0
      %1029 = vdwg.mxu0
      %v1030 = vadd.f32 %v725, %v952
      %v1031 = vadd.f32 %v730, %v957
      %v1032 = vadd.f32 %v735, %v962
      %v1033 = vadd.f32 %v740, %v967
      %v1034 = vadd.f32 %v745, %v972
      %v1035 = vadd.f32 %v750, %v977
      %v1036 = vadd.f32 %v755, %v982
      %v1037 = vadd.f32 %v760, %v987
      %v1038 = vadd.f32 %v765, %v992
      %v1039 = vadd.f32 %v770, %v997
      %v1040 = vadd.f32 %v775, %v1002
      %v1041 = vadd.f32 %v780, %v1007
      %v1042 = vadd.f32 %v785, %v1012
      %v1043 = vadd.f32 %v790, %v1017
      %v1044 = vadd.f32 %v795, %v1022
      %v1045 = vadd.f32 %v800, %v1027
      %v1046 = vld [vmem:[%s322] sm:$0xff]
      %v1047 = vld [vmem:[%s322 + $0x8] sm:$0xff]
      %v1048 = vld [vmem:[%s322 + $0x10] sm:$0xff]
      %v1049 = vld [vmem:[%s322 + $0x18] sm:$0xff]
      %v1050 = vld [vmem:[%s322 + $0x20] sm:$0xff]
      %v1051 = vld [vmem:[%s322 + $0x28] sm:$0xff]
      %v1052 = vld [vmem:[%s322 + $0x30] sm:$0xff]
      %v1053 = vld [vmem:[%s322 + $0x38] sm:$0xff]
      %v1054 = vld [vmem:[%s322 + $0x40] sm:$0xff]
      %v1055 = vld [vmem:[%s322 + $0x48] sm:$0xff]
      %v1056 = vld [vmem:[%s322 + $0x50] sm:$0xff]
      %v1057 = vld [vmem:[%s322 + $0x58] sm:$0xff]
      %v1058 = vld [vmem:[%s322 + $0x60] sm:$0xff]
      %v1059 = vld [vmem:[%s322 + $0x68] sm:$0xff]
      %v1060 = vld [vmem:[%s322 + $0x70] sm:$0xff]
      %v1061 = vld [vmem:[%s322 + $0x78] sm:$0xff]
      %1063 = vset.pattern.permute.xlu0 0
      %1064 = vperm.xlu0 %1063, %v1046
      %v1065 = vpop.permute.xlu0 %1064
      %1068 = vset.pattern.permute.xlu0 0
      %1069 = vperm.xlu0 %1068, %v1047
      %v1070 = vpop.permute.xlu0 %1069
      %1073 = vset.pattern.permute.xlu0 0
      %1074 = vperm.xlu0 %1073, %v1048
      %v1075 = vpop.permute.xlu0 %1074
      %1078 = vset.pattern.permute.xlu0 0
      %1079 = vperm.xlu0 %1078, %v1049
      %v1080 = vpop.permute.xlu0 %1079
      %1083 = vset.pattern.permute.xlu0 0
      %1084 = vperm.xlu0 %1083, %v1050
      %v1085 = vpop.permute.xlu0 %1084
      %1088 = vset.pattern.permute.xlu0 0
      %1089 = vperm.xlu0 %1088, %v1051
      %v1090 = vpop.permute.xlu0 %1089
      %1093 = vset.pattern.permute.xlu0 0
      %1094 = vperm.xlu0 %1093, %v1052
      %v1095 = vpop.permute.xlu0 %1094
      %1098 = vset.pattern.permute.xlu0 0
      %1099 = vperm.xlu0 %1098, %v1053
      %v1100 = vpop.permute.xlu0 %1099
      %1103 = vset.pattern.permute.xlu0 0
      %1104 = vperm.xlu0 %1103, %v1054
      %v1105 = vpop.permute.xlu0 %1104
      %1108 = vset.pattern.permute.xlu0 0
      %1109 = vperm.xlu0 %1108, %v1055
      %v1110 = vpop.permute.xlu0 %1109
      %1113 = vset.pattern.permute.xlu0 0
      %1114 = vperm.xlu0 %1113, %v1056
      %v1115 = vpop.permute.xlu0 %1114
      %1118 = vset.pattern.permute.xlu0 0
      %1119 = vperm.xlu0 %1118, %v1057
      %v1120 = vpop.permute.xlu0 %1119
      %1123 = vset.pattern.permute.xlu0 0
      %1124 = vperm.xlu0 %1123, %v1058
      %v1125 = vpop.permute.xlu0 %1124
      %1128 = vset.pattern.permute.xlu0 0
      %1129 = vperm.xlu0 %1128, %v1059
      %v1130 = vpop.permute.xlu0 %1129
      %1133 = vset.pattern.permute.xlu0 0
      %1134 = vperm.xlu0 %1133, %v1060
      %v1135 = vpop.permute.xlu0 %1134
      %1138 = vset.pattern.permute.xlu0 0
      %1139 = vperm.xlu0 %1138, %v1061
      %v1140 = vpop.permute.xlu0 %1139
      %v1142 = vmul.f32 %v1065, %v1030
      %v1143 = vmul.f32 %v1070, %v1031
      %v1144 = vmul.f32 %v1075, %v1032
      %v1145 = vmul.f32 %v1080, %v1033
      %v1146 = vmul.f32 %v1085, %v1034
      %v1147 = vmul.f32 %v1090, %v1035
      %v1148 = vmul.f32 %v1095, %v1036
      %v1149 = vmul.f32 %v1100, %v1037
      %v1150 = vmul.f32 %v1105, %v1038
      %v1151 = vmul.f32 %v1110, %v1039
      %v1152 = vmul.f32 %v1115, %v1040
      %v1153 = vmul.f32 %v1120, %v1041
      %v1154 = vmul.f32 %v1125, %v1042
      %v1155 = vmul.f32 %v1130, %v1043
      %v1156 = vmul.f32 %v1135, %v1044
      %v1157 = vmul.f32 %v1140, %v1045
      %v1158 = vpack.c.bf16 %v1143, %v1142
      %v1159 = vpack.c.bf16 %v1145, %v1144
      %v1160 = vpack.c.bf16 %v1147, %v1146
      %v1161 = vpack.c.bf16 %v1149, %v1148
      %v1162 = vpack.c.bf16 %v1151, %v1150
      %v1163 = vpack.c.bf16 %v1153, %v1152
      %v1164 = vpack.c.bf16 %v1155, %v1154
      %v1165 = vpack.c.bf16 %v1157, %v1156
      %v1174 = vunpack.c.l.b16 %v1158
      %v1175 = vunpack.c.h.b16 %v1158
      %v1176 = vunpack.c.l.b16 %v1159
      %v1177 = vunpack.c.h.b16 %v1159
      %v1178 = vunpack.c.l.b16 %v1160
      %v1179 = vunpack.c.h.b16 %v1160
      %v1180 = vunpack.c.l.b16 %v1161
      %v1181 = vunpack.c.h.b16 %v1161
      %v1182 = vunpack.c.l.b16 %v1162
      %v1183 = vunpack.c.h.b16 %v1162
      %v1184 = vunpack.c.l.b16 %v1163
      %v1185 = vunpack.c.h.b16 %v1163
      %v1186 = vunpack.c.l.b16 %v1164
      %v1187 = vunpack.c.h.b16 %v1164
      %v1188 = vunpack.c.l.b16 %v1165
      %v1189 = vunpack.c.h.b16 %v1165
      %v1190 = vpack.c.b16 %v1174, %v1174
      %v1191 = vpack.c.b16 %v1175, %v1175
      %v1192 = vpack.c.b16 %v1176, %v1176
      %v1193 = vpack.c.b16 %v1177, %v1177
      %v1194 = vpack.c.b16 %v1178, %v1178
      %v1195 = vpack.c.b16 %v1179, %v1179
      %v1196 = vpack.c.b16 %v1180, %v1180
      %v1197 = vpack.c.b16 %v1181, %v1181
      %v1198 = vpack.c.b16 %v1182, %v1182
      %v1199 = vpack.c.b16 %v1183, %v1183
      %v1200 = vpack.c.b16 %v1184, %v1184
      %v1201 = vpack.c.b16 %v1185, %v1185
      %v1202 = vpack.c.b16 %v1186, %v1186
      %v1203 = vpack.c.b16 %v1187, %v1187
      %v1204 = vpack.c.b16 %v1188, %v1188
      %v1205 = vpack.c.b16 %v1189, %v1189
      %1222 = vst [vmem:[%s346] sm:$0xf] %v1190
      %1223 = vst [vmem:[%s346 + $0x4] sm:$0xf] %v1191
      %1224 = vst [vmem:[%s346 + $0x8] sm:$0xf] %v1192
      %1225 = vst [vmem:[%s346 + $0xc] sm:$0xf] %v1193
      %1226 = vst [vmem:[%s346 + $0x10] sm:$0xf] %v1194
      %1227 = vst [vmem:[%s346 + $0x14] sm:$0xf] %v1195
      %1228 = vst [vmem:[%s346 + $0x18] sm:$0xf] %v1196
      %1229 = vst [vmem:[%s346 + $0x1c] sm:$0xf] %v1197
      %1230 = vst [vmem:[%s346 + $0x20] sm:$0xf] %v1198
      %1231 = vst [vmem:[%s346 + $0x24] sm:$0xf] %v1199
      %1232 = vst [vmem:[%s346 + $0x28] sm:$0xf] %v1200
      %1233 = vst [vmem:[%s346 + $0x2c] sm:$0xf] %v1201
      %1234 = vst [vmem:[%s346 + $0x30] sm:$0xf] %v1202
      %1235 = vst [vmem:[%s346 + $0x34] sm:$0xf] %v1203
      %1236 = vst [vmem:[%s346 + $0x38] sm:$0xf] %v1204
      %1237 = vst [vmem:[%s346 + $0x3c] sm:$0xf] %v1205
      %s1238 = smul.u32 16, %s18
      %p1239 = scmp.lt.s32.totalorder %s1238, 31
      %s1240 = scalar_select %p1239, %s1238, 31
      %s1241 = smul.addr %s1240, 4
      %s1242 = scalar_lea.vmem %s7, %s1241
      // Predicated region
      $region49: #{jknet_forward.14} parent=47 // pred_check
        %p1243 = pneg %p203
      $region50: #{jknet_forward.14} parent=47 // pred_check_branch
        %1245 = sbr.rel (%p1243) target = $region52
      $region51: #{jknet_forward.14} parent=47 // pred_region
        %s1246 = smul.u32 16, %s18
      $region52: #{jknet_forward.14} parent=47 // pred_fallthru
        _
    $region48: #{jknet_forward.14} parent=5 // pred_fallthru
      _
    %p1247 = scmp.le.s32.totalorder 2, %s13
    // Predicated region
    $region53: #{jknet_forward.14} parent=5 // pred_check
      %p1248 = pneg %p1247
    $region54: #{jknet_forward.14} parent=5 // pred_check_branch
      %1250 = sbr.rel (%p1248) target = $region56
    $region55: #{jknet_forward.14} parent=5 // pred_region
      %s1251 = ssub.s32 %s13, 2
      // Predicated region
      $region57: #{jknet_forward.14} parent=55 // pred_check
        %p1252 = pneg %p209
      $region58: #{jknet_forward.14} parent=55 // pred_check_branch
        %1254 = sbr.rel (%p1252) target = $region60
      $region59: #{jknet_forward.14} parent=55 // pred_region
        %s1255 = smul.u32 16, %s19
        %p1256 = scmp.lt.s32.totalorder %s1255, 31
        %s1257 = scalar_select %p1256, %s1255, 31
        %s1258 = smul.addr %s1257, 4
        %s1259 = scalar_lea.vmem %s7, %s1258
      $region60: #{jknet_forward.14} parent=55 // pred_fallthru
        _
    $region56: #{jknet_forward.14} parent=5 // pred_fallthru
      _
  $region6: #{jknet_forward.14} parent=0 // loop_footer
    %s17 = sadd.s32 1, %s13
  $region7: #{jknet_forward.14} parent=0 // loop_footer_branch
    %12 = sbr.rel target = $region3
  $region8: #{jknet_forward.14} parent=0 // loop_exit
    _

// kernel: jknet_forward.9
$region0: #{jknet_forward.9}
  #allocation0 [shape = 'u32[]', space=smem, size = 0x4, offset = 0x4, fixed_abs, tag = 'smem constant byte address 0x4 - core index']
  #allocation1 [shape = 'u32[144,128]{1,0:T(1,128)}', space=vmem, size = 0x12000, scoped, tag = 'internal scratch']
  #allocation2 [shape = 'f32[128,16]{1,0:T(8,128)}', space=vmem, size = 0x10000, scoped, tag = 'scratch operand']
  %s0 = inlined_call_operand.vmem [shape: bf16[256,16], index: 0, kind: input, shape index: {}, may-alias: {0,2}]
  %s1 = inlined_call_operand.vmem [shape: s8[256,256], index: 1, kind: input, shape index: {}]
  %s2 = inlined_call_operand.vmem [shape: bf16[256,16], index: 2, kind: input, shape index: {}, may-alias: {0,2}]
  %s3 = inlined_call_operand.vmem [shape: f32[256,1], index: 3, kind: input, shape index: {}]
  %s4 = inlined_call_operand.vmem [shape: f32[1,16], index: 4, kind: input, shape index: {}]
  %s5 = inlined_call_operand.vmem [shape: bf16[256,16], index: 5, kind: output, shape index: {}]
  %s6 = sld [smem:[#allocation0]]
  $region99: #{jknet_forward.9} parent=0
    _
  %s8 = ssub.s32 1, %s6
  %s9 = scalar_select 0, %s8, %s6
  $region1: #{jknet_forward.9} parent=0
    #allocation3 [shape = 'u8[32768]{0}', space=vmem, size = 0x8000, scoped, tag = 'input window, operand 1']
    loop: start=0, step=1, limit=6
    $region2: #{jknet_forward.9} parent=1 // loop_pre_header
      _
    $region3: #{jknet_forward.9} parent=1 // loop_header
      %s11 = sphi 0, %s15
      %p12 = scmp.ge.s32.totalorder %s11, 6
      %s18 = sphi 0, %s30
      %s19 = sphi 0, %s26
      %s20 = sphi 0, %s18
      %s21 = sphi 0, %s19
      %s22 = sphi 0, %s20
      %s23 = sphi 0, %s21
      %s31 = sphi 0, %s31
      %s33 = sphi 0, %s31
      %s34 = sphi 0, %s33
      %s48 = sphi 0, %s34
      %s56 = sphi 0, %s58
      %s59 = sphi 0, %s56
      %s60 = sphi 0, %s59
      %s76 = sphi 0, %s60
      %s82 = sphi 0, %s84
      %s85 = sphi 0, %s82
      %s86 = sphi 0, %s85
      %s102 = sphi 0, %s86
      %s108 = sphi 0, %s110
      %s111 = sphi 0, %s108
      %s112 = sphi 0, %s111
      %s128 = sphi 0, %s112
      %s132 = sphi 0, %s132
      %s134 = sphi 0, %s132
      %s135 = sphi 0, %s134
      %s149 = sphi 0, %s135
      %s155 = sphi 0, %s157
      %s158 = sphi 0, %s155
      %s159 = sphi 0, %s158
      %s175 = sphi 0, %s159
    $region4: #{jknet_forward.9} parent=1 // loop_header_branch
      %14 = sbr.rel (%p12) target = $region8
    $region5: #{jknet_forward.9} parent=1 // loop_body
      %s16 = ssub.s32 %s11, 1
      %s17 = ssub.s32 %s11, 2
      %s24 = sadd.s32 1, %s19
      %p25 = scmp.ge.s32.totalorder %s24, 2
      %s26 = scalar_select %p25, 0, %s24
      %s27 = sadd.s32 1, %s18
      %s28 = scalar_select %p25, %s27, %s18
      %p29 = scmp.ge.s32.totalorder %s28, 2
      %s30 = scalar_select %p29, 0, %s28
      %s32 = sadd.s32 %s31, 1
      %p35 = scmp.eq.s32.totalorder %s11, 3
      %p36 = scmp.ne.s32.totalorder %s31, %s33
      %p37 = scmp.eq.s32.totalorder %s11, 0
      %p38 = por %p36, %p37
      %p39 = scmp.ne.s32.totalorder %s31, %s33
      %p40 = scmp.eq.s32.totalorder %s16, 3
      %p41 = por %p39, %p40
      %p42 = scmp.ne.s32.totalorder %s33, %s34
      %p43 = scmp.eq.s32.totalorder %s16, 0
      %p44 = por %p42, %p43
      %p45 = scmp.ne.s32.totalorder %s33, %s34
      %p46 = scmp.eq.s32.totalorder %s17, 3
      %p47 = por %p45, %p46
      %p49 = scmp.ne.s32.totalorder %s34, %s48
      %p50 = scmp.eq.s32.totalorder %s17, 0
      %p51 = por %p49, %p50
      %s52 = ssub.s32 %s18, %s30
      %s53 = ssub.s32 %s19, %s26
      %s54 = sor.u32 %s52, %s53
      %p55 = scmp.eq.s32.totalorder %s54, 0
      %s57 = sadd.s32 %s56, 1
      %s58 = scalar_select %p55, %s56, %s57
      %p61 = pneg %p55
      %p62 = scmp.eq.s32.totalorder %s11, 3
      %p63 = por %p61, %p62
      %p64 = scmp.ne.s32.totalorder %s56, %s59
      %p65 = scmp.eq.s32.totalorder %s11, 0
      %p66 = por %p64, %p65
      %p67 = scmp.ne.s32.totalorder %s56, %s59
      %p68 = scmp.eq.s32.totalorder %s16, 3
      %p69 = por %p67, %p68
      %p70 = scmp.ne.s32.totalorder %s59, %s60
      %p71 = scmp.eq.s32.totalorder %s16, 0
      %p72 = por %p70, %p71
      %p73 = scmp.ne.s32.totalorder %s59, %s60
      %p74 = scmp.eq.s32.totalorder %s17, 3
      %p75 = por %p73, %p74
      %p77 = scmp.ne.s32.totalorder %s60, %s76
      %p78 = scmp.eq.s32.totalorder %s17, 0
      %p79 = por %p77, %p78
      %s80 = ssub.s32 %s18, %s30
      %p81 = scmp.eq.s32.totalorder %s80, 0
      %s83 = sadd.s32 %s82, 1
      %s84 = scalar_select %p81, %s82, %s83
      %p87 = pneg %p81
      %p88 = scmp.eq.s32.totalorder %s11, 3
      %p89 = por %p87, %p88
      %p90 = scmp.ne.s32.totalorder %s82, %s85
      %p91 = scmp.eq.s32.totalorder %s11, 0
      %p92 = por %p90, %p91
      %p93 = scmp.ne.s32.totalorder %s82, %s85
      %p94 = scmp.eq.s32.totalorder %s16, 3
      %p95 = por %p93, %p94
      %p96 = scmp.ne.s32.totalorder %s85, %s86
      %p97 = scmp.eq.s32.totalorder %s16, 0
      %p98 = por %p96, %p97
      %p99 = scmp.ne.s32.totalorder %s85, %s86
      %p100 = scmp.eq.s32.totalorder %s17, 3
      %p101 = por %p99, %p100
      %p103 = scmp.ne.s32.totalorder %s86, %s102
      %p104 = scmp.eq.s32.totalorder %s17, 0
      %p105 = por %p103, %p104
      %s106 = ssub.s32 %s18, %s30
      %p107 = scmp.eq.s32.totalorder %s106, 0
      %s109 = sadd.s32 %s108, 1
      %s110 = scalar_select %p107, %s108, %s109
      %p113 = pneg %p107
      %p114 = scmp.eq.s32.totalorder %s11, 3
      %p115 = por %p113, %p114
      %p116 = scmp.ne.s32.totalorder %s108, %s111
      %p117 = scmp.eq.s32.totalorder %s11, 0
      %p118 = por %p116, %p117
      %p119 = scmp.ne.s32.totalorder %s108, %s111
      %p120 = scmp.eq.s32.totalorder %s16, 3
      %p121 = por %p119, %p120
      %p122 = scmp.ne.s32.totalorder %s111, %s112
      %p123 = scmp.eq.s32.totalorder %s16, 0
      %p124 = por %p122, %p123
      %p125 = scmp.ne.s32.totalorder %s111, %s112
      %p126 = scmp.eq.s32.totalorder %s17, 3
      %p127 = por %p125, %p126
      %p129 = scmp.ne.s32.totalorder %s112, %s128
      %p130 = scmp.eq.s32.totalorder %s17, 0
      %p131 = por %p129, %p130
      %s133 = sadd.s32 %s132, 1
      %p136 = scmp.eq.s32.totalorder %s11, 3
      %p137 = scmp.ne.s32.totalorder %s132, %s134
      %p138 = scmp.eq.s32.totalorder %s11, 0
      %p139 = por %p137, %p138
      %p140 = scmp.ne.s32.totalorder %s132, %s134
      %p141 = scmp.eq.s32.totalorder %s16, 3
      %p142 = por %p140, %p141
      %p143 = scmp.ne.s32.totalorder %s134, %s135
      %p144 = scmp.eq.s32.totalorder %s16, 0
      %p145 = por %p143, %p144
      %p146 = scmp.ne.s32.totalorder %s134, %s135
      %p147 = scmp.eq.s32.totalorder %s17, 3
      %p148 = por %p146, %p147
      %p150 = scmp.ne.s32.totalorder %s135, %s149
      %p151 = scmp.eq.s32.totalorder %s17, 0
      %p152 = por %p150, %p151
      %s153 = ssub.s32 %s18, %s30
      %p154 = scmp.eq.s32.totalorder %s153, 0
      %s156 = sadd.s32 %s155, 1
      %s157 = scalar_select %p154, %s155, %s156
      %p160 = pneg %p154
      %p161 = scmp.eq.s32.totalorder %s11, 3
      %p162 = por %p160, %p161
      %p163 = scmp.ne.s32.totalorder %s155, %s158
      %p164 = scmp.eq.s32.totalorder %s11, 0
      %p165 = por %p163, %p164
      %p166 = scmp.ne.s32.totalorder %s155, %s158
      %p167 = scmp.eq.s32.totalorder %s16, 3
      %p168 = por %p166, %p167
      %p169 = scmp.ne.s32.totalorder %s158, %s159
      %p170 = scmp.eq.s32.totalorder %s16, 0
      %p171 = por %p169, %p170
      %p172 = scmp.ne.s32.totalorder %s158, %s159
      %p173 = scmp.eq.s32.totalorder %s17, 3
      %p174 = por %p172, %p173
      %p176 = scmp.ne.s32.totalorder %s159, %s175
      %p177 = scmp.eq.s32.totalorder %s17, 0
      %p178 = por %p176, %p177
      %p179 = scmp.le.s32.totalorder 1, %s11
      %p180 = scmp.lt.s32.totalorder %s11, 5
      %p181 = pnand %p179, %p180
      %p182 = pneg %p181
      // Predicated region
      $region9: #{jknet_forward.9} parent=5 // pred_check
        _
      $region10: #{jknet_forward.9} parent=5 // pred_check_branch
        %184 = sbr.rel (%p181) target = $region12
      $region11: #{jknet_forward.9} parent=5 // pred_region
        %s185 = ssub.s32 %s11, 1
        // Predicated region
        $region13: #{jknet_forward.9} parent=11 // pred_check
          %p186 = pneg %p44
        $region14: #{jknet_forward.9} parent=11 // pred_check_branch
          %188 = sbr.rel (%p186) target = $region16
        $region15: #{jknet_forward.9} parent=11 // pred_region
          _
        $region16: #{jknet_forward.9} parent=11 // pred_fallthru
          _
        // Predicated region
        $region17: #{jknet_forward.9} parent=11 // pred_check
          %p189 = pneg %p145
        $region18: #{jknet_forward.9} parent=11 // pred_check_branch
          %191 = sbr.rel (%p189) target = $region20
        $region19: #{jknet_forward.9} parent=11 // pred_region
          _
        $region20: #{jknet_forward.9} parent=11 // pred_fallthru
          _
      $region12: #{jknet_forward.9} parent=5 // pred_fallthru
        _
      %p192 = scmp.lt.s32.totalorder %s11, 4
      // Predicated region
      $region21: #{jknet_forward.9} parent=5 // pred_check
        %p193 = pneg %p192
      $region22: #{jknet_forward.9} parent=5 // pred_check_branch
        %195 = sbr.rel (%p193) target = $region24
      $region23: #{jknet_forward.9} parent=5 // pred_region
        // Predicated region
        $region25: #{jknet_forward.9} parent=23 // pred_check
          %p196 = pneg %p66
        $region26: #{jknet_forward.9} parent=23 // pred_check_branch
          %198 = sbr.rel (%p196) target = $region28
        $region27: #{jknet_forward.9} parent=23 // pred_region
          %s199 = sand.u32 %s56, 1
          %s200 = sand.u32 %s56, 1
          %s201 = smul.addr %s200, 32
          %s202 = scalar_lea.vmem [#allocation3], %s201
          %s203 = smul.u32 4, %s18
          %s204 = smul.addr %s203, 2
          %s205 = sadd.s32 %s19, %s204
          %s206 = smul.addr %s205, 8
          %s207 = scalar_lea.vmem %s1, %s206
          // Predicated region
          $region29: #{jknet_forward.9} parent=27 // pred_check
            _
          $region30: #{jknet_forward.9} parent=27 // pred_check_branch
            %209 = sbr.rel (0) target = $region32
          $region31: #{jknet_forward.9} parent=27 // pred_region
            // Predicated region
            $region33: #{jknet_forward.9} parent=31 // pred_check
              _
            $region34: #{jknet_forward.9} parent=31 // pred_check_branch
              %211 = sbr.rel (0) target = $region36
            $region35: #{jknet_forward.9} parent=31 // pred_region
              // Predicated region
              $region48: #{jknet_forward.9} parent=35 // pred_check
                _
              $region49: #{jknet_forward.9} parent=35 // pred_check_branch
                %233 = sbr.rel (0) target = $region51
              $region50: #{jknet_forward.9} parent=35 // pred_region
                loop: start=0, step=1, limit=1
                $region52: #{jknet_forward.9} parent=50 // loop_pre_header
                  _
                $region53: #{jknet_forward.9} parent=50 // loop_header
                  %s235 = sphi 0, %s239
                  %p236 = scmp.ge.s32.totalorder %s235, 1
                  %s240 = sphi %s207, %s207
                  %s241 = sphi %s202, %s202
                $region54: #{jknet_forward.9} parent=50 // loop_header_branch
                  %238 = sbr.rel (%p236) target = $region58
                $region55: #{jknet_forward.9} parent=50 // loop_body
                  %v242 = vld [vmem:[%s240] sm:$0xff]
                  %243 = vst [vmem:[%s241] sm:$0xff] %v242
                  %v244 = vld [vmem:[%s240 + $0x10] sm:$0xff]
                  %245 = vst [vmem:[%s241 + $0x8] sm:$0xff] %v244
                  %v246 = vld [vmem:[%s240 + $0x20] sm:$0xff]
                  %247 = vst [vmem:[%s241 + $0x10] sm:$0xff] %v246
                  %v248 = vld [vmem:[%s240 + $0x30] sm:$0xff]
                  %249 = vst [vmem:[%s241 + $0x18] sm:$0xff] %v248
                $region56: #{jknet_forward.9} parent=50 // loop_footer
                  %s239 = sadd.s32 1, %s235
                $region57: #{jknet_forward.9} parent=50 // loop_footer_branch
                  %234 = sbr.rel target = $region53
                $region58: #{jknet_forward.9} parent=50 // loop_exit
                  _
              $region51: #{jknet_forward.9} parent=35 // pred_fallthru
                _
              // Predicated region
              $region59: #{jknet_forward.9} parent=35 // pred_check
                _
              $region60: #{jknet_forward.9} parent=35 // pred_check_branch
                %251 = sbr.rel target = $region62
              $region61: #{jknet_forward.9} parent=35 // pred_region
                _
              $region62: #{jknet_forward.9} parent=35 // pred_fallthru
                _
            $region36: #{jknet_forward.9} parent=31 // pred_fallthru
              _
            // Predicated region
            $region37: #{jknet_forward.9} parent=31 // pred_check
              _
            $region38: #{jknet_forward.9} parent=31 // pred_check_branch
              %213 = sbr.rel target = $region40
            $region39: #{jknet_forward.9} parent=31 // pred_region
              %s215 = ssub.s32 256, 1
              loop: start=0, step=1, limit=1
              $region41: #{jknet_forward.9} parent=39 // loop_pre_header
                _
              $region42: #{jknet_forward.9} parent=39 // loop_header
                %s217 = sphi 0, %s221
                %p218 = scmp.ge.s32.totalorder %s217, 1
                %s222 = sphi %s207, %s207
                %s223 = sphi %s202, %s202
              $region43: #{jknet_forward.9} parent=39 // loop_header_branch
                %220 = sbr.rel (%p218) target = $region47
              $region44: #{jknet_forward.9} parent=39 // loop_body
                %v224 = vld [vmem:[%s222] sm:%s215]
                %225 = vst [vmem:[%s223] sm:%s215] %v224
                %v226 = vld [vmem:[%s222 + $0x10] sm:%s215]
                %227 = vst [vmem:[%s223 + $0x8] sm:%s215] %v226
                %v228 = vld [vmem:[%s222 + $0x20] sm:%s215]
                %229 = vst [vmem:[%s223 + $0x10] sm:%s215] %v228
                %v230 = vld [vmem:[%s222 + $0x30] sm:%s215]
                %231 = vst [vmem:[%s223 + $0x18] sm:%s215] %v230
              $region45: #{jknet_forward.9} parent=39 // loop_footer
                %s221 = sadd.s32 1, %s217
              $region46: #{jknet_forward.9} parent=39 // loop_footer_branch
                %216 = sbr.rel target = $region42
              $region47: #{jknet_forward.9} parent=39 // loop_exit
                _
            $region40: #{jknet_forward.9} parent=31 // pred_fallthru
              _
          $region32: #{jknet_forward.9} parent=27 // pred_fallthru
            _
          %252 = vnop
        $region28: #{jknet_forward.9} parent=23 // pred_fallthru
          _
        // Predicated region
        $region63: #{jknet_forward.9} parent=23 // pred_check
          %p253 = pneg %p92
        $region64: #{jknet_forward.9} parent=23 // pred_check_branch
          %255 = sbr.rel (%p253) target = $region66
        $region65: #{jknet_forward.9} parent=23 // pred_region
          %s256 = smul.u32 16, %s18
          %p257 = scmp.lt.s32.totalorder %s256, 31
          %s258 = scalar_select %p257, %s256, 31
          %s259 = smul.addr %s258, 4
          %s260 = scalar_lea.vmem %s2, %s259
          %s261 = smul.u32 16, %s18
        $region66: #{jknet_forward.9} parent=23 // pred_fallthru
          _
        // Predicated region
        $region67: #{jknet_forward.9} parent=23 // pred_check
          %p262 = pneg %p118
        $region68: #{jknet_forward.9} parent=23 // pred_check_branch
          %264 = sbr.rel (%p262) target = $region70
        $region69: #{jknet_forward.9} parent=23 // pred_region
          %s265 = smul.u32 16, %s18
          %p266 = scmp.lt.s32.totalorder %s265, 31
          %s267 = scalar_select %p266, %s265, 31
          %s268 = smul.addr %s267, 8
          %s269 = scalar_lea.vmem %s3, %s268
          %s270 = smul.u32 16, %s18
        $region70: #{jknet_forward.9} parent=23 // pred_fallthru
          _
      $region24: #{jknet_forward.9} parent=5 // pred_fallthru
        _
      %p271 = scmp.le.s32.totalorder 1, %s11
      %p272 = scmp.lt.s32.totalorder %s11, 5
      %p273 = pnand %p271, %p272
      %p274 = pneg %p273
      // Predicated region
      $region71: #{jknet_forward.9} parent=5 // pred_check
        _
      $region72: #{jknet_forward.9} parent=5 // pred_check_branch
        %276 = sbr.rel (%p273) target = $region74
      $region73: #{jknet_forward.9} parent=5 // pred_region
        %s277 = ssub.s32 %s11, 1
        %s278 = sand.u32 %s59, 1
        %s279 = sand.u32 %s59, 1
        %s280 = smul.addr %s279, 32
        %s281 = scalar_lea.vmem [#allocation3], %s280
        // Predicated region
        $region75: #{jknet_forward.9} parent=73 // pred_check
          %p282 = pneg %p72
        $region76: #{jknet_forward.9} parent=73 // pred_check_branch
          %284 = sbr.rel (%p282) target = $region78
        $region77: #{jknet_forward.9} parent=73 // pred_region
          _
        $region78: #{jknet_forward.9} parent=73 // pred_fallthru
          _
        %p285 = pneg %p44
        %p286 = pneg %p41
        %s287 = sand.u32 %s59, 1
        %s288 = sand.u32 %s59, 1
        %s289 = smul.addr %s288, 32
        %s290 = scalar_lea.vmem [#allocation3], %s289
        %p291 = pneg %p72
        %p292 = pneg %p69
        %s293 = smul.u32 16, %s20
        %p294 = scmp.lt.s32.totalorder %s293, 31
        %s295 = scalar_select %p294, %s293, 31
        %s296 = smul.addr %s295, 4
        %s297 = scalar_lea.vmem %s2, %s296
        %p298 = pneg %p98
        %p299 = pneg %p95
        %s300 = smul.u32 16, %s20
        %p301 = scmp.lt.s32.totalorder %s300, 31
        %s302 = scalar_select %p301, %s300, 31
        %s303 = smul.addr %s302, 8
        %s304 = scalar_lea.vmem %s3, %s303
        %p305 = pneg %p124
        %p306 = pneg %p121
        %p307 = pneg %p145
        %p308 = pneg %p142
        %p309 = pneg %p171
        %p310 = pneg %p168
        %s311 = smul.u32 16, %s20
        %p312 = scmp.lt.s32.totalorder %s311, 31
        %s313 = scalar_select %p312, %s311, 31
        %s314 = smul.addr %s313, 4
        %s315 = scalar_lea.vmem %s5, %s314
        %s316 = smul.u32 4, %s20
        %s317 = smul.u32 16, %s20
        %p318 = scmp.lt.s32.totalorder %s317, 31
        %s319 = scalar_select %p318, %s317, 31
        %s320 = smul.addr %s319, 4
        %s321 = scalar_lea.vmem %s2, %s320
        %s322 = smul.u32 16, %s20
        %s323 = smul.u32 16, %s20
        %p324 = scmp.lt.s32.totalorder %s323, 31
        %s325 = scalar_select %p324, %s323, 31
        %s326 = smul.addr %s325, 8
        %s327 = scalar_lea.vmem %s3, %s326
        %s328 = smul.u32 16, %s20
        %s329 = smul.u32 16, %s20
        %p330 = scmp.lt.s32.totalorder %s329, 31
        %s331 = scalar_select %p330, %s329, 31
        %s332 = smul.addr %s331, 4
        %s333 = scalar_lea.vmem %s5, %s332
        %s334 = smul.u32 16, %s20
        %p336 = scmp.eq.s32.totalorder %s21, 0
        // Predicated region
        $region79: #{jknet_forward.9} parent=73 // pred_check
          %p337 = pneg %p336
        $region80: #{jknet_forward.9} parent=73 // pred_check_branch
          %339 = sbr.rel (%p337) target = $region82
        $region81: #{jknet_forward.9} parent=73 // pred_region
          %v340 = vld [vmem:[%s321] sm:$0xf]
          %v341 = vld [vmem:[%s321 + $0x4] sm:$0xf]
          %v342 = vld [vmem:[%s321 + $0x8] sm:$0xf]
          %v343 = vld [vmem:[%s321 + $0xc] sm:$0xf]
          %v344 = vld [vmem:[%s321 + $0x10] sm:$0xf]
          %v345 = vld [vmem:[%s321 + $0x14] sm:$0xf]
          %v346 = vld [vmem:[%s321 + $0x18] sm:$0xf]
          %v347 = vld [vmem:[%s321 + $0x1c] sm:$0xf]
          %v348 = vld [vmem:[%s321 + $0x20] sm:$0xf]
          %v349 = vld [vmem:[%s321 + $0x24] sm:$0xf]
          %v350 = vld [vmem:[%s321 + $0x28] sm:$0xf]
          %v351 = vld [vmem:[%s321 + $0x2c] sm:$0xf]
          %v352 = vld [vmem:[%s321 + $0x30] sm:$0xf]
          %v353 = vld [vmem:[%s321 + $0x34] sm:$0xf]
          %v354 = vld [vmem:[%s321 + $0x38] sm:$0xf]
          %v355 = vld [vmem:[%s321 + $0x3c] sm:$0xf]
          %v356 = vunpack.c.l.bf16 %v340
          %v357 = vunpack.c.l.bf16 %v341
          %v358 = vunpack.c.l.bf16 %v342
          %v359 = vunpack.c.l.bf16 %v343
          %v360 = vunpack.c.l.bf16 %v344
          %v361 = vunpack.c.l.bf16 %v345
          %v362 = vunpack.c.l.bf16 %v346
          %v363 = vunpack.c.l.bf16 %v347
          %v364 = vunpack.c.l.bf16 %v348
          %v365 = vunpack.c.l.bf16 %v349
          %v366 = vunpack.c.l.bf16 %v350
          %v367 = vunpack.c.l.bf16 %v351
          %v368 = vunpack.c.l.bf16 %v352
          %v369 = vunpack.c.l.bf16 %v353
          %v370 = vunpack.c.l.bf16 %v354
          %v371 = vunpack.c.l.bf16 %v355
          %vm372 = vcmask 130048
          %373 = vst.msk [vmem:[#allocation2] sm:$0xff] %vm372, %v356
          %374 = vst.msk [vmem:[#allocation2 + $0x8] sm:$0xff] %vm372, %v357
          %375 = vst.msk [vmem:[#allocation2 + $0x10] sm:$0xff] %vm372, %v358
          %376 = vst.msk [vmem:[#allocation2 + $0x18] sm:$0xff] %vm372, %v359
          %377 = vst.msk [vmem:[#allocation2 + $0x20] sm:$0xff] %vm372, %v360
          %378 = vst.msk [vmem:[#allocation2 + $0x28] sm:$0xff] %vm372, %v361
          %379 = vst.msk [vmem:[#allocation2 + $0x30] sm:$0xff] %vm372, %v362
          %380 = vst.msk [vmem:[#allocation2 + $0x38] sm:$0xff] %vm372, %v363
          %381 = vst.msk [vmem:[#allocation2 + $0x40] sm:$0xff] %vm372, %v364
          %382 = vst.msk [vmem:[#allocation2 + $0x48] sm:$0xff] %vm372, %v365
          %383 = vst.msk [vmem:[#allocation2 + $0x50] sm:$0xff] %vm372, %v366
          %384 = vst.msk [vmem:[#allocation2 + $0x58] sm:$0xff] %vm372, %v367
          %385 = vst.msk [vmem:[#allocation2 + $0x60] sm:$0xff] %vm372, %v368
          %386 = vst.msk [vmem:[#allocation2 + $0x68] sm:$0xff] %vm372, %v369
          %387 = vst.msk [vmem:[#allocation2 + $0x70] sm:$0xff] %vm372, %v370
          %388 = vst.msk [vmem:[#allocation2 + $0x78] sm:$0xff] %vm372, %v371
        $region82: #{jknet_forward.9} parent=73 // pred_fallthru
          _
        %s389 = smul.u32 %s21, 128
        %s390 = sshra.s32 %s389, 3
        %s391 = sand.u32 %s389, 7
        %s392 = smul.addr %s390, 4
        %s393 = scalar_lea.vmem %s0, %s392
        %v394 = vld [vmem:[%s393] sm:$0xf]
        %v395 = vld [vmem:[%s393 + $0x4] sm:$0xf]
        %v396 = vld [vmem:[%s393 + $0x8] sm:$0xf]
        %v397 = vld [vmem:[%s393 + $0xc] sm:$0xf]
        %v398 = vld [vmem:[%s393 + $0x10] sm:$0xf]
        %v399 = vld [vmem:[%s393 + $0x14] sm:$0xf]
        %v400 = vld [vmem:[%s393 + $0x18] sm:$0xf]
        %v401 = vld [vmem:[%s393 + $0x1c] sm:$0xf]
        %v402 = vld [vmem:[%s393 + $0x20] sm:$0xf]
        %v403 = vld [vmem:[%s393 + $0x24] sm:$0xf]
        %v404 = vld [vmem:[%s393 + $0x28] sm:$0xf]
        %v405 = vld [vmem:[%s393 + $0x2c] sm:$0xf]
        %v406 = vld [vmem:[%s393 + $0x30] sm:$0xf]
        %v407 = vld [vmem:[%s393 + $0x34] sm:$0xf]
        %v408 = vld [vmem:[%s393 + $0x38] sm:$0xf]
        %v409 = vld [vmem:[%s393 + $0x3c] sm:$0xf]
        %v410 = vld [vmem:[#allocation2] sm:$0xff]
        %v411 = vld [vmem:[#allocation2 + $0x8] sm:$0xff]
        %v412 = vld [vmem:[#allocation2 + $0x10] sm:$0xff]
        %v413 = vld [vmem:[#allocation2 + $0x18] sm:$0xff]
        %v414 = vld [vmem:[#allocation2 + $0x20] sm:$0xff]
        %v415 = vld [vmem:[#allocation2 + $0x28] sm:$0xff]
        %v416 = vld [vmem:[#allocation2 + $0x30] sm:$0xff]
        %v417 = vld [vmem:[#allocation2 + $0x38] sm:$0xff]
        %v418 = vld [vmem:[#allocation2 + $0x40] sm:$0xff]
        %v419 = vld [vmem:[#allocation2 + $0x48] sm:$0xff]
        %v420 = vld [vmem:[#allocation2 + $0x50] sm:$0xff]
        %v421 = vld [vmem:[#allocation2 + $0x58] sm:$0xff]
        %v422 = vld [vmem:[#allocation2 + $0x60] sm:$0xff]
        %v423 = vld [vmem:[#allocation2 + $0x68] sm:$0xff]
        %v424 = vld [vmem:[#allocation2 + $0x70] sm:$0xff]
        %v425 = vld [vmem:[#allocation2 + $0x78] sm:$0xff]
        %v426 = vld [vmem:[%s281] sm:$0xff]
        %v427 = vld [vmem:[%s281 + $0x8] sm:$0xff]
        %v428 = vld [vmem:[%s281 + $0x10] sm:$0xff]
        %v429 = vld [vmem:[%s281 + $0x18] sm:$0xff]
        %v430 = vunpack.c.l.s8.bf16 %v426
        %v431 = vunpack.c.h.s8.bf16 %v426
        %v432 = vunpack.c.l.s8.bf16 %v427
        %v433 = vunpack.c.h.s8.bf16 %v427
        %v434 = vunpack.c.l.s8.bf16 %v428
        %v435 = vunpack.c.h.s8.bf16 %v428
        %v436 = vunpack.c.l.s8.bf16 %v429
        %v437 = vunpack.c.h.s8.bf16 %v429
        %v454 = vunpack.c.l.b16 %v394
        %v455 = vunpack.c.l.b16 %v395
        %v456 = vunpack.c.l.b16 %v396
        %v457 = vunpack.c.l.b16 %v397
        %v458 = vunpack.c.l.b16 %v398
        %v459 = vunpack.c.l.b16 %v399
        %v460 = vunpack.c.l.b16 %v400
        %v461 = vunpack.c.l.b16 %v401
        %v462 = vunpack.c.l.b16 %v402
        %v463 = vunpack.c.l.b16 %v403
        %v464 = vunpack.c.l.b16 %v404
        %v465 = vunpack.c.l.b16 %v405
        %v466 = vunpack.c.l.b16 %v406
        %v467 = vunpack.c.l.b16 %v407
        %v468 = vunpack.c.l.b16 %v408
        %v469 = vunpack.c.l.b16 %v409
        %v470 = vpack.c.b16 %v455, %v454
        %v471 = vpack.c.b16 %v457, %v456
        %v472 = vpack.c.b16 %v459, %v458
        %v473 = vpack.c.b16 %v461, %v460
        %v474 = vpack.c.b16 %v463, %v462
        %v475 = vpack.c.b16 %v465, %v464
        %v476 = vpack.c.b16 %v467, %v466
        %v477 = vpack.c.b16 %v469, %v468
        %486 = vmatprep.subr.bf16.mxu0 0
        %487 = vmatpush1.bf16.msra.mxu0 %v477
        %488 = vmatprep.subr.bf16.mxu0 0
        %489 = vmatpush1.bf16.msra.mxu0 %v476
        %490 = vmatprep.subr.bf16.mxu0 0
        %491 = vmatpush1.bf16.msra.mxu0 %v475
        %492 = vmatprep.subr.bf16.mxu0 0
        %493 = vmatpush1.bf16.msra.mxu0 %v474
        %494 = vmatprep.subr.bf16.mxu0 0
        %495 = vmatpush1.bf16.msra.mxu0 %v473
        %496 = vmatprep.subr.bf16.mxu0 0
        %497 = vmatpush1.bf16.msra.mxu0 %v472
        %498 = vmatprep.subr.bf16.mxu0 0
        %499 = vmatpush1.bf16.msra.mxu0 %v471
        %500 = vmatprep.subr.bf16.mxu0 0
        %501 = vmatpush1.bf16.msra.mxu0 %v470
        %502 = vmatprep.subr.bf16.mxu0 0
        %503 = vmatpush2.bf16.msra.mxu0 0
        %504 = vmatprep.subr.bf16.mxu0 0
        %505 = vmatpush2.bf16.msra.mxu0 0
        %506 = vmatprep.subr.bf16.mxu0 0
        %507 = vmatpush2.bf16.msra.mxu0 0
        %508 = vmatprep.subr.bf16.mxu0 0
        %509 = vmatpush2.bf16.msra.mxu0 0
        %510 = vmatprep.subr.bf16.mxu0 0
        %511 = vmatpush2.bf16.msra.mxu0 0
        %512 = vmatprep.subr.bf16.mxu0 0
        %513 = vmatpush2.bf16.msra.mxu0 0
        %514 = vmatprep.subr.bf16.mxu0 0
        %515 = vmatpush2.bf16.msra.mxu0 0
        %516 = vmatprep.subr.bf16.mxu0 0
        %517 = vmatpush2.bf16.msra.mxu0 0
        %518 = vmatprep.mubr.bf16.mxu0 0
        %519 = vmatmul.mubr.bf16.gmra.mxu0 %v430
        %v520 = vpop.f32.mrf.mxu0
        %v521 = vadd.f32 0.0, %v520
        %v522 = vpop.f32.mrf.mxu0
        %v523 = vpop.f32.mrf.mxu0
        %v524 = vadd.f32 0.0, %v523
        %v525 = vpop.f32.mrf.mxu0
        %526 = vmatprep.mubr.bf16.mxu0 0
        %527 = vmatmul.mubr.bf16.gmra.mxu0 %v431
        %v528 = vpop.f32.mrf.mxu0
        %v529 = vadd.f32 0.0, %v528
        %v530 = vpop.f32.mrf.mxu0
        %v531 = vpop.f32.mrf.mxu0
        %v532 = vadd.f32 0.0, %v531
        %v533 = vpop.f32.mrf.mxu0
        %534 = vmatprep.mubr.bf16.mxu0 0
        %535 = vmatmul.mubr.bf16.gmra.mxu0 %v432
        %v536 = vpop.f32.mrf.mxu0
        %v537 = vadd.f32 0.0, %v536
        %v538 = vpop.f32.mrf.mxu0
        %v539 = vpop.f32.mrf.mxu0
        %v540 = vadd.f32 0.0, %v539
        %v541 = vpop.f32.mrf.mxu0
        %542 = vmatprep.mubr.bf16.mxu0 0
        %543 = vmatmul.mubr.bf16.gmra.mxu0 %v433
        %v544 = vpop.f32.mrf.mxu0
        %v545 = vadd.f32 0.0, %v544
        %v546 = vpop.f32.mrf.mxu0
        %v547 = vpop.f32.mrf.mxu0
        %v548 = vadd.f32 0.0, %v547
        %v549 = vpop.f32.mrf.mxu0
        %550 = vmatprep.mubr.bf16.mxu0 0
        %551 = vmatmul.mubr.bf16.gmra.mxu0 %v434
        %v552 = vpop.f32.mrf.mxu0
        %v553 = vadd.f32 0.0, %v552
        %v554 = vpop.f32.mrf.mxu0
        %v555 = vpop.f32.mrf.mxu0
        %v556 = vadd.f32 0.0, %v555
        %v557 = vpop.f32.mrf.mxu0
        %558 = vmatprep.mubr.bf16.mxu0 0
        %559 = vmatmul.mubr.bf16.gmra.mxu0 %v435
        %v560 = vpop.f32.mrf.mxu0
        %v561 = vadd.f32 0.0, %v560
        %v562 = vpop.f32.mrf.mxu0
        %v563 = vpop.f32.mrf.mxu0
        %v564 = vadd.f32 0.0, %v563
        %v565 = vpop.f32.mrf.mxu0
        %566 = vmatprep.mubr.bf16.mxu0 0
        %567 = vmatmul.mubr.bf16.gmra.mxu0 %v436
        %v568 = vpop.f32.mrf.mxu0
        %v569 = vadd.f32 0.0, %v568
        %v570 = vpop.f32.mrf.mxu0
        %v571 = vpop.f32.mrf.mxu0
        %v572 = vadd.f32 0.0, %v571
        %v573 = vpop.f32.mrf.mxu0
        %574 = vmatprep.mubr.bf16.mxu0 0
        %575 = vmatmul.mubr.bf16.gmra.mxu0 %v437
        %v576 = vpop.f32.mrf.mxu0
        %v577 = vadd.f32 0.0, %v576
        %v578 = vpop.f32.mrf.mxu0
        %v579 = vpop.f32.mrf.mxu0
        %v580 = vadd.f32 0.0, %v579
        %v581 = vpop.f32.mrf.mxu0
        %582 = vdwg.mxu0
        %v583 = vadd.f32 %v410, %v521
        %v584 = vadd.f32 %v411, %v524
        %v585 = vadd.f32 %v412, %v529
        %v586 = vadd.f32 %v413, %v532
        %v587 = vadd.f32 %v414, %v537
        %v588 = vadd.f32 %v415, %v540
        %v589 = vadd.f32 %v416, %v545
        %v590 = vadd.f32 %v417, %v548
        %v591 = vadd.f32 %v418, %v553
        %v592 = vadd.f32 %v419, %v556
        %v593 = vadd.f32 %v420, %v561
        %v594 = vadd.f32 %v421, %v564
        %v595 = vadd.f32 %v422, %v569
        %v596 = vadd.f32 %v423, %v572
        %v597 = vadd.f32 %v424, %v577
        %v598 = vadd.f32 %v425, %v580
        %vm599 = vcmask 130048
        %600 = vst.msk [vmem:[#allocation2] sm:$0xff] %vm599, %v583
        %601 = vst.msk [vmem:[#allocation2 + $0x8] sm:$0xff] %vm599, %v584
        %602 = vst.msk [vmem:[#allocation2 + $0x10] sm:$0xff] %vm599, %v585
        %603 = vst.msk [vmem:[#allocation2 + $0x18] sm:$0xff] %vm599, %v586
        %604 = vst.msk [vmem:[#allocation2 + $0x20] sm:$0xff] %vm599, %v587
        %605 = vst.msk [vmem:[#allocation2 + $0x28] sm:$0xff] %vm599, %v588
        %606 = vst.msk [vmem:[#allocation2 + $0x30] sm:$0xff] %vm599, %v589
        %607 = vst.msk [vmem:[#allocation2 + $0x38] sm:$0xff] %vm599, %v590
        %608 = vst.msk [vmem:[#allocation2 + $0x40] sm:$0xff] %vm599, %v591
        %609 = vst.msk [vmem:[#allocation2 + $0x48] sm:$0xff] %vm599, %v592
        %610 = vst.msk [vmem:[#allocation2 + $0x50] sm:$0xff] %vm599, %v593
        %611 = vst.msk [vmem:[#allocation2 + $0x58] sm:$0xff] %vm599, %v594
        %612 = vst.msk [vmem:[#allocation2 + $0x60] sm:$0xff] %vm599, %v595
        %613 = vst.msk [vmem:[#allocation2 + $0x68] sm:$0xff] %vm599, %v596
        %614 = vst.msk [vmem:[#allocation2 + $0x70] sm:$0xff] %vm599, %v597
        %615 = vst.msk [vmem:[#allocation2 + $0x78] sm:$0xff] %vm599, %v598
        %p616 = scmp.eq.s32.totalorder %s21, 1
        // Predicated region
        $region83: #{jknet_forward.9} parent=73 // pred_check
          %p617 = pneg %p616
        $region84: #{jknet_forward.9} parent=73 // pred_check_branch
          %619 = sbr.rel (%p617) target = $region86
        $region85: #{jknet_forward.9} parent=73 // pred_region
          %v620 = vld [vmem:[%s327] sm:$0xff]
          %v621 = vld [vmem:[%s327 + $0x8] sm:$0xff]
          %v622 = vld [vmem:[%s327 + $0x10] sm:$0xff]
          %v623 = vld [vmem:[%s327 + $0x18] sm:$0xff]
          %v624 = vld [vmem:[%s327 + $0x20] sm:$0xff]
          %v625 = vld [vmem:[%s327 + $0x28] sm:$0xff]
          %v626 = vld [vmem:[%s327 + $0x30] sm:$0xff]
          %v627 = vld [vmem:[%s327 + $0x38] sm:$0xff]
          %v628 = vld [vmem:[%s327 + $0x40] sm:$0xff]
          %v629 = vld [vmem:[%s327 + $0x48] sm:$0xff]
          %v630 = vld [vmem:[%s327 + $0x50] sm:$0xff]
          %v631 = vld [vmem:[%s327 + $0x58] sm:$0xff]
          %v632 = vld [vmem:[%s327 + $0x60] sm:$0xff]
          %v633 = vld [vmem:[%s327 + $0x68] sm:$0xff]
          %v634 = vld [vmem:[%s327 + $0x70] sm:$0xff]
          %v635 = vld [vmem:[%s327 + $0x78] sm:$0xff]
          %v636 = vld [vmem:[#allocation2] sm:$0xff]
          %v637 = vld [vmem:[#allocation2 + $0x8] sm:$0xff]
          %v638 = vld [vmem:[#allocation2 + $0x10] sm:$0xff]
          %v639 = vld [vmem:[#allocation2 + $0x18] sm:$0xff]
          %v640 = vld [vmem:[#allocation2 + $0x20] sm:$0xff]
          %v641 = vld [vmem:[#allocation2 + $0x28] sm:$0xff]
          %v642 = vld [vmem:[#allocation2 + $0x30] sm:$0xff]
          %v643 = vld [vmem:[#allocation2 + $0x38] sm:$0xff]
          %v644 = vld [vmem:[#allocation2 + $0x40] sm:$0xff]
          %v645 = vld [vmem:[#allocation2 + $0x48] sm:$0xff]
          %v646 = vld [vmem:[#allocation2 + $0x50] sm:$0xff]
          %v647 = vld [vmem:[#allocation2 + $0x58] sm:$0xff]
          %v648 = vld [vmem:[#allocation2 + $0x60] sm:$0xff]
          %v649 = vld [vmem:[#allocation2 + $0x68] sm:$0xff]
          %v650 = vld [vmem:[#allocation2 + $0x70] sm:$0xff]
          %v651 = vld [vmem:[#allocation2 + $0x78] sm:$0xff]
          %653 = vset.pattern.permute.xlu0 0
          %654 = vperm.xlu0 %653, %v620
          %v655 = vpop.permute.xlu0 %654
          %658 = vset.pattern.permute.xlu0 0
          %659 = vperm.xlu0 %658, %v621
          %v660 = vpop.permute.xlu0 %659
          %663 = vset.pattern.permute.xlu0 0
          %664 = vperm.xlu0 %663, %v622
          %v665 = vpop.permute.xlu0 %664
          %668 = vset.pattern.permute.xlu0 0
          %669 = vperm.xlu0 %668, %v623
          %v670 = vpop.permute.xlu0 %669
          %673 = vset.pattern.permute.xlu0 0
          %674 = vperm.xlu0 %673, %v624
          %v675 = vpop.permute.xlu0 %674
          %678 = vset.pattern.permute.xlu0 0
          %679 = vperm.xlu0 %678, %v625
          %v680 = vpop.permute.xlu0 %679
          %683 = vset.pattern.permute.xlu0 0
          %684 = vperm.xlu0 %683, %v626
          %v685 = vpop.permute.xlu0 %684
          %688 = vset.pattern.permute.xlu0 0
          %689 = vperm.xlu0 %688, %v627
          %v690 = vpop.permute.xlu0 %689
          %693 = vset.pattern.permute.xlu0 0
          %694 = vperm.xlu0 %693, %v628
          %v695 = vpop.permute.xlu0 %694
          %698 = vset.pattern.permute.xlu0 0
          %699 = vperm.xlu0 %698, %v629
          %v700 = vpop.permute.xlu0 %699
          %703 = vset.pattern.permute.xlu0 0
          %704 = vperm.xlu0 %703, %v630
          %v705 = vpop.permute.xlu0 %704
          %708 = vset.pattern.permute.xlu0 0
          %709 = vperm.xlu0 %708, %v631
          %v710 = vpop.permute.xlu0 %709
          %713 = vset.pattern.permute.xlu0 0
          %714 = vperm.xlu0 %713, %v632
          %v715 = vpop.permute.xlu0 %714
          %718 = vset.pattern.permute.xlu0 0
          %719 = vperm.xlu0 %718, %v633
          %v720 = vpop.permute.xlu0 %719
          %723 = vset.pattern.permute.xlu0 0
          %724 = vperm.xlu0 %723, %v634
          %v725 = vpop.permute.xlu0 %724
          %728 = vset.pattern.permute.xlu0 0
          %729 = vperm.xlu0 %728, %v635
          %v730 = vpop.permute.xlu0 %729
          %v732 = vmul.f32 %v655, %v636
          %v733 = vmul.f32 %v660, %v637
          %v734 = vmul.f32 %v665, %v638
          %v735 = vmul.f32 %v670, %v639
          %v736 = vmul.f32 %v675, %v640
          %v737 = vmul.f32 %v680, %v641
          %v738 = vmul.f32 %v685, %v642
          %v739 = vmul.f32 %v690, %v643
          %v740 = vmul.f32 %v695, %v644
          %v741 = vmul.f32 %v700, %v645
          %v742 = vmul.f32 %v705, %v646
          %v743 = vmul.f32 %v710, %v647
          %v744 = vmul.f32 %v715, %v648
          %v745 = vmul.f32 %v720, %v649
          %v746 = vmul.f32 %v725, %v650
          %v747 = vmul.f32 %v730, %v651
          %v748 = vld [vmem:[%s4] sm:$0x1]
          %v750 = vlaneseq
          %v751 = vshrl.u32 %v750, 7
          %v752 = vsub.s32 0, %v751
          %v753 = vrot.slane %v748, %v752
          %v755 = vadd.f32 %v732, %v753
          %v756 = vadd.f32 %v733, %v753
          %v757 = vadd.f32 %v734, %v753
          %v758 = vadd.f32 %v735, %v753
          %v759 = vadd.f32 %v736, %v753
          %v760 = vadd.f32 %v737, %v753
          %v761 = vadd.f32 %v738, %v753
          %v762 = vadd.f32 %v739, %v753
          %v763 = vadd.f32 %v740, %v753
          %v764 = vadd.f32 %v741, %v753
          %v765 = vadd.f32 %v742, %v753
          %v766 = vadd.f32 %v743, %v753
          %v767 = vadd.f32 %v744, %v753
          %v768 = vadd.f32 %v745, %v753
          %v769 = vadd.f32 %v746, %v753
          %v770 = vadd.f32 %v747, %v753
          %v771 = vmax.f32 %v755, 0.0
          %v772 = vmax.f32 %v756, 0.0
          %v773 = vmax.f32 %v757, 0.0
          %v774 = vmax.f32 %v758, 0.0
          %v775 = vmax.f32 %v759, 0.0
          %v776 = vmax.f32 %v760, 0.0
          %v777 = vmax.f32 %v761, 0.0
          %v778 = vmax.f32 %v762, 0.0
          %v779 = vmax.f32 %v763, 0.0
          %v780 = vmax.f32 %v764, 0.0
          %v781 = vmax.f32 %v765, 0.0
          %v782 = vmax.f32 %v766, 0.0
          %v783 = vmax.f32 %v767, 0.0
          %v784 = vmax.f32 %v768, 0.0
          %v785 = vmax.f32 %v769, 0.0
          %v786 = vmax.f32 %v770, 0.0
          %v787 = vpack.c.bf16 %v772, %v771
          %v788 = vpack.c.bf16 %v774, %v773
          %v789 = vpack.c.bf16 %v776, %v775
          %v790 = vpack.c.bf16 %v778, %v777
          %v791 = vpack.c.bf16 %v780, %v779
          %v792 = vpack.c.bf16 %v782, %v781
          %v793 = vpack.c.bf16 %v784, %v783
          %v794 = vpack.c.bf16 %v786, %v785
          %v803 = vunpack.c.l.b16 %v787
          %v804 = vunpack.c.h.b16 %v787
          %v805 = vunpack.c.l.b16 %v788
          %v806 = vunpack.c.h.b16 %v788
          %v807 = vunpack.c.l.b16 %v789
          %v808 = vunpack.c.h.b16 %v789
          %v809 = vunpack.c.l.b16 %v790
          %v810 = vunpack.c.h.b16 %v790
          %v811 = vunpack.c.l.b16 %v791
          %v812 = vunpack.c.h.b16 %v791
          %v813 = vunpack.c.l.b16 %v792
          %v814 = vunpack.c.h.b16 %v792
          %v815 = vunpack.c.l.b16 %v793
          %v816 = vunpack.c.h.b16 %v793
          %v817 = vunpack.c.l.b16 %v794
          %v818 = vunpack.c.h.b16 %v794
          %v819 = vpack.c.b16 %v803, %v803
          %v820 = vpack.c.b16 %v804, %v804
          %v821 = vpack.c.b16 %v805, %v805
          %v822 = vpack.c.b16 %v806, %v806
          %v823 = vpack.c.b16 %v807, %v807
          %v824 = vpack.c.b16 %v808, %v808
          %v825 = vpack.c.b16 %v809, %v809
          %v826 = vpack.c.b16 %v810, %v810
          %v827 = vpack.c.b16 %v811, %v811
          %v828 = vpack.c.b16 %v812, %v812
          %v829 = vpack.c.b16 %v813, %v813
          %v830 = vpack.c.b16 %v814, %v814
          %v831 = vpack.c.b16 %v815, %v815
          %v832 = vpack.c.b16 %v816, %v816
          %v833 = vpack.c.b16 %v817, %v817
          %v834 = vpack.c.b16 %v818, %v818
          %vm851 = vcmask 125952
          %852 = vst.msk [vmem:[%s333] sm:$0xf] %vm851, %v819
          %853 = vst.msk [vmem:[%s333 + $0x4] sm:$0xf] %vm851, %v820
          %854 = vst.msk [vmem:[%s333 + $0x8] sm:$0xf] %vm851, %v821
          %855 = vst.msk [vmem:[%s333 + $0xc] sm:$0xf] %vm851, %v822
          %856 = vst.msk [vmem:[%s333 + $0x10] sm:$0xf] %vm851, %v823
          %857 = vst.msk [vmem:[%s333 + $0x14] sm:$0xf] %vm851, %v824
          %858 = vst.msk [vmem:[%s333 + $0x18] sm:$0xf] %vm851, %v825
          %859 = vst.msk [vmem:[%s333 + $0x1c] sm:$0xf] %vm851, %v826
          %860 = vst.msk [vmem:[%s333 + $0x20] sm:$0xf] %vm851, %v827
          %861 = vst.msk [vmem:[%s333 + $0x24] sm:$0xf] %vm851, %v828
          %862 = vst.msk [vmem:[%s333 + $0x28] sm:$0xf] %vm851, %v829
          %863 = vst.msk [vmem:[%s333 + $0x2c] sm:$0xf] %vm851, %v830
          %864 = vst.msk [vmem:[%s333 + $0x30] sm:$0xf] %vm851, %v831
          %865 = vst.msk [vmem:[%s333 + $0x34] sm:$0xf] %vm851, %v832
          %866 = vst.msk [vmem:[%s333 + $0x38] sm:$0xf] %vm851, %v833
          %867 = vst.msk [vmem:[%s333 + $0x3c] sm:$0xf] %vm851, %v834
        $region86: #{jknet_forward.9} parent=73 // pred_fallthru
          _
        %s868 = smul.u32 16, %s20
        %p869 = scmp.lt.s32.totalorder %s868, 31
        %s870 = scalar_select %p869, %s868, 31
        %s871 = smul.addr %s870, 4
        %s872 = scalar_lea.vmem %s5, %s871
        // Predicated region
        $region87: #{jknet_forward.9} parent=73 // pred_check
          %p873 = pneg %p168
        $region88: #{jknet_forward.9} parent=73 // pred_check_branch
          %875 = sbr.rel (%p873) target = $region90
        $region89: #{jknet_forward.9} parent=73 // pred_region
          %s876 = smul.u32 16, %s20
        $region90: #{jknet_forward.9} parent=73 // pred_fallthru
          _
      $region74: #{jknet_forward.9} parent=5 // pred_fallthru
        _
      %p877 = scmp.le.s32.totalorder 2, %s11
      // Predicated region
      $region91: #{jknet_forward.9} parent=5 // pred_check
        %p878 = pneg %p877
      $region92: #{jknet_forward.9} parent=5 // pred_check_branch
        %880 = sbr.rel (%p878) target = $region94
      $region93: #{jknet_forward.9} parent=5 // pred_region
        %s881 = ssub.s32 %s11, 2
        // Predicated region
        $region95: #{jknet_forward.9} parent=93 // pred_check
          %p882 = pneg %p174
        $region96: #{jknet_forward.9} parent=93 // pred_check_branch
          %884 = sbr.rel (%p882) target = $region98
        $region97: #{jknet_forward.9} parent=93 // pred_region
          %s885 = smul.u32 16, %s22
          %p886 = scmp.lt.s32.totalorder %s885, 31
          %s887 = scalar_select %p886, %s885, 31
          %s888 = smul.addr %s887, 4
          %s889 = scalar_lea.vmem %s5, %s888
        $region98: #{jknet_forward.9} parent=93 // pred_fallthru
          _
      $region94: #{jknet_forward.9} parent=5 // pred_fallthru
        _
    $region6: #{jknet_forward.9} parent=1 // loop_footer
      %s15 = sadd.s32 1, %s11
    $region7: #{jknet_forward.9} parent=1 // loop_footer_branch
      %10 = sbr.rel target = $region3
    $region8: #{jknet_forward.9} parent=1 // loop_exit
      _

// kernel: jknet_forward.15
$region0: #{jknet_forward.15}
  #allocation0 [shape = 'u32[]', space=smem, size = 0x4, offset = 0x4, fixed_abs, tag = 'smem constant byte address 0x4 - core index']
  #allocation1 [shape = 'u32[144,128]{1,0:T(1,128)}', space=vmem, size = 0x12000, scoped, tag = 'internal scratch']
  #allocation2 [shape = 'f32[128,128]{1,0:T(8,128)}', space=vmem, size = 0x10000, scoped, tag = 'scratch operand']
  %s0 = inlined_call_operand.vmem [shape: bf16[256,128], index: 0, kind: input, shape index: {}, may-alias: {0,2}]
  %s1 = inlined_call_operand.vmem [shape: s8[256,256], index: 1, kind: input, shape index: {}]
  %s2 = inlined_call_operand.vmem [shape: bf16[256,128], index: 2, kind: input, shape index: {}, may-alias: {0,2}]
  %s3 = inlined_call_operand.vmem [shape: f32[256,1], index: 3, kind: input, shape index: {}]
  %s4 = inlined_call_operand.vmem [shape: f32[1,128], index: 4, kind: input, shape index: {}]
  %s5 = inlined_call_operand.vmem [shape: f32[256,128], index: 5, kind: output, shape index: {}]
  %s6 = sld [smem:[#allocation0]]
  $region99: #{jknet_forward.15} parent=0
    _
  %s8 = ssub.s32 1, %s6
  %s9 = scalar_select 0, %s8, %s6
  $region1: #{jknet_forward.15} parent=0
    #allocation3 [shape = 'u8[32768]{0}', space=vmem, size = 0x8000, scoped, tag = 'input window, operand 1']
    loop: start=0, step=1, limit=6
    $region2: #{jknet_forward.15} parent=1 // loop_pre_header
      _
    $region3: #{jknet_forward.15} parent=1 // loop_header
      %s11 = sphi 0, %s15
      %p12 = scmp.ge.s32.totalorder %s11, 6
      %s18 = sphi 0, %s30
      %s19 = sphi 0, %s26
      %s20 = sphi 0, %s18
      %s21 = sphi 0, %s19
      %s22 = sphi 0, %s20
      %s23 = sphi 0, %s21
      %s31 = sphi 0, %s31
      %s33 = sphi 0, %s31
      %s34 = sphi 0, %s33
      %s48 = sphi 0, %s34
      %s56 = sphi 0, %s58
      %s59 = sphi 0, %s56
      %s60 = sphi 0, %s59
      %s76 = sphi 0, %s60
      %s82 = sphi 0, %s84
      %s85 = sphi 0, %s82
      %s86 = sphi 0, %s85
      %s102 = sphi 0, %s86
      %s108 = sphi 0, %s110
      %s111 = sphi 0, %s108
      %s112 = sphi 0, %s111
      %s128 = sphi 0, %s112
      %s132 = sphi 0, %s132
      %s134 = sphi 0, %s132
      %s135 = sphi 0, %s134
      %s149 = sphi 0, %s135
      %s155 = sphi 0, %s157
      %s158 = sphi 0, %s155
      %s159 = sphi 0, %s158
      %s175 = sphi 0, %s159
    $region4: #{jknet_forward.15} parent=1 // loop_header_branch
      %14 = sbr.rel (%p12) target = $region8
    $region5: #{jknet_forward.15} parent=1 // loop_body
      %s16 = ssub.s32 %s11, 1
      %s17 = ssub.s32 %s11, 2
      %s24 = sadd.s32 1, %s19
      %p25 = scmp.ge.s32.totalorder %s24, 2
      %s26 = scalar_select %p25, 0, %s24
      %s27 = sadd.s32 1, %s18
      %s28 = scalar_select %p25, %s27, %s18
      %p29 = scmp.ge.s32.totalorder %s28, 2
      %s30 = scalar_select %p29, 0, %s28
      %s32 = sadd.s32 %s31, 1
      %p35 = scmp.eq.s32.totalorder %s11, 3
      %p36 = scmp.ne.s32.totalorder %s31, %s33
      %p37 = scmp.eq.s32.totalorder %s11, 0
      %p38 = por %p36, %p37
      %p39 = scmp.ne.s32.totalorder %s31, %s33
      %p40 = scmp.eq.s32.totalorder %s16, 3
      %p41 = por %p39, %p40
      %p42 = scmp.ne.s32.totalorder %s33, %s34
      %p43 = scmp.eq.s32.totalorder %s16, 0
      %p44 = por %p42, %p43
      %p45 = scmp.ne.s32.totalorder %s33, %s34
      %p46 = scmp.eq.s32.totalorder %s17, 3
      %p47 = por %p45, %p46
      %p49 = scmp.ne.s32.totalorder %s34, %s48
      %p50 = scmp.eq.s32.totalorder %s17, 0
      %p51 = por %p49, %p50
      %s52 = ssub.s32 %s18, %s30
      %s53 = ssub.s32 %s19, %s26
      %s54 = sor.u32 %s52, %s53
      %p55 = scmp.eq.s32.totalorder %s54, 0
      %s57 = sadd.s32 %s56, 1
      %s58 = scalar_select %p55, %s56, %s57
      %p61 = pneg %p55
      %p62 = scmp.eq.s32.totalorder %s11, 3
      %p63 = por %p61, %p62
      %p64 = scmp.ne.s32.totalorder %s56, %s59
      %p65 = scmp.eq.s32.totalorder %s11, 0
      %p66 = por %p64, %p65
      %p67 = scmp.ne.s32.totalorder %s56, %s59
      %p68 = scmp.eq.s32.totalorder %s16, 3
      %p69 = por %p67, %p68
      %p70 = scmp.ne.s32.totalorder %s59, %s60
      %p71 = scmp.eq.s32.totalorder %s16, 0
      %p72 = por %p70, %p71
      %p73 = scmp.ne.s32.totalorder %s59, %s60
      %p74 = scmp.eq.s32.totalorder %s17, 3
      %p75 = por %p73, %p74
      %p77 = scmp.ne.s32.totalorder %s60, %s76
      %p78 = scmp.eq.s32.totalorder %s17, 0
      %p79 = por %p77, %p78
      %s80 = ssub.s32 %s18, %s30
      %p81 = scmp.eq.s32.totalorder %s80, 0
      %s83 = sadd.s32 %s82, 1
      %s84 = scalar_select %p81, %s82, %s83
      %p87 = pneg %p81
      %p88 = scmp.eq.s32.totalorder %s11, 3
      %p89 = por %p87, %p88
      %p90 = scmp.ne.s32.totalorder %s82, %s85
      %p91 = scmp.eq.s32.totalorder %s11, 0
      %p92 = por %p90, %p91
      %p93 = scmp.ne.s32.totalorder %s82, %s85
      %p94 = scmp.eq.s32.totalorder %s16, 3
      %p95 = por %p93, %p94
      %p96 = scmp.ne.s32.totalorder %s85, %s86
      %p97 = scmp.eq.s32.totalorder %s16, 0
      %p98 = por %p96, %p97
      %p99 = scmp.ne.s32.totalorder %s85, %s86
      %p100 = scmp.eq.s32.totalorder %s17, 3
      %p101 = por %p99, %p100
      %p103 = scmp.ne.s32.totalorder %s86, %s102
      %p104 = scmp.eq.s32.totalorder %s17, 0
      %p105 = por %p103, %p104
      %s106 = ssub.s32 %s18, %s30
      %p107 = scmp.eq.s32.totalorder %s106, 0
      %s109 = sadd.s32 %s108, 1
      %s110 = scalar_select %p107, %s108, %s109
      %p113 = pneg %p107
      %p114 = scmp.eq.s32.totalorder %s11, 3
      %p115 = por %p113, %p114
      %p116 = scmp.ne.s32.totalorder %s108, %s111
      %p117 = scmp.eq.s32.totalorder %s11, 0
      %p118 = por %p116, %p117
      %p119 = scmp.ne.s32.totalorder %s108, %s111
      %p120 = scmp.eq.s32.totalorder %s16, 3
      %p121 = por %p119, %p120
      %p122 = scmp.ne.s32.totalorder %s111, %s112
      %p123 = scmp.eq.s32.totalorder %s16, 0
      %p124 = por %p122, %p123
      %p125 = scmp.ne.s32.totalorder %s111, %s112
      %p126 = scmp.eq.s32.totalorder %s17, 3
      %p127 = por %p125, %p126
      %p129 = scmp.ne.s32.totalorder %s112, %s128
      %p130 = scmp.eq.s32.totalorder %s17, 0
      %p131 = por %p129, %p130
      %s133 = sadd.s32 %s132, 1
      %p136 = scmp.eq.s32.totalorder %s11, 3
      %p137 = scmp.ne.s32.totalorder %s132, %s134
      %p138 = scmp.eq.s32.totalorder %s11, 0
      %p139 = por %p137, %p138
      %p140 = scmp.ne.s32.totalorder %s132, %s134
      %p141 = scmp.eq.s32.totalorder %s16, 3
      %p142 = por %p140, %p141
      %p143 = scmp.ne.s32.totalorder %s134, %s135
      %p144 = scmp.eq.s32.totalorder %s16, 0
      %p145 = por %p143, %p144
      %p146 = scmp.ne.s32.totalorder %s134, %s135
      %p147 = scmp.eq.s32.totalorder %s17, 3
      %p148 = por %p146, %p147
      %p150 = scmp.ne.s32.totalorder %s135, %s149
      %p151 = scmp.eq.s32.totalorder %s17, 0
      %p152 = por %p150, %p151
      %s153 = ssub.s32 %s18, %s30
      %p154 = scmp.eq.s32.totalorder %s153, 0
      %s156 = sadd.s32 %s155, 1
      %s157 = scalar_select %p154, %s155, %s156
      %p160 = pneg %p154
      %p161 = scmp.eq.s32.totalorder %s11, 3
      %p162 = por %p160, %p161
      %p163 = scmp.ne.s32.totalorder %s155, %s158
      %p164 = scmp.eq.s32.totalorder %s11, 0
      %p165 = por %p163, %p164
      %p166 = scmp.ne.s32.totalorder %s155, %s158
      %p167 = scmp.eq.s32.totalorder %s16, 3
      %p168 = por %p166, %p167
      %p169 = scmp.ne.s32.totalorder %s158, %s159
      %p170 = scmp.eq.s32.totalorder %s16, 0
      %p171 = por %p169, %p170
      %p172 = scmp.ne.s32.totalorder %s158, %s159
      %p173 = scmp.eq.s32.totalorder %s17, 3
      %p174 = por %p172, %p173
      %p176 = scmp.ne.s32.totalorder %s159, %s175
      %p177 = scmp.eq.s32.totalorder %s17, 0
      %p178 = por %p176, %p177
      %p179 = scmp.le.s32.totalorder 1, %s11
      %p180 = scmp.lt.s32.totalorder %s11, 5
      %p181 = pnand %p179, %p180
      %p182 = pneg %p181
      // Predicated region
      $region9: #{jknet_forward.15} parent=5 // pred_check
        _
      $region10: #{jknet_forward.15} parent=5 // pred_check_branch
        %184 = sbr.rel (%p181) target = $region12
      $region11: #{jknet_forward.15} parent=5 // pred_region
        %s185 = ssub.s32 %s11, 1
        // Predicated region
        $region13: #{jknet_forward.15} parent=11 // pred_check
          %p186 = pneg %p44
        $region14: #{jknet_forward.15} parent=11 // pred_check_branch
          %188 = sbr.rel (%p186) target = $region16
        $region15: #{jknet_forward.15} parent=11 // pred_region
          _
        $region16: #{jknet_forward.15} parent=11 // pred_fallthru
          _
        // Predicated region
        $region17: #{jknet_forward.15} parent=11 // pred_check
          %p189 = pneg %p145
        $region18: #{jknet_forward.15} parent=11 // pred_check_branch
          %191 = sbr.rel (%p189) target = $region20
        $region19: #{jknet_forward.15} parent=11 // pred_region
          _
        $region20: #{jknet_forward.15} parent=11 // pred_fallthru
          _
      $region12: #{jknet_forward.15} parent=5 // pred_fallthru
        _
      %p192 = scmp.lt.s32.totalorder %s11, 4
      // Predicated region
      $region21: #{jknet_forward.15} parent=5 // pred_check
        %p193 = pneg %p192
      $region22: #{jknet_forward.15} parent=5 // pred_check_branch
        %195 = sbr.rel (%p193) target = $region24
      $region23: #{jknet_forward.15} parent=5 // pred_region
        // Predicated region
        $region25: #{jknet_forward.15} parent=23 // pred_check
          %p196 = pneg %p66
        $region26: #{jknet_forward.15} parent=23 // pred_check_branch
          %198 = sbr.rel (%p196) target = $region28
        $region27: #{jknet_forward.15} parent=23 // pred_region
          %s199 = sand.u32 %s56, 1
          %s200 = sand.u32 %s56, 1
          %s201 = smul.addr %s200, 32
          %s202 = scalar_lea.vmem [#allocation3], %s201
          %s203 = smul.u32 4, %s18
          %s204 = smul.addr %s203, 2
          %s205 = sadd.s32 %s19, %s204
          %s206 = smul.addr %s205, 8
          %s207 = scalar_lea.vmem %s1, %s206
          // Predicated region
          $region29: #{jknet_forward.15} parent=27 // pred_check
            _
          $region30: #{jknet_forward.15} parent=27 // pred_check_branch
            %209 = sbr.rel (0) target = $region32
          $region31: #{jknet_forward.15} parent=27 // pred_region
            // Predicated region
            $region33: #{jknet_forward.15} parent=31 // pred_check
              _
            $region34: #{jknet_forward.15} parent=31 // pred_check_branch
              %211 = sbr.rel (0) target = $region36
            $region35: #{jknet_forward.15} parent=31 // pred_region
              // Predicated region
              $region48: #{jknet_forward.15} parent=35 // pred_check
                _
              $region49: #{jknet_forward.15} parent=35 // pred_check_branch
                %233 = sbr.rel (0) target = $region51
              $region50: #{jknet_forward.15} parent=35 // pred_region
                loop: start=0, step=1, limit=1
                $region52: #{jknet_forward.15} parent=50 // loop_pre_header
                  _
                $region53: #{jknet_forward.15} parent=50 // loop_header
                  %s235 = sphi 0, %s239
                  %p236 = scmp.ge.s32.totalorder %s235, 1
                  %s240 = sphi %s207, %s207
                  %s241 = sphi %s202, %s202
                $region54: #{jknet_forward.15} parent=50 // loop_header_branch
                  %238 = sbr.rel (%p236) target = $region58
                $region55: #{jknet_forward.15} parent=50 // loop_body
                  %v242 = vld [vmem:[%s240] sm:$0xff]
                  %243 = vst [vmem:[%s241] sm:$0xff] %v242
                  %v244 = vld [vmem:[%s240 + $0x10] sm:$0xff]
                  %245 = vst [vmem:[%s241 + $0x8] sm:$0xff] %v244
                  %v246 = vld [vmem:[%s240 + $0x20] sm:$0xff]
                  %247 = vst [vmem:[%s241 + $0x10] sm:$0xff] %v246
                  %v248 = vld [vmem:[%s240 + $0x30] sm:$0xff]
                  %249 = vst [vmem:[%s241 + $0x18] sm:$0xff] %v248
                $region56: #{jknet_forward.15} parent=50 // loop_footer
                  %s239 = sadd.s32 1, %s235
                $region57: #{jknet_forward.15} parent=50 // loop_footer_branch
                  %234 = sbr.rel target = $region53
                $region58: #{jknet_forward.15} parent=50 // loop_exit
                  _
              $region51: #{jknet_forward.15} parent=35 // pred_fallthru
                _
              // Predicated region
              $region59: #{jknet_forward.15} parent=35 // pred_check
                _
              $region60: #{jknet_forward.15} parent=35 // pred_check_branch
                %251 = sbr.rel target = $region62
              $region61: #{jknet_forward.15} parent=35 // pred_region
                _
              $region62: #{jknet_forward.15} parent=35 // pred_fallthru
                _
            $region36: #{jknet_forward.15} parent=31 // pred_fallthru
              _
            // Predicated region
            $region37: #{jknet_forward.15} parent=31 // pred_check
              _
            $region38: #{jknet_forward.15} parent=31 // pred_check_branch
              %213 = sbr.rel target = $region40
            $region39: #{jknet_forward.15} parent=31 // pred_region
              %s215 = ssub.s32 256, 1
              loop: start=0, step=1, limit=1
              $region41: #{jknet_forward.15} parent=39 // loop_pre_header
                _
              $region42: #{jknet_forward.15} parent=39 // loop_header
                %s217 = sphi 0, %s221
                %p218 = scmp.ge.s32.totalorder %s217, 1
                %s222 = sphi %s207, %s207
                %s223 = sphi %s202, %s202
              $region43: #{jknet_forward.15} parent=39 // loop_header_branch
                %220 = sbr.rel (%p218) target = $region47
              $region44: #{jknet_forward.15} parent=39 // loop_body
                %v224 = vld [vmem:[%s222] sm:%s215]
                %225 = vst [vmem:[%s223] sm:%s215] %v224
                %v226 = vld [vmem:[%s222 + $0x10] sm:%s215]
                %227 = vst [vmem:[%s223 + $0x8] sm:%s215] %v226
                %v228 = vld [vmem:[%s222 + $0x20] sm:%s215]
                %229 = vst [vmem:[%s223 + $0x10] sm:%s215] %v228
                %v230 = vld [vmem:[%s222 + $0x30] sm:%s215]
                %231 = vst [vmem:[%s223 + $0x18] sm:%s215] %v230
              $region45: #{jknet_forward.15} parent=39 // loop_footer
                %s221 = sadd.s32 1, %s217
              $region46: #{jknet_forward.15} parent=39 // loop_footer_branch
                %216 = sbr.rel target = $region42
              $region47: #{jknet_forward.15} parent=39 // loop_exit
                _
            $region40: #{jknet_forward.15} parent=31 // pred_fallthru
              _
          $region32: #{jknet_forward.15} parent=27 // pred_fallthru
            _
          %252 = vnop
        $region28: #{jknet_forward.15} parent=23 // pred_fallthru
          _
        // Predicated region
        $region63: #{jknet_forward.15} parent=23 // pred_check
          %p253 = pneg %p92
        $region64: #{jknet_forward.15} parent=23 // pred_check_branch
          %255 = sbr.rel (%p253) target = $region66
        $region65: #{jknet_forward.15} parent=23 // pred_region
          %s256 = smul.u32 16, %s18
          %p257 = scmp.lt.s32.totalorder %s256, 31
          %s258 = scalar_select %p257, %s256, 31
          %s259 = smul.addr %s258, 4
          %s260 = scalar_lea.vmem %s2, %s259
          %s261 = smul.u32 16, %s18
        $region66: #{jknet_forward.15} parent=23 // pred_fallthru
          _
        // Predicated region
        $region67: #{jknet_forward.15} parent=23 // pred_check
          %p262 = pneg %p118
        $region68: #{jknet_forward.15} parent=23 // pred_check_branch
          %264 = sbr.rel (%p262) target = $region70
        $region69: #{jknet_forward.15} parent=23 // pred_region
          %s265 = smul.u32 16, %s18
          %p266 = scmp.lt.s32.totalorder %s265, 31
          %s267 = scalar_select %p266, %s265, 31
          %s268 = smul.addr %s267, 8
          %s269 = scalar_lea.vmem %s3, %s268
          %s270 = smul.u32 16, %s18
        $region70: #{jknet_forward.15} parent=23 // pred_fallthru
          _
      $region24: #{jknet_forward.15} parent=5 // pred_fallthru
        _
      %p271 = scmp.le.s32.totalorder 1, %s11
      %p272 = scmp.lt.s32.totalorder %s11, 5
      %p273 = pnand %p271, %p272
      %p274 = pneg %p273
      // Predicated region
      $region71: #{jknet_forward.15} parent=5 // pred_check
        _
      $region72: #{jknet_forward.15} parent=5 // pred_check_branch
        %276 = sbr.rel (%p273) target = $region74
      $region73: #{jknet_forward.15} parent=5 // pred_region
        %s277 = ssub.s32 %s11, 1
        %s278 = sand.u32 %s59, 1
        %s279 = sand.u32 %s59, 1
        %s280 = smul.addr %s279, 32
        %s281 = scalar_lea.vmem [#allocation3], %s280
        // Predicated region
        $region75: #{jknet_forward.15} parent=73 // pred_check
          %p282 = pneg %p72
        $region76: #{jknet_forward.15} parent=73 // pred_check_branch
          %284 = sbr.rel (%p282) target = $region78
        $region77: #{jknet_forward.15} parent=73 // pred_region
          _
        $region78: #{jknet_forward.15} parent=73 // pred_fallthru
          _
        %p285 = pneg %p44
        %p286 = pneg %p41
        %s287 = sand.u32 %s59, 1
        %s288 = sand.u32 %s59, 1
        %s289 = smul.addr %s288, 32
        %s290 = scalar_lea.vmem [#allocation3], %s289
        %p291 = pneg %p72
        %p292 = pneg %p69
        %s293 = smul.u32 16, %s20
        %p294 = scmp.lt.s32.totalorder %s293, 31
        %s295 = scalar_select %p294, %s293, 31
        %s296 = smul.addr %s295, 4
        %s297 = scalar_lea.vmem %s2, %s296
        %p298 = pneg %p98
        %p299 = pneg %p95
        %s300 = smul.u32 16, %s20
        %p301 = scmp.lt.s32.totalorder %s300, 31
        %s302 = scalar_select %p301, %s300, 31
        %s303 = smul.addr %s302, 8
        %s304 = scalar_lea.vmem %s3, %s303
        %p305 = pneg %p124
        %p306 = pneg %p121
        %p307 = pneg %p145
        %p308 = pneg %p142
        %p309 = pneg %p171
        %p310 = pneg %p168
        %s311 = smul.u32 16, %s20
        %p312 = scmp.lt.s32.totalorder %s311, 31
        %s313 = scalar_select %p312, %s311, 31
        %s314 = smul.addr %s313, 8
        %s315 = scalar_lea.vmem %s5, %s314
        %s316 = smul.u32 4, %s20
        %s317 = smul.u32 16, %s20
        %p318 = scmp.lt.s32.totalorder %s317, 31
        %s319 = scalar_select %p318, %s317, 31
        %s320 = smul.addr %s319, 4
        %s321 = scalar_lea.vmem %s2, %s320
        %s322 = smul.u32 16, %s20
        %s323 = smul.u32 16, %s20
        %p324 = scmp.lt.s32.totalorder %s323, 31
        %s325 = scalar_select %p324, %s323, 31
        %s326 = smul.addr %s325, 8
        %s327 = scalar_lea.vmem %s3, %s326
        %s328 = smul.u32 16, %s20
        %s329 = smul.u32 16, %s20
        %p330 = scmp.lt.s32.totalorder %s329, 31
        %s331 = scalar_select %p330, %s329, 31
        %s332 = smul.addr %s331, 8
        %s333 = scalar_lea.vmem %s5, %s332
        %s334 = smul.u32 16, %s20
        %p336 = scmp.eq.s32.totalorder %s21, 0
        // Predicated region
        $region79: #{jknet_forward.15} parent=73 // pred_check
          %p337 = pneg %p336
        $region80: #{jknet_forward.15} parent=73 // pred_check_branch
          %339 = sbr.rel (%p337) target = $region82
        $region81: #{jknet_forward.15} parent=73 // pred_region
          %v340 = vld [vmem:[%s321] sm:$0xf]
          %v341 = vld [vmem:[%s321 + $0x4] sm:$0xf]
          %v342 = vld [vmem:[%s321 + $0x8] sm:$0xf]
          %v343 = vld [vmem:[%s321 + $0xc] sm:$0xf]
          %v344 = vld [vmem:[%s321 + $0x10] sm:$0xf]
          %v345 = vld [vmem:[%s321 + $0x14] sm:$0xf]
          %v346 = vld [vmem:[%s321 + $0x18] sm:$0xf]
          %v347 = vld [vmem:[%s321 + $0x1c] sm:$0xf]
          %v348 = vld [vmem:[%s321 + $0x20] sm:$0xf]
          %v349 = vld [vmem:[%s321 + $0x24] sm:$0xf]
          %v350 = vld [vmem:[%s321 + $0x28] sm:$0xf]
          %v351 = vld [vmem:[%s321 + $0x2c] sm:$0xf]
          %v352 = vld [vmem:[%s321 + $0x30] sm:$0xf]
          %v353 = vld [vmem:[%s321 + $0x34] sm:$0xf]
          %v354 = vld [vmem:[%s321 + $0x38] sm:$0xf]
          %v355 = vld [vmem:[%s321 + $0x3c] sm:$0xf]
          %v356 = vunpack.c.l.bf16 %v340
          %v357 = vunpack.c.l.bf16 %v341
          %v358 = vunpack.c.l.bf16 %v342
          %v359 = vunpack.c.l.bf16 %v343
          %v360 = vunpack.c.l.bf16 %v344
          %v361 = vunpack.c.l.bf16 %v345
          %v362 = vunpack.c.l.bf16 %v346
          %v363 = vunpack.c.l.bf16 %v347
          %v364 = vunpack.c.l.bf16 %v348
          %v365 = vunpack.c.l.bf16 %v349
          %v366 = vunpack.c.l.bf16 %v350
          %v367 = vunpack.c.l.bf16 %v351
          %v368 = vunpack.c.l.bf16 %v352
          %v369 = vunpack.c.l.bf16 %v353
          %v370 = vunpack.c.l.bf16 %v354
          %v371 = vunpack.c.l.bf16 %v355
          %372 = vst [vmem:[#allocation2] sm:$0xff] %v356
          %373 = vst [vmem:[#allocation2 + $0x8] sm:$0xff] %v357
          %374 = vst [vmem:[#allocation2 + $0x10] sm:$0xff] %v358
          %375 = vst [vmem:[#allocation2 + $0x18] sm:$0xff] %v359
          %376 = vst [vmem:[#allocation2 + $0x20] sm:$0xff] %v360
          %377 = vst [vmem:[#allocation2 + $0x28] sm:$0xff] %v361
          %378 = vst [vmem:[#allocation2 + $0x30] sm:$0xff] %v362
          %379 = vst [vmem:[#allocation2 + $0x38] sm:$0xff] %v363
          %380 = vst [vmem:[#allocation2 + $0x40] sm:$0xff] %v364
          %381 = vst [vmem:[#allocation2 + $0x48] sm:$0xff] %v365
          %382 = vst [vmem:[#allocation2 + $0x50] sm:$0xff] %v366
          %383 = vst [vmem:[#allocation2 + $0x58] sm:$0xff] %v367
          %384 = vst [vmem:[#allocation2 + $0x60] sm:$0xff] %v368
          %385 = vst [vmem:[#allocation2 + $0x68] sm:$0xff] %v369
          %386 = vst [vmem:[#allocation2 + $0x70] sm:$0xff] %v370
          %387 = vst [vmem:[#allocation2 + $0x78] sm:$0xff] %v371
        $region82: #{jknet_forward.15} parent=73 // pred_fallthru
          _
        %s388 = smul.u32 %s21, 128
        %s389 = sshra.s32 %s388, 3
        %s390 = sand.u32 %s388, 7
        %s391 = smul.addr %s389, 4
        %s392 = scalar_lea.vmem %s0, %s391
        %v393 = vld [vmem:[%s392] sm:$0xf]
        %v394 = vld [vmem:[%s392 + $0x4] sm:$0xf]
        %v395 = vld [vmem:[%s392 + $0x8] sm:$0xf]
        %v396 = vld [vmem:[%s392 + $0xc] sm:$0xf]
        %v397 = vld [vmem:[%s392 + $0x10] sm:$0xf]
        %v398 = vld [vmem:[%s392 + $0x14] sm:$0xf]
        %v399 = vld [vmem:[%s392 + $0x18] sm:$0xf]
        %v400 = vld [vmem:[%s392 + $0x1c] sm:$0xf]
        %v401 = vld [vmem:[%s392 + $0x20] sm:$0xf]
        %v402 = vld [vmem:[%s392 + $0x24] sm:$0xf]
        %v403 = vld [vmem:[%s392 + $0x28] sm:$0xf]
        %v404 = vld [vmem:[%s392 + $0x2c] sm:$0xf]
        %v405 = vld [vmem:[%s392 + $0x30] sm:$0xf]
        %v406 = vld [vmem:[%s392 + $0x34] sm:$0xf]
        %v407 = vld [vmem:[%s392 + $0x38] sm:$0xf]
        %v408 = vld [vmem:[%s392 + $0x3c] sm:$0xf]
        %v409 = vld [vmem:[#allocation2] sm:$0xff]
        %v410 = vld [vmem:[#allocation2 + $0x8] sm:$0xff]
        %v411 = vld [vmem:[#allocation2 + $0x10] sm:$0xff]
        %v412 = vld [vmem:[#allocation2 + $0x18] sm:$0xff]
        %v413 = vld [vmem:[#allocation2 + $0x20] sm:$0xff]
        %v414 = vld [vmem:[#allocation2 + $0x28] sm:$0xff]
        %v415 = vld [vmem:[#allocation2 + $0x30] sm:$0xff]
        %v416 = vld [vmem:[#allocation2 + $0x38] sm:$0xff]
        %v417 = vld [vmem:[#allocation2 + $0x40] sm:$0xff]
        %v418 = vld [vmem:[#allocation2 + $0x48] sm:$0xff]
        %v419 = vld [vmem:[#allocation2 + $0x50] sm:$0xff]
        %v420 = vld [vmem:[#allocation2 + $0x58] sm:$0xff]
        %v421 = vld [vmem:[#allocation2 + $0x60] sm:$0xff]
        %v422 = vld [vmem:[#allocation2 + $0x68] sm:$0xff]
        %v423 = vld [vmem:[#allocation2 + $0x70] sm:$0xff]
        %v424 = vld [vmem:[#allocation2 + $0x78] sm:$0xff]
        %v425 = vld [vmem:[%s281] sm:$0xff]
        %v426 = vld [vmem:[%s281 + $0x8] sm:$0xff]
        %v427 = vld [vmem:[%s281 + $0x10] sm:$0xff]
        %v428 = vld [vmem:[%s281 + $0x18] sm:$0xff]
        %v429 = vunpack.c.l.s8.bf16 %v425
        %v430 = vunpack.c.h.s8.bf16 %v425
        %v431 = vunpack.c.l.s8.bf16 %v426
        %v432 = vunpack.c.h.s8.bf16 %v426
        %v433 = vunpack.c.l.s8.bf16 %v427
        %v434 = vunpack.c.h.s8.bf16 %v427
        %v435 = vunpack.c.l.s8.bf16 %v428
        %v436 = vunpack.c.h.s8.bf16 %v428
        %v453 = vunpack.c.l.b16 %v393
        %v454 = vunpack.c.l.b16 %v394
        %v455 = vunpack.c.l.b16 %v395
        %v456 = vunpack.c.l.b16 %v396
        %v457 = vunpack.c.l.b16 %v397
        %v458 = vunpack.c.l.b16 %v398
        %v459 = vunpack.c.l.b16 %v399
        %v460 = vunpack.c.l.b16 %v400
        %v461 = vunpack.c.l.b16 %v401
        %v462 = vunpack.c.l.b16 %v402
        %v463 = vunpack.c.l.b16 %v403
        %v464 = vunpack.c.l.b16 %v404
        %v465 = vunpack.c.l.b16 %v405
        %v466 = vunpack.c.l.b16 %v406
        %v467 = vunpack.c.l.b16 %v407
        %v468 = vunpack.c.l.b16 %v408
        %v469 = vpack.c.b16 %v454, %v453
        %v470 = vpack.c.b16 %v456, %v455
        %v471 = vpack.c.b16 %v458, %v457
        %v472 = vpack.c.b16 %v460, %v459
        %v473 = vpack.c.b16 %v462, %v461
        %v474 = vpack.c.b16 %v464, %v463
        %v475 = vpack.c.b16 %v466, %v465
        %v476 = vpack.c.b16 %v468, %v467
        %485 = vmatprep.subr.bf16.mxu0 0
        %486 = vmatpush1.bf16.msra.mxu0 %v476
        %487 = vmatprep.subr.bf16.mxu0 0
        %488 = vmatpush1.bf16.msra.mxu0 %v475
        %489 = vmatprep.subr.bf16.mxu0 0
        %490 = vmatpush1.bf16.msra.mxu0 %v474
        %491 = vmatprep.subr.bf16.mxu0 0
        %492 = vmatpush1.bf16.msra.mxu0 %v473
        %493 = vmatprep.subr.bf16.mxu0 0
        %494 = vmatpush1.bf16.msra.mxu0 %v472
        %495 = vmatprep.subr.bf16.mxu0 0
        %496 = vmatpush1.bf16.msra.mxu0 %v471
        %497 = vmatprep.subr.bf16.mxu0 0
        %498 = vmatpush1.bf16.msra.mxu0 %v470
        %499 = vmatprep.subr.bf16.mxu0 0
        %500 = vmatpush1.bf16.msra.mxu0 %v469
        %501 = vmatprep.subr.bf16.mxu0 0
        %502 = vmatpush2.bf16.msra.mxu0 0
        %503 = vmatprep.subr.bf16.mxu0 0
        %504 = vmatpush2.bf16.msra.mxu0 0
        %505 = vmatprep.subr.bf16.mxu0 0
        %506 = vmatpush2.bf16.msra.mxu0 0
        %507 = vmatprep.subr.bf16.mxu0 0
        %508 = vmatpush2.bf16.msra.mxu0 0
        %509 = vmatprep.subr.bf16.mxu0 0
        %510 = vmatpush2.bf16.msra.mxu0 0
        %511 = vmatprep.subr.bf16.mxu0 0
        %512 = vmatpush2.bf16.msra.mxu0 0
        %513 = vmatprep.subr.bf16.mxu0 0
        %514 = vmatpush2.bf16.msra.mxu0 0
        %515 = vmatprep.subr.bf16.mxu0 0
        %516 = vmatpush2.bf16.msra.mxu0 0
        %517 = vmatprep.mubr.bf16.mxu0 0
        %518 = vmatmul.mubr.bf16.gmra.mxu0 %v429
        %v519 = vpop.f32.mrf.mxu0
        %v520 = vadd.f32 0.0, %v519
        %v521 = vpop.f32.mrf.mxu0
        %v522 = vpop.f32.mrf.mxu0
        %v523 = vadd.f32 0.0, %v522
        %v524 = vpop.f32.mrf.mxu0
        %525 = vmatprep.mubr.bf16.mxu0 0
        %526 = vmatmul.mubr.bf16.gmra.mxu0 %v430
        %v527 = vpop.f32.mrf.mxu0
        %v528 = vadd.f32 0.0, %v527
        %v529 = vpop.f32.mrf.mxu0
        %v530 = vpop.f32.mrf.mxu0
        %v531 = vadd.f32 0.0, %v530
        %v532 = vpop.f32.mrf.mxu0
        %533 = vmatprep.mubr.bf16.mxu0 0
        %534 = vmatmul.mubr.bf16.gmra.mxu0 %v431
        %v535 = vpop.f32.mrf.mxu0
        %v536 = vadd.f32 0.0, %v535
        %v537 = vpop.f32.mrf.mxu0
        %v538 = vpop.f32.mrf.mxu0
        %v539 = vadd.f32 0.0, %v538
        %v540 = vpop.f32.mrf.mxu0
        %541 = vmatprep.mubr.bf16.mxu0 0
        %542 = vmatmul.mubr.bf16.gmra.mxu0 %v432
        %v543 = vpop.f32.mrf.mxu0
        %v544 = vadd.f32 0.0, %v543
        %v545 = vpop.f32.mrf.mxu0
        %v546 = vpop.f32.mrf.mxu0
        %v547 = vadd.f32 0.0, %v546
        %v548 = vpop.f32.mrf.mxu0
        %549 = vmatprep.mubr.bf16.mxu0 0
        %550 = vmatmul.mubr.bf16.gmra.mxu0 %v433
        %v551 = vpop.f32.mrf.mxu0
        %v552 = vadd.f32 0.0, %v551
        %v553 = vpop.f32.mrf.mxu0
        %v554 = vpop.f32.mrf.mxu0
        %v555 = vadd.f32 0.0, %v554
        %v556 = vpop.f32.mrf.mxu0
        %557 = vmatprep.mubr.bf16.mxu0 0
        %558 = vmatmul.mubr.bf16.gmra.mxu0 %v434
        %v559 = vpop.f32.mrf.mxu0
        %v560 = vadd.f32 0.0, %v559
        %v561 = vpop.f32.mrf.mxu0
        %v562 = vpop.f32.mrf.mxu0
        %v563 = vadd.f32 0.0, %v562
        %v564 = vpop.f32.mrf.mxu0
        %565 = vmatprep.mubr.bf16.mxu0 0
        %566 = vmatmul.mubr.bf16.gmra.mxu0 %v435
        %v567 = vpop.f32.mrf.mxu0
        %v568 = vadd.f32 0.0, %v567
        %v569 = vpop.f32.mrf.mxu0
        %v570 = vpop.f32.mrf.mxu0
        %v571 = vadd.f32 0.0, %v570
        %v572 = vpop.f32.mrf.mxu0
        %573 = vmatprep.mubr.bf16.mxu0 0
        %574 = vmatmul.mubr.bf16.gmra.mxu0 %v436
        %v575 = vpop.f32.mrf.mxu0
        %v576 = vadd.f32 0.0, %v575
        %v577 = vpop.f32.mrf.mxu0
        %v578 = vpop.f32.mrf.mxu0
        %v579 = vadd.f32 0.0, %v578
        %v580 = vpop.f32.mrf.mxu0
        %581 = vdwg.mxu0
        %v582 = vadd.f32 %v409, %v520
        %v583 = vadd.f32 %v410, %v523
        %v584 = vadd.f32 %v411, %v528
        %v585 = vadd.f32 %v412, %v531
        %v586 = vadd.f32 %v413, %v536
        %v587 = vadd.f32 %v414, %v539
        %v588 = vadd.f32 %v415, %v544
        %v589 = vadd.f32 %v416, %v547
        %v590 = vadd.f32 %v417, %v552
        %v591 = vadd.f32 %v418, %v555
        %v592 = vadd.f32 %v419, %v560
        %v593 = vadd.f32 %v420, %v563
        %v594 = vadd.f32 %v421, %v568
        %v595 = vadd.f32 %v422, %v571
        %v596 = vadd.f32 %v423, %v576
        %v597 = vadd.f32 %v424, %v579
        %598 = vst [vmem:[#allocation2] sm:$0xff] %v582
        %599 = vst [vmem:[#allocation2 + $0x8] sm:$0xff] %v583
        %600 = vst [vmem:[#allocation2 + $0x10] sm:$0xff] %v584
        %601 = vst [vmem:[#allocation2 + $0x18] sm:$0xff] %v585
        %602 = vst [vmem:[#allocation2 + $0x20] sm:$0xff] %v586
        %603 = vst [vmem:[#allocation2 + $0x28] sm:$0xff] %v587
        %604 = vst [vmem:[#allocation2 + $0x30] sm:$0xff] %v588
        %605 = vst [vmem:[#allocation2 + $0x38] sm:$0xff] %v589
        %606 = vst [vmem:[#allocation2 + $0x40] sm:$0xff] %v590
        %607 = vst [vmem:[#allocation2 + $0x48] sm:$0xff] %v591
        %608 = vst [vmem:[#allocation2 + $0x50] sm:$0xff] %v592
        %609 = vst [vmem:[#allocation2 + $0x58] sm:$0xff] %v593
        %610 = vst [vmem:[#allocation2 + $0x60] sm:$0xff] %v594
        %611 = vst [vmem:[#allocation2 + $0x68] sm:$0xff] %v595
        %612 = vst [vmem:[#allocation2 + $0x70] sm:$0xff] %v596
        %613 = vst [vmem:[#allocation2 + $0x78] sm:$0xff] %v597
        %p614 = scmp.eq.s32.totalorder %s21, 1
        // Predicated region
        $region83: #{jknet_forward.15} parent=73 // pred_check
          %p615 = pneg %p614
        $region84: #{jknet_forward.15} parent=73 // pred_check_branch
          %617 = sbr.rel (%p615) target = $region86
        $region85: #{jknet_forward.15} parent=73 // pred_region
          %v618 = vld [vmem:[%s327] sm:$0xff]
          %v619 = vld [vmem:[%s327 + $0x8] sm:$0xff]
          %v620 = vld [vmem:[%s327 + $0x10] sm:$0xff]
          %v621 = vld [vmem:[%s327 + $0x18] sm:$0xff]
          %v622 = vld [vmem:[%s327 + $0x20] sm:$0xff]
          %v623 = vld [vmem:[%s327 + $0x28] sm:$0xff]
          %v624 = vld [vmem:[%s327 + $0x30] sm:$0xff]
          %v625 = vld [vmem:[%s327 + $0x38] sm:$0xff]
          %v626 = vld [vmem:[%s327 + $0x40] sm:$0xff]
          %v627 = vld [vmem:[%s327 + $0x48] sm:$0xff]
          %v628 = vld [vmem:[%s327 + $0x50] sm:$0xff]
          %v629 = vld [vmem:[%s327 + $0x58] sm:$0xff]
          %v630 = vld [vmem:[%s327 + $0x60] sm:$0xff]
          %v631 = vld [vmem:[%s327 + $0x68] sm:$0xff]
          %v632 = vld [vmem:[%s327 + $0x70] sm:$0xff]
          %v633 = vld [vmem:[%s327 + $0x78] sm:$0xff]
          %v634 = vld [vmem:[#allocation2] sm:$0xff]
          %v635 = vld [vmem:[#allocation2 + $0x8] sm:$0xff]
          %v636 = vld [vmem:[#allocation2 + $0x10] sm:$0xff]
          %v637 = vld [vmem:[#allocation2 + $0x18] sm:$0xff]
          %v638 = vld [vmem:[#allocation2 + $0x20] sm:$0xff]
          %v639 = vld [vmem:[#allocation2 + $0x28] sm:$0xff]
          %v640 = vld [vmem:[#allocation2 + $0x30] sm:$0xff]
          %v641 = vld [vmem:[#allocation2 + $0x38] sm:$0xff]
          %v642 = vld [vmem:[#allocation2 + $0x40] sm:$0xff]
          %v643 = vld [vmem:[#allocation2 + $0x48] sm:$0xff]
          %v644 = vld [vmem:[#allocation2 + $0x50] sm:$0xff]
          %v645 = vld [vmem:[#allocation2 + $0x58] sm:$0xff]
          %v646 = vld [vmem:[#allocation2 + $0x60] sm:$0xff]
          %v647 = vld [vmem:[#allocation2 + $0x68] sm:$0xff]
          %v648 = vld [vmem:[#allocation2 + $0x70] sm:$0xff]
          %v649 = vld [vmem:[#allocation2 + $0x78] sm:$0xff]
          %651 = vset.pattern.permute.xlu0 0
          %652 = vperm.xlu0 %651, %v618
          %v653 = vpop.permute.xlu0 %652
          %656 = vset.pattern.permute.xlu0 0
          %657 = vperm.xlu0 %656, %v619
          %v658 = vpop.permute.xlu0 %657
          %661 = vset.pattern.permute.xlu0 0
          %662 = vperm.xlu0 %661, %v620
          %v663 = vpop.permute.xlu0 %662
          %666 = vset.pattern.permute.xlu0 0
          %667 = vperm.xlu0 %666, %v621
          %v668 = vpop.permute.xlu0 %667
          %671 = vset.pattern.permute.xlu0 0
          %672 = vperm.xlu0 %671, %v622
          %v673 = vpop.permute.xlu0 %672
          %676 = vset.pattern.permute.xlu0 0
          %677 = vperm.xlu0 %676, %v623
          %v678 = vpop.permute.xlu0 %677
          %681 = vset.pattern.permute.xlu0 0
          %682 = vperm.xlu0 %681, %v624
          %v683 = vpop.permute.xlu0 %682
          %686 = vset.pattern.permute.xlu0 0
          %687 = vperm.xlu0 %686, %v625
          %v688 = vpop.permute.xlu0 %687
          %691 = vset.pattern.permute.xlu0 0
          %692 = vperm.xlu0 %691, %v626
          %v693 = vpop.permute.xlu0 %692
          %696 = vset.pattern.permute.xlu0 0
          %697 = vperm.xlu0 %696, %v627
          %v698 = vpop.permute.xlu0 %697
          %701 = vset.pattern.permute.xlu0 0
          %702 = vperm.xlu0 %701, %v628
          %v703 = vpop.permute.xlu0 %702
          %706 = vset.pattern.permute.xlu0 0
          %707 = vperm.xlu0 %706, %v629
          %v708 = vpop.permute.xlu0 %707
          %711 = vset.pattern.permute.xlu0 0
          %712 = vperm.xlu0 %711, %v630
          %v713 = vpop.permute.xlu0 %712
          %716 = vset.pattern.permute.xlu0 0
          %717 = vperm.xlu0 %716, %v631
          %v718 = vpop.permute.xlu0 %717
          %721 = vset.pattern.permute.xlu0 0
          %722 = vperm.xlu0 %721, %v632
          %v723 = vpop.permute.xlu0 %722
          %726 = vset.pattern.permute.xlu0 0
          %727 = vperm.xlu0 %726, %v633
          %v728 = vpop.permute.xlu0 %727
          %v730 = vmul.f32 %v653, %v634
          %v731 = vmul.f32 %v658, %v635
          %v732 = vmul.f32 %v663, %v636
          %v733 = vmul.f32 %v668, %v637
          %v734 = vmul.f32 %v673, %v638
          %v735 = vmul.f32 %v678, %v639
          %v736 = vmul.f32 %v683, %v640
          %v737 = vmul.f32 %v688, %v641
          %v738 = vmul.f32 %v693, %v642
          %v739 = vmul.f32 %v698, %v643
          %v740 = vmul.f32 %v703, %v644
          %v741 = vmul.f32 %v708, %v645
          %v742 = vmul.f32 %v713, %v646
          %v743 = vmul.f32 %v718, %v647
          %v744 = vmul.f32 %v723, %v648
          %v745 = vmul.f32 %v728, %v649
          %v746 = vld [vmem:[%s4] sm:$0x1]
          %v748 = vlaneseq
          %v749 = vshrl.u32 %v748, 7
          %v750 = vsub.s32 0, %v749
          %v751 = vrot.slane %v746, %v750
          %v753 = vadd.f32 %v730, %v751
          %v754 = vadd.f32 %v731, %v751
          %v755 = vadd.f32 %v732, %v751
          %v756 = vadd.f32 %v733, %v751
          %v757 = vadd.f32 %v734, %v751
          %v758 = vadd.f32 %v735, %v751
          %v759 = vadd.f32 %v736, %v751
          %v760 = vadd.f32 %v737, %v751
          %v761 = vadd.f32 %v738, %v751
          %v762 = vadd.f32 %v739, %v751
          %v763 = vadd.f32 %v740, %v751
          %v764 = vadd.f32 %v741, %v751
          %v765 = vadd.f32 %v742, %v751
          %v766 = vadd.f32 %v743, %v751
          %v767 = vadd.f32 %v744, %v751
          %v768 = vadd.f32 %v745, %v751
          %769 = vst [vmem:[%s333] sm:$0xff] %v753
          %770 = vst [vmem:[%s333 + $0x8] sm:$0xff] %v754
          %771 = vst [vmem:[%s333 + $0x10] sm:$0xff] %v755
          %772 = vst [vmem:[%s333 + $0x18] sm:$0xff] %v756
          %773 = vst [vmem:[%s333 + $0x20] sm:$0xff] %v757
          %774 = vst [vmem:[%s333 + $0x28] sm:$0xff] %v758
          %775 = vst [vmem:[%s333 + $0x30] sm:$0xff] %v759
          %776 = vst [vmem:[%s333 + $0x38] sm:$0xff] %v760
          %777 = vst [vmem:[%s333 + $0x40] sm:$0xff] %v761
          %778 = vst [vmem:[%s333 + $0x48] sm:$0xff] %v762
          %779 = vst [vmem:[%s333 + $0x50] sm:$0xff] %v763
          %780 = vst [vmem:[%s333 + $0x58] sm:$0xff] %v764
          %781 = vst [vmem:[%s333 + $0x60] sm:$0xff] %v765
          %782 = vst [vmem:[%s333 + $0x68] sm:$0xff] %v766
          %783 = vst [vmem:[%s333 + $0x70] sm:$0xff] %v767
          %784 = vst [vmem:[%s333 + $0x78] sm:$0xff] %v768
        $region86: #{jknet_forward.15} parent=73 // pred_fallthru
          _
        %s785 = smul.u32 16, %s20
        %p786 = scmp.lt.s32.totalorder %s785, 31
        %s787 = scalar_select %p786, %s785, 31
        %s788 = smul.addr %s787, 8
        %s789 = scalar_lea.vmem %s5, %s788
        // Predicated region
        $region87: #{jknet_forward.15} parent=73 // pred_check
          %p790 = pneg %p168
        $region88: #{jknet_forward.15} parent=73 // pred_check_branch
          %792 = sbr.rel (%p790) target = $region90
        $region89: #{jknet_forward.15} parent=73 // pred_region
          %s793 = smul.u32 16, %s20
        $region90: #{jknet_forward.15} parent=73 // pred_fallthru
          _
      $region74: #{jknet_forward.15} parent=5 // pred_fallthru
        _
      %p794 = scmp.le.s32.totalorder 2, %s11
      // Predicated region
      $region91: #{jknet_forward.15} parent=5 // pred_check
        %p795 = pneg %p794
      $region92: #{jknet_forward.15} parent=5 // pred_check_branch
        %797 = sbr.rel (%p795) target = $region94
      $region93: #{jknet_forward.15} parent=5 // pred_region
        %s798 = ssub.s32 %s11, 2
        // Predicated region
        $region95: #{jknet_forward.15} parent=93 // pred_check
          %p799 = pneg %p174
        $region96: #{jknet_forward.15} parent=93 // pred_check_branch
          %801 = sbr.rel (%p799) target = $region98
        $region97: #{jknet_forward.15} parent=93 // pred_region
          %s802 = smul.u32 16, %s22
          %p803 = scmp.lt.s32.totalorder %s802, 31
          %s804 = scalar_select %p803, %s802, 31
          %s805 = smul.addr %s804, 8
          %s806 = scalar_lea.vmem %s5, %s805
        $region98: #{jknet_forward.15} parent=93 // pred_fallthru
          _
      $region94: #{jknet_forward.15} parent=5 // pred_fallthru
        _
    $region6: #{jknet_forward.15} parent=1 // loop_footer
      %s15 = sadd.s32 1, %s11
    $region7: #{jknet_forward.15} parent=1 // loop_footer_branch
      %10 = sbr.rel target = $region3
    $region8: #{jknet_forward.15} parent=1 // loop_exit
      _

</llo_original>
